<compile_context>
chip_gen: v7x
topology: tpu7x:2x2x1
jax: 0.10.0
libtpu: 0.0.40
codegen_flags: <defaults>
</compile_context>

<pallas_src>
import functools
import numpy as np
import jax
import jax.numpy as jnp
from jax import lax
from jax.experimental import pallas as pl
from jax.experimental.pallas import tpu as pltpu

N_FREQS = 16
POS_DIM = 2 * N_FREQS + 1       # 33
MAX_B_TILE = 128                # batch rows per grid step (cap)
_VMEM_BUDGET = 24 * 1024 * 1024  # per-step block budget (keeps default scoped VMEM happy)


def _pos_basis(n_frames, scale_frequencies=False):
    """Normalized positional-encoding basis, shape (n_frames, 33), float64.

    TODO(synk): pos_encoded()/pos_encode_feature() were not included in the provided
    module snippet; this reproduces the standard definition:
    features = [x] + [sin(2^i x), cos(2^i x) for i in 0..15], x = linspace(-1, 1, n_frames),
    followed by the forward()'s optional frequency scaling and L2 normalization.
    """
    x = np.clip(np.linspace(-1.0, 1.0, n_frames, dtype=np.float64), -1.0, 1.0)[:, None]
    feats = [x]
    for i in range(N_FREQS):
        feats.append(np.sin((2.0 ** i) * x))
        feats.append(np.cos((2.0 ** i) * x))
    pos = np.concatenate(feats, axis=-1)                        # (n_frames, 33)
    if scale_frequencies:
        scaling = np.linspace(1.0, 0.0, POS_DIM) ** 2
        pos = pos * scaling[None, :]
    norms = np.linalg.norm(pos, axis=-1, keepdims=True)
    return pos / (norms + 1e-8)


def _pick_frames_tile(n_frames, step, b_tile):
    """Frames handled per grid step along the final_size axis.

    Must be n_frames (full extent) or a multiple of 128 that divides n_frames, so
    the sim block (lanes = frames_tile) and the impulse block (lanes = frames_tile*step)
    stay lane-aligned.  The budget covers the double-buffered impulse block, the
    in-kernel scatter intermediates and the sim block.
    """
    def vmem_cost(ft):
        tf = ft * step
        return (2 * b_tile * tf + 3 * ft * tf + 2 * b_tile * ft) * 4
    if vmem_cost(n_frames) <= _VMEM_BUDGET:
        return n_frames
    best = None
    ft = 128
    while ft < n_frames:
        if n_frames % ft == 0 and vmem_cost(ft) <= _VMEM_BUDGET:
            best = ft
        ft += 128
    return best if best is not None else n_frames


def _impulse_kernel(p_ref, posT_ref, imp_ref, sim_ref, *, step, n_frames, frames_tile):
    # p_ref:    (B_TILE, 33)                     current batch tile
    # posT_ref: (33, n_frames)                   normalized positional basis, transposed
    # imp_ref:  (B_TILE, frames_tile * step)     lane-dense sparse-impulse slab
    # sim_ref:  (B_TILE, frames_tile)            orig_sim slab
    p = p_ref[...]
    norm = jnp.sqrt(jnp.sum(p * p, axis=-1, keepdims=True))
    pn = p / (norm + 1e-8)

    # Similarity over ALL frames (softmax normalizes over the full frame axis).
    # Tiny matmul (K=33): HIGHEST precision is negligible here and keeps orig_sim
    # f32-faithful to the torch reference.
    sim = jnp.dot(pn, posT_ref[...],
                  preferred_element_type=jnp.float32,
                  precision=lax.Precision.HIGHEST)              # (B_TILE, n_frames)

    # softmax along frames (the module's default torch.softmax(dim=-1))
    m = jnp.max(sim, axis=-1, keepdims=True)
    e = jnp.exp(sim - m)
    soft = e / jnp.sum(e, axis=-1, keepdims=True)

    if frames_tile == n_frames:
        sim_f, soft_f = sim, soft
    else:
        start = pl.multiple_of(pl.program_id(1) * frames_tile, 128)
        sim_f = lax.dynamic_slice_in_dim(sim, start, frames_tile, axis=1)
        soft_f = lax.dynamic_slice_in_dim(soft, start, frames_tile, axis=1)

    sim_ref[...] = sim_f

    if step == 1:
        imp_ref[...] = soft_f
        return

    # Lane-dense sparse impulse: out[b, j] = soft[b, j // step] * (j % step == 0),
    # realized as soft_f @ scat with scat[t, j] = (j == t*step).  The result is born
    # lane-dense, so the HBM store is a fully dense vst (no masked partial stores).
    tile_f = frames_tile * step
    t_idx = lax.broadcasted_iota(jnp.int32, (frames_tile, tile_f), 0)
    j_idx = lax.broadcasted_iota(jnp.int32, (frames_tile, tile_f), 1)
    scat = jnp.where(j_idx == t_idx * step, 1.0, 0.0).astype(jnp.bfloat16)  # exact 0/1

    # Split-float (hi/lo) matmul: two single-pass bf16 MXU matmuls reproduce the f32
    # softmax values to ~2^-18 relative error, cheaper than a multi-pass f32 matmul.
    soft_hi = soft_f.astype(jnp.bfloat16)
    soft_lo = (soft_f - soft_hi.astype(jnp.float32)).astype(jnp.bfloat16)
    imp = jnp.dot(soft_hi, scat, preferred_element_type=jnp.float32)
    imp = imp + jnp.dot(soft_lo, scat, preferred_element_type=jnp.float32)
    imp_ref[...] = imp


def pos_encoded_impulse_generator(p, n_frames, final_size, scale_frequencies=False):
    batch, dim = p.shape
    if dim != POS_DIM:
        raise ValueError(f"Expected (*, {POS_DIM}) but got {p.shape}")
    if final_size % n_frames != 0:
        raise ValueError("final_size must be a multiple of n_frames")
    step = final_size // n_frames

    posT = jnp.asarray(_pos_basis(n_frames, scale_frequencies).T, dtype=jnp.float32)
    p = p.astype(jnp.float32)

    if batch <= MAX_B_TILE:
        # Full-extent batch block: no padding, no post-kernel slice copy.
        b_tile, batch_pad = batch, batch
    else:
        b_tile = MAX_B_TILE
        batch_pad = pl.cdiv(batch, b_tile) * b_tile
        if batch_pad != batch:
            # TODO(synk): the trailing [:batch] slice below copies the whole impulse
            # buffer in HBM; callers with large batches should use multiples of 128.
            p = jnp.pad(p, ((0, batch_pad - batch), (0, 0)))

    frames_tile = _pick_frames_tile(n_frames, step, b_tile)
    tile_f = frames_tile * step
    grid = (batch_pad // b_tile, n_frames // frames_tile)

    kernel = functools.partial(_impulse_kernel, step=step, n_frames=n_frames,
                               frames_tile=frames_tile)

    imp, sim = pl.pallas_call(
        kernel,
        out_shape=(
            jax.ShapeDtypeStruct((batch_pad, final_size), jnp.float32),
            jax.ShapeDtypeStruct((batch_pad, n_frames), jnp.float32),
        ),
        grid_spec=pltpu.PrefetchScalarGridSpec(
            num_scalar_prefetch=0,
            grid=grid,
            in_specs=[
                pl.BlockSpec((b_tile, POS_DIM), lambda b, f: (b, 0)),
                pl.BlockSpec((POS_DIM, n_frames), lambda b, f: (0, 0)),  # resident
            ],
            out_specs=(
                pl.BlockSpec((b_tile, tile_f), lambda b, f: (b, f)),
                pl.BlockSpec((b_tile, frames_tile), lambda b, f: (b, f)),
            ),
        ),
        compiler_params=pltpu.CompilerParams(
            dimension_semantics=("parallel", "parallel"),
        ),
    )(p, posT)

    if batch_pad != batch:
        imp, sim = imp[:batch], sim[:batch]
    output = imp.reshape(batch, 1, final_size)     # contiguous -> free reshape
    orig_sim = sim.reshape(batch, 1, n_frames)
    return output, orig_sim
    # TODO(synk): user-supplied custom `softmax` callables are not representable in
    # the kernel; the default torch.softmax(dim=-1) is hard-coded.


if __name__ == "__main__":
    batch = 2
    n_frames = 128
    final_size = 4096            # step = 32
    key = jax.random.PRNGKey(0)
    p_in = jax.random.normal(key, (batch, POS_DIM), dtype=jnp.float32)

    out, orig_sim = pos_encoded_impulse_generator(p_in, n_frames, final_size)
    out, orig_sim = jax.block_until_ready((out, orig_sim))

    assert out.shape == (batch, 1, final_size), out.shape
    assert orig_sim.shape == (batch, 1, n_frames), orig_sim.shape
    assert out.dtype == jnp.float32 and orig_sim.dtype == jnp.float32

    # float64 numpy reference mirroring the PyTorch forward
    pos64 = _pos_basis(n_frames, scale_frequencies=False)
    p64 = np.asarray(p_in, dtype=np.float64)
    pn = p64 / (np.linalg.norm(p64, axis=-1, keepdims=True) + 1e-8)
    sim_ref = pn @ pos64.T                                       # (batch, n_frames)
    e = np.exp(sim_ref - sim_ref.max(axis=-1, keepdims=True))
    soft_ref = e / e.sum(axis=-1, keepdims=True)
    step = final_size // n_frames
    out_ref = np.zeros((batch, 1, final_size))
    out_ref[:, :, ::step] = soft_ref[:, None, :]

    np.testing.assert_allclose(np.asarray(orig_sim)[:, 0, :], sim_ref,
                               rtol=1e-4, atol=1e-5)
    np.testing.assert_allclose(np.asarray(out), out_ref, rtol=1e-4, atol=1e-5)

    print("KERNEL_OK")
</pallas_src>

<mosaic_0001>
module attributes {stable_mosaic.version = 11 : i64} {
  func.func @_impulse_kernel(%arg0: i32, %arg1: i32, %arg2: memref<2x33xf32, #tpu.memory_space<vmem>>, %arg3: memref<33x128xf32, #tpu.memory_space<vmem>>, %arg4: memref<2x4096xf32, #tpu.memory_space<vmem>>, %arg5: memref<2x128xf32, #tpu.memory_space<vmem>>) attributes {dimension_semantics = [#tpu.dimension_semantics<parallel>, #tpu.dimension_semantics<parallel>], iteration_bounds = array<i64: 1, 1>, scalar_prefetch = 0 : i64, scratch_operands = 0 : i64, tpu.core_type = #tpu.core_type<tc>, window_params = [{transform_indices = @transform_0, window_bounds = array<i64: 2, 33>}, {pipeline_mode = #tpu.pipeline_mode<synchronous>, transform_indices = @transform_1, window_bounds = array<i64: 33, 128>}, {transform_indices = @transform_2, window_bounds = array<i64: 2, 4096>}, {transform_indices = @transform_3, window_bounds = array<i64: 2, 128>}]} {
    %c0 = arith.constant 0 : index
    %c0_0 = arith.constant 0 : index
    %0 = vector.load %arg2[%c0, %c0_0] : memref<2x33xf32, #tpu.memory_space<vmem>>, vector<2x33xf32>
    %1 = arith.mulf %0, %0 : vector<2x33xf32>
    %cst = arith.constant dense<0.000000e+00> : vector<2xf32>
    %2 = vector.multi_reduction <add>, %1, %cst [1] : vector<2x33xf32> to vector<2xf32>
    %3 = vector.shape_cast %2 : vector<2xf32> to vector<2x1xf32>
    %4 = math.sqrt %3 : vector<2x1xf32>
    %cst_1 = arith.constant 9.99999993E-9 : f32
    %5 = vector.broadcast %cst_1 : f32 to vector<2x1xf32>
    %6 = arith.addf %4, %5 : vector<2x1xf32>
    %7 = vector.broadcast %6 : vector<2x1xf32> to vector<2x33xf32>
    %8 = arith.divf %0, %7 : vector<2x33xf32>
    %c0_2 = arith.constant 0 : index
    %c0_3 = arith.constant 0 : index
    %9 = vector.load %arg3[%c0_2, %c0_3] : memref<33x128xf32, #tpu.memory_space<vmem>>, vector<33x128xf32>
    %cst_4 = arith.constant dense<0.000000e+00> : vector<2x128xf32>
    %10 = tpu.matmul %8, %9, %cst_4 {dimension_numbers = #tpu.dot_dimension_numbers<[1], [0], [0], [1], [0, 0, 1, 1], [], []>, precision = #tpu.contract_precision<fp32>} : vector<2x33xf32>, vector<33x128xf32>, vector<2x128xf32> -> vector<2x128xf32>
    %cst_5 = arith.constant dense<0xFF800000> : vector<2xf32>
    %11 = vector.multi_reduction <maximumf>, %10, %cst_5 [1] : vector<2x128xf32> to vector<2xf32>
    %12 = vector.shape_cast %11 : vector<2xf32> to vector<2x1xf32>
    %13 = vector.broadcast %12 : vector<2x1xf32> to vector<2x128xf32>
    %14 = arith.subf %10, %13 : vector<2x128xf32>
    %15 = math.exp %14 : vector<2x128xf32>
    %cst_6 = arith.constant dense<0.000000e+00> : vector<2xf32>
    %16 = vector.multi_reduction <add>, %15, %cst_6 [1] : vector<2x128xf32> to vector<2xf32>
    %17 = vector.shape_cast %16 : vector<2xf32> to vector<2x1xf32>
    %18 = vector.broadcast %17 : vector<2x1xf32> to vector<2x128xf32>
    %19 = arith.divf %15, %18 : vector<2x128xf32>
    %c0_7 = arith.constant 0 : index
    %c0_8 = arith.constant 0 : index
    %20 = vector.load %arg5[%c0_7, %c0_8] : memref<2x128xf32, #tpu.memory_space<vmem>>, vector<2x128xf32>
    tpu.vector_store %arg5[%c0_7, %c0_8], %10 {strides = array<i32>} : memref<2x128xf32, #tpu.memory_space<vmem>>, vector<2x128xf32>,
    %21 = tpu.iota {dimensions = array<i32: 0>} : vector<128x4096xi32>
    %22 = tpu.iota {dimensions = array<i32: 1>} : vector<128x4096xi32>
    %c32_i32 = arith.constant 32 : i32
    %23 = vector.broadcast %c32_i32 : i32 to vector<128x4096xi32>
    %24 = arith.muli %21, %23 : vector<128x4096xi32>
    %25 = arith.cmpi eq, %22, %24 : vector<128x4096xi32>
    %cst_9 = arith.constant 1.000000e+00 : f32
    %cst_10 = arith.constant 0.000000e+00 : f32
    %26 = vector.broadcast %cst_9 : f32 to vector<128x4096xf32>
    %27 = vector.broadcast %cst_10 : f32 to vector<128x4096xf32>
    %28 = arith.select %25, %26, %27 : vector<128x4096xi1>, vector<128x4096xf32>
    %29 = arith.truncf %28 : vector<128x4096xf32> to vector<128x4096xbf16>
    %30 = arith.truncf %19 : vector<2x128xf32> to vector<2x128xbf16>
    %31 = arith.extf %30 : vector<2x128xbf16> to vector<2x128xf32>
    %32 = arith.subf %19, %31 : vector<2x128xf32>
    %33 = arith.truncf %32 : vector<2x128xf32> to vector<2x128xbf16>
    %cst_11 = arith.constant dense<0.000000e+00> : vector<2x4096xf32>
    %34 = tpu.matmul %30, %29, %cst_11 {dimension_numbers = #tpu.dot_dimension_numbers<[1], [0], [0], [1], [0, 0, 1, 1], [], []>} : vector<2x128xbf16>, vector<128x4096xbf16>, vector<2x4096xf32> -> vector<2x4096xf32>
    %cst_12 = arith.constant dense<0.000000e+00> : vector<2x4096xf32>
    %35 = tpu.matmul %33, %29, %cst_12 {dimension_numbers = #tpu.dot_dimension_numbers<[1], [0], [0], [1], [0, 0, 1, 1], [], []>} : vector<2x128xbf16>, vector<128x4096xbf16>, vector<2x4096xf32> -> vector<2x4096xf32>
    %36 = arith.addf %34, %35 : vector<2x4096xf32>
    %c0_13 = arith.constant 0 : index
    %c0_14 = arith.constant 0 : index
    %37 = vector.load %arg4[%c0_13, %c0_14] : memref<2x4096xf32, #tpu.memory_space<vmem>>, vector<2x4096xf32>
    tpu.vector_store %arg4[%c0_13, %c0_14], %36 {strides = array<i32>} : memref<2x4096xf32, #tpu.memory_space<vmem>>, vector<2x4096xf32>,
    return
  }
  func.func @transform_0(%arg0: i32, %arg1: i32) -> (i32, i32) {
    %c0_i32 = arith.constant 0 : i32
    %c0_i32_0 = arith.constant 0 : i32
    return %arg0, %c0_i32 : i32, i32
  }
  func.func @transform_1(%arg0: i32, %arg1: i32) -> (i32, i32) {
    %c0_i32 = arith.constant 0 : i32
    %c0_i32_0 = arith.constant 0 : i32
    %c0_i32_1 = arith.constant 0 : i32
    return %c0_i32, %c0_i32_0 : i32, i32
  }
  func.func @transform_2(%arg0: i32, %arg1: i32) -> (i32, i32) {
    %c0_i32 = arith.constant 0 : i32
    return %arg0, %arg1 : i32, i32
  }
  func.func @transform_3(%arg0: i32, %arg1: i32) -> (i32, i32) {
    %c0_i32 = arith.constant 0 : i32
    return %arg0, %arg1 : i32, i32
  }
}

</mosaic_0001>

<llo_original>
// kernel: tpu_custom_call.1
$region0: #{tpu_custom_call.1}
  #allocation0 [shape = 'u32[]', space=smem, size = 0x4, offset = 0x4, fixed_abs, tag = 'smem constant byte address 0x4 - core index']
  #allocation1 [shape = 'u32[144,128]{1,0:T(1,128)}', space=vmem, size = 0x12000, scoped, tag = 'internal scratch']
  %s0 = inlined_call_operand.hbm [shape: f32[2,33], index: 0, kind: input, shape index: {}]
  %s1 = inlined_call_operand.hbm [shape: f32[33,128], index: 1, kind: input, shape index: {}]
  %s2 = inlined_call_operand.hbm [shape: f32[2,4096], index: 2, kind: output, shape index: {0}]
  %s3 = inlined_call_operand.hbm [shape: f32[2,128], index: 3, kind: output, shape index: {1}]
  %4 = xla_tuple %s2, %s3
  %s5 = sld [smem:[#allocation0]]
  $region34: #{tpu_custom_call.1} parent=0
    _
  %s7 = ssub.s32 1, %s5
  %s8 = scalar_select 0, %s7, %s5
  $region1: #{tpu_custom_call.1} parent=0
    #allocation2 [shape = 'u8[1024]{0}', space=vmem, size = 0x400, scoped, tag = 'input window, operand 0, single buffered']
    #allocation3 [shape = 's32[1]{0}', space=sflag, size = 0x4, scoped, tag = 'scoped memory for tpu_custom_call.1']
    #allocation4 [shape = 's32[1]{0}', space=sflag, size = 0x4, scoped, tag = 'scoped memory for tpu_custom_call.1']
    #allocation5 [shape = 'u8[20480]{0}', space=vmem, size = 0x5000, scoped, tag = 'input window, operand 1, single buffered']
    #allocation6 [shape = 's32[1]{0}', space=sflag, size = 0x4, scoped, tag = 'scoped memory for tpu_custom_call.1']
    #allocation7 [shape = 'u8[32768]{0}', space=vmem, size = 0x8000, scoped, tag = 'output window, operand 0, single buffered']
    #allocation8 [shape = 'u8[1024]{0}', space=vmem, size = 0x400, scoped, tag = 'output window, operand 1, single buffered']
    #allocation9 [shape = 's32[1]{0}', space=sflag, size = 0x4, scoped, tag = 'scoped memory for tpu_custom_call.1']
    %9 = vsyncpa [#allocation3], 0
    %10 = vsyncpa [#allocation6], 0
    %11 = vsyncpa [#allocation4], 0
    %12 = vsyncpa [#allocation9], 0
    // Predicated region
    $region2: #{tpu_custom_call.1} parent=1 // pred_check
      _
    $region3: #{tpu_custom_call.1} parent=1 // pred_check_branch
      %14 = sbr.rel (0) target = $region5
    $region4: #{tpu_custom_call.1} parent=1 // pred_region
      %s16 = ssub.s32 32, 32
      %17 = vsyncadd [#allocation3], %s16
      %s19 = sshll.u32 [#allocation2], 4
      %s20 = int_to_ptr.vmem [resolvable:$true] %s19
      %22 = dma.hbm_to_vmem [thread:$0]  %s0, 32, %s20, [#allocation3]
    $region5: #{tpu_custom_call.1} parent=1 // pred_fallthru
      _
    // Predicated region
    $region6: #{tpu_custom_call.1} parent=1 // pred_check
      _
    $region7: #{tpu_custom_call.1} parent=1 // pred_check_branch
      %24 = sbr.rel (0) target = $region9
    $region8: #{tpu_custom_call.1} parent=1 // pred_region
      %s26 = ssub.s32 640, 640
      %27 = vsyncadd [#allocation6], %s26
      %s28 = sshll.u32 [#allocation5], 4
      %s29 = int_to_ptr.vmem [resolvable:$true] %s28
      %34 = dma.hbm_to_vmem [thread:$0]  %s1, 640, %s29, [#allocation6], 128, 128, 8
    $region9: #{tpu_custom_call.1} parent=1 // pred_fallthru
      _
    // Predicated region
    $region10: #{tpu_custom_call.1} parent=1 // pred_check
      _
    $region11: #{tpu_custom_call.1} parent=1 // pred_check_branch
      %36 = sbr.rel (0) target = $region13
    $region12: #{tpu_custom_call.1} parent=1 // pred_region
      %37 = dma.done [#allocation3], 32
    $region13: #{tpu_custom_call.1} parent=1 // pred_fallthru
      _
    // Predicated region
    $region14: #{tpu_custom_call.1} parent=1 // pred_check
      _
    $region15: #{tpu_custom_call.1} parent=1 // pred_check_branch
      %39 = sbr.rel (0) target = $region17
    $region16: #{tpu_custom_call.1} parent=1 // pred_region
      %40 = dma.done [#allocation6], 640
    $region17: #{tpu_custom_call.1} parent=1 // pred_fallthru
      _
    %v42 = vld [vmem:[#allocation2] sm:$0x3]
    %v43 = vmul.f32 %v42, %v42
    %vm44 = vcmask 263168
    %v45 = vsel %vm44, %v43, 0.0
    %46 = vadd.xlane.f32.xlu0 %v45
    %v47 = vpop.xlane.xlu0 %46
    %v48 = vrsqrt.pop %v47
    %v49 = vmul.f32 %v47, %v48
    %vm50 = vcmp.eq.f32.partialorder %v47, inf
    %v51 = vsel %vm50, %v47, %v49
    %vm52 = vcmp.eq.f32.partialorder %v47, 0.0
    %v53 = vand.u32 %v47, 2147483648
    %v54 = vsel %vm52, %v53, %v51
    %v55 = vadd.f32 %v54, 1e-08
    %v56 = vrcp.pop %v55
    %v57 = vmul.f32 %v42, %v56
    %v58 = vld [vmem:[#allocation5] sm:$0xff]
    %v59 = vld [vmem:[#allocation5 + $0x8] sm:$0xff]
    %v60 = vld [vmem:[#allocation5 + $0x10] sm:$0xff]
    %v61 = vld [vmem:[#allocation5 + $0x18] sm:$0xff]
    %v62 = vld [vmem:[#allocation5 + $0x20] sm:$0x1]
    %vm63 = vcmask 269312
    %v65 = vsel %vm63, %v57, 0
    %vm67 = vcmask 1040384
    %v69 = vsel %vm67, %v62, 0
    %71 = vmatprep.subr.mxu0 0.0
    %v72 = vand.u32 %v58, 4294901760
    %73 = vmatpush1.msra.mxu0 %v72
    %74 = vmatprep.subr.mxu0 0.0
    %v75 = vand.u32 %v59, 4294901760
    %76 = vmatpush1.msra.mxu0 %v75
    %77 = vmatprep.subr.mxu0 0.0
    %v78 = vand.u32 %v60, 4294901760
    %79 = vmatpush1.msra.mxu0 %v78
    %80 = vmatprep.subr.mxu0 0.0
    %v81 = vand.u32 %v61, 4294901760
    %82 = vmatpush1.msra.mxu0 %v81
    %83 = vmatprep.subr.mxu0 0.0
    %v84 = vand.u32 %v69, 4294901760
    %85 = vmatpush1.msra.mxu0 %v84
    %86 = vmatprep.subr.mxu0 0.0
    %87 = vmatpush1.msra.mxu0 0.0
    %88 = vmatprep.subr.mxu0 0.0
    %89 = vmatpush1.msra.mxu0 0.0
    %90 = vmatprep.subr.mxu0 0.0
    %91 = vmatpush1.msra.mxu0 0.0
    %92 = vmatprep.subr.mxu0 0.0
    %93 = vmatpush1.msra.mxu0 0.0
    %94 = vmatprep.subr.mxu0 0.0
    %95 = vmatpush1.msra.mxu0 0.0
    %96 = vmatprep.subr.mxu0 0.0
    %97 = vmatpush1.msra.mxu0 0.0
    %98 = vmatprep.subr.mxu0 0.0
    %99 = vmatpush1.msra.mxu0 0.0
    %100 = vmatprep.subr.mxu0 0.0
    %101 = vmatpush1.msra.mxu0 0.0
    %102 = vmatprep.subr.mxu0 0.0
    %103 = vmatpush1.msra.mxu0 0.0
    %104 = vmatprep.subr.mxu0 0.0
    %105 = vmatpush1.msra.mxu0 0.0
    %106 = vmatprep.subr.mxu0 0.0
    %107 = vmatpush1.msra.mxu0 0.0
    %108 = vmatprep.subr.mxu0 0.0
    %109 = vmatpush1.msra.mxu0 0.0
    %110 = vmatprep.subr.mxu0 0.0
    %111 = vmatpush1.msra.mxu0 0.0
    %112 = vmatprep.subr.mxu0 0.0
    %113 = vmatpush1.msra.mxu0 0.0
    %114 = vmatprep.subr.mxu0 0.0
    %115 = vmatpush1.msra.mxu0 0.0
    %116 = vmatprep.subr.mxu0 0.0
    %117 = vmatpush1.msra.mxu0 0.0
    %118 = vmatprep.subr.mxu0 0.0
    %119 = vmatpush1.msra.mxu0 0.0
    %120 = vmatprep.subr.mxu0 0.0
    %121 = vmatpush1.msra.mxu0 0.0
    %122 = vmatprep.subr.mxu0 0.0
    %123 = vmatpush1.msra.mxu0 0.0
    %124 = vmatprep.subr.mxu0 0.0
    %125 = vmatpush1.msra.mxu0 0.0
    %126 = vmatprep.subr.mxu0 0.0
    %127 = vmatpush1.msra.mxu0 0.0
    %128 = vmatprep.subr.mxu0 0.0
    %129 = vmatpush1.msra.mxu0 0.0
    %130 = vmatprep.subr.mxu0 0.0
    %131 = vmatpush1.msra.mxu0 0.0
    %132 = vmatprep.subr.mxu0 0.0
    %133 = vmatpush1.msra.mxu0 0.0
    %134 = vmatprep.subr.mxu0 0.0
    %135 = vmatpush1.msra.mxu0 0.0
    %136 = vmatprep.subr.mxu0 0.0
    %137 = vmatpush1.msra.mxu0 0.0
    %138 = vmatprep.subr.mxu0 0.0
    %139 = vmatpush1.msra.mxu0 0.0
    %140 = vmatprep.mubr.f32.mxu0 0.0
    %v141 = vand.u32 %v65, 4294901760
    %v142 = vsub.f32 %v65, %v141
    %v143 = vand.u32 %v142, 4294901760
    %v144 = vsub.f32 %v142, %v143
    %v145 = vand.u32 %v144, 4294901760
    %146 = vmatmul.mubr.f32.gmra.mrb[0].mxu0 %v145
    %v147 = vpop.f32.mrb[0].mxu0
    %v148 = vadd.f32 0.0, %v147
    %v149 = vpop.f32.mrb[0].mxu0
    %150 = vdwg.mxu0
    %151 = vmatprep.subr.mxu0 0.0
    %v152 = vand.u32 %v58, 4294901760
    %v153 = vsub.f32 %v58, %v152
    %v154 = vand.u32 %v153, 4294901760
    %v155 = vsub.f32 %v153, %v154
    %v156 = vand.u32 %v155, 4294901760
    %157 = vmatpush1.msra.mxu0 %v156
    %158 = vmatprep.subr.mxu0 0.0
    %v159 = vand.u32 %v59, 4294901760
    %v160 = vsub.f32 %v59, %v159
    %v161 = vand.u32 %v160, 4294901760
    %v162 = vsub.f32 %v160, %v161
    %v163 = vand.u32 %v162, 4294901760
    %164 = vmatpush1.msra.mxu0 %v163
    %165 = vmatprep.subr.mxu0 0.0
    %v166 = vand.u32 %v60, 4294901760
    %v167 = vsub.f32 %v60, %v166
    %v168 = vand.u32 %v167, 4294901760
    %v169 = vsub.f32 %v167, %v168
    %v170 = vand.u32 %v169, 4294901760
    %171 = vmatpush1.msra.mxu0 %v170
    %172 = vmatprep.subr.mxu0 0.0
    %v173 = vand.u32 %v61, 4294901760
    %v174 = vsub.f32 %v61, %v173
    %v175 = vand.u32 %v174, 4294901760
    %v176 = vsub.f32 %v174, %v175
    %v177 = vand.u32 %v176, 4294901760
    %178 = vmatpush1.msra.mxu0 %v177
    %179 = vmatprep.subr.mxu0 0.0
    %v180 = vand.u32 %v69, 4294901760
    %v181 = vsub.f32 %v69, %v180
    %v182 = vand.u32 %v181, 4294901760
    %v183 = vsub.f32 %v181, %v182
    %v184 = vand.u32 %v183, 4294901760
    %185 = vmatpush1.msra.mxu0 %v184
    %186 = vmatprep.subr.mxu0 0.0
    %187 = vmatpush1.msra.mxu0 0.0
    %188 = vmatprep.subr.mxu0 0.0
    %189 = vmatpush1.msra.mxu0 0.0
    %190 = vmatprep.subr.mxu0 0.0
    %191 = vmatpush1.msra.mxu0 0.0
    %192 = vmatprep.subr.mxu0 0.0
    %193 = vmatpush1.msra.mxu0 0.0
    %194 = vmatprep.subr.mxu0 0.0
    %195 = vmatpush1.msra.mxu0 0.0
    %196 = vmatprep.subr.mxu0 0.0
    %197 = vmatpush1.msra.mxu0 0.0
    %198 = vmatprep.subr.mxu0 0.0
    %199 = vmatpush1.msra.mxu0 0.0
    %200 = vmatprep.subr.mxu0 0.0
    %201 = vmatpush1.msra.mxu0 0.0
    %202 = vmatprep.subr.mxu0 0.0
    %203 = vmatpush1.msra.mxu0 0.0
    %204 = vmatprep.subr.mxu0 0.0
    %205 = vmatpush1.msra.mxu0 0.0
    %206 = vmatprep.subr.mxu0 0.0
    %207 = vmatpush1.msra.mxu0 0.0
    %208 = vmatprep.subr.mxu0 0.0
    %209 = vmatpush1.msra.mxu0 0.0
    %210 = vmatprep.subr.mxu0 0.0
    %211 = vmatpush1.msra.mxu0 0.0
    %212 = vmatprep.subr.mxu0 0.0
    %213 = vmatpush1.msra.mxu0 0.0
    %214 = vmatprep.subr.mxu0 0.0
    %215 = vmatpush1.msra.mxu0 0.0
    %216 = vmatprep.subr.mxu0 0.0
    %217 = vmatpush1.msra.mxu0 0.0
    %218 = vmatprep.subr.mxu0 0.0
    %219 = vmatpush1.msra.mxu0 0.0
    %220 = vmatprep.subr.mxu0 0.0
    %221 = vmatpush1.msra.mxu0 0.0
    %222 = vmatprep.subr.mxu0 0.0
    %223 = vmatpush1.msra.mxu0 0.0
    %224 = vmatprep.subr.mxu0 0.0
    %225 = vmatpush1.msra.mxu0 0.0
    %226 = vmatprep.subr.mxu0 0.0
    %227 = vmatpush1.msra.mxu0 0.0
    %228 = vmatprep.subr.mxu0 0.0
    %229 = vmatpush1.msra.mxu0 0.0
    %230 = vmatprep.subr.mxu0 0.0
    %231 = vmatpush1.msra.mxu0 0.0
    %232 = vmatprep.subr.mxu0 0.0
    %233 = vmatpush1.msra.mxu0 0.0
    %234 = vmatprep.subr.mxu0 0.0
    %235 = vmatpush1.msra.mxu0 0.0
    %236 = vmatprep.subr.mxu0 0.0
    %237 = vmatpush1.msra.mxu0 0.0
    %238 = vmatprep.subr.mxu0 0.0
    %239 = vmatpush1.msra.mxu0 0.0
    %240 = vmatprep.mubr.f32.mxu0 0.0
    %v241 = vand.u32 %v65, 4294901760
    %242 = vmatmul.mubr.f32.gmra.mrb[0].mxu0 %v241
    %v243 = vpop.f32.mrb[0].mxu0
    %v244 = vadd.f32 %v148, %v243
    %v245 = vpop.f32.mrb[0].mxu0
    %246 = vdwg.mxu0
    %247 = vmatprep.subr.mxu0 0.0
    %v248 = vand.u32 %v58, 4294901760
    %v249 = vsub.f32 %v58, %v248
    %250 = vmatpush1.msra.mxu0 %v249
    %251 = vmatprep.subr.mxu0 0.0
    %v252 = vand.u32 %v59, 4294901760
    %v253 = vsub.f32 %v59, %v252
    %254 = vmatpush1.msra.mxu0 %v253
    %255 = vmatprep.subr.mxu0 0.0
    %v256 = vand.u32 %v60, 4294901760
    %v257 = vsub.f32 %v60, %v256
    %258 = vmatpush1.msra.mxu0 %v257
    %259 = vmatprep.subr.mxu0 0.0
    %v260 = vand.u32 %v61, 4294901760
    %v261 = vsub.f32 %v61, %v260
    %262 = vmatpush1.msra.mxu0 %v261
    %263 = vmatprep.subr.mxu0 0.0
    %v264 = vand.u32 %v69, 4294901760
    %v265 = vsub.f32 %v69, %v264
    %266 = vmatpush1.msra.mxu0 %v265
    %267 = vmatprep.subr.mxu0 0.0
    %268 = vmatpush1.msra.mxu0 0.0
    %269 = vmatprep.subr.mxu0 0.0
    %270 = vmatpush1.msra.mxu0 0.0
    %271 = vmatprep.subr.mxu0 0.0
    %272 = vmatpush1.msra.mxu0 0.0
    %273 = vmatprep.subr.mxu0 0.0
    %274 = vmatpush1.msra.mxu0 0.0
    %275 = vmatprep.subr.mxu0 0.0
    %276 = vmatpush1.msra.mxu0 0.0
    %277 = vmatprep.subr.mxu0 0.0
    %278 = vmatpush1.msra.mxu0 0.0
    %279 = vmatprep.subr.mxu0 0.0
    %280 = vmatpush1.msra.mxu0 0.0
    %281 = vmatprep.subr.mxu0 0.0
    %282 = vmatpush1.msra.mxu0 0.0
    %283 = vmatprep.subr.mxu0 0.0
    %284 = vmatpush1.msra.mxu0 0.0
    %285 = vmatprep.subr.mxu0 0.0
    %286 = vmatpush1.msra.mxu0 0.0
    %287 = vmatprep.subr.mxu0 0.0
    %288 = vmatpush1.msra.mxu0 0.0
    %289 = vmatprep.subr.mxu0 0.0
    %290 = vmatpush1.msra.mxu0 0.0
    %291 = vmatprep.subr.mxu0 0.0
    %292 = vmatpush1.msra.mxu0 0.0
    %293 = vmatprep.subr.mxu0 0.0
    %294 = vmatpush1.msra.mxu0 0.0
    %295 = vmatprep.subr.mxu0 0.0
    %296 = vmatpush1.msra.mxu0 0.0
    %297 = vmatprep.subr.mxu0 0.0
    %298 = vmatpush1.msra.mxu0 0.0
    %299 = vmatprep.subr.mxu0 0.0
    %300 = vmatpush1.msra.mxu0 0.0
    %301 = vmatprep.subr.mxu0 0.0
    %302 = vmatpush1.msra.mxu0 0.0
    %303 = vmatprep.subr.mxu0 0.0
    %304 = vmatpush1.msra.mxu0 0.0
    %305 = vmatprep.subr.mxu0 0.0
    %306 = vmatpush1.msra.mxu0 0.0
    %307 = vmatprep.subr.mxu0 0.0
    %308 = vmatpush1.msra.mxu0 0.0
    %309 = vmatprep.subr.mxu0 0.0
    %310 = vmatpush1.msra.mxu0 0.0
    %311 = vmatprep.subr.mxu0 0.0
    %312 = vmatpush1.msra.mxu0 0.0
    %313 = vmatprep.subr.mxu0 0.0
    %314 = vmatpush1.msra.mxu0 0.0
    %315 = vmatprep.subr.mxu0 0.0
    %316 = vmatpush1.msra.mxu0 0.0
    %317 = vmatprep.subr.mxu0 0.0
    %318 = vmatpush1.msra.mxu0 0.0
    %319 = vmatprep.subr.mxu0 0.0
    %320 = vmatpush1.msra.mxu0 0.0
    %321 = vmatprep.mubr.f32.mxu0 0.0
    %v322 = vand.u32 %v65, 4294901760
    %v323 = vsub.f32 %v65, %v322
    %324 = vmatmul.mubr.f32.gmra.mrb[0].mxu0 %v323
    %v325 = vpop.f32.mrb[0].mxu0
    %v326 = vadd.f32 %v244, %v325
    %v327 = vpop.f32.mrb[0].mxu0
    %328 = vdwg.mxu0
    %329 = vmatprep.subr.mxu0 0.0
    %v330 = vand.u32 %v58, 4294901760
    %331 = vmatpush1.msra.mxu0 %v330
    %332 = vmatprep.subr.mxu0 0.0
    %v333 = vand.u32 %v59, 4294901760
    %334 = vmatpush1.msra.mxu0 %v333
    %335 = vmatprep.subr.mxu0 0.0
    %v336 = vand.u32 %v60, 4294901760
    %337 = vmatpush1.msra.mxu0 %v336
    %338 = vmatprep.subr.mxu0 0.0
    %v339 = vand.u32 %v61, 4294901760
    %340 = vmatpush1.msra.mxu0 %v339
    %341 = vmatprep.subr.mxu0 0.0
    %v342 = vand.u32 %v69, 4294901760
    %343 = vmatpush1.msra.mxu0 %v342
    %344 = vmatprep.subr.mxu0 0.0
    %345 = vmatpush1.msra.mxu0 0.0
    %346 = vmatprep.subr.mxu0 0.0
    %347 = vmatpush1.msra.mxu0 0.0
    %348 = vmatprep.subr.mxu0 0.0
    %349 = vmatpush1.msra.mxu0 0.0
    %350 = vmatprep.subr.mxu0 0.0
    %351 = vmatpush1.msra.mxu0 0.0
    %352 = vmatprep.subr.mxu0 0.0
    %353 = vmatpush1.msra.mxu0 0.0
    %354 = vmatprep.subr.mxu0 0.0
    %355 = vmatpush1.msra.mxu0 0.0
    %356 = vmatprep.subr.mxu0 0.0
    %357 = vmatpush1.msra.mxu0 0.0
    %358 = vmatprep.subr.mxu0 0.0
    %359 = vmatpush1.msra.mxu0 0.0
    %360 = vmatprep.subr.mxu0 0.0
    %361 = vmatpush1.msra.mxu0 0.0
    %362 = vmatprep.subr.mxu0 0.0
    %363 = vmatpush1.msra.mxu0 0.0
    %364 = vmatprep.subr.mxu0 0.0
    %365 = vmatpush1.msra.mxu0 0.0
    %366 = vmatprep.subr.mxu0 0.0
    %367 = vmatpush1.msra.mxu0 0.0
    %368 = vmatprep.subr.mxu0 0.0
    %369 = vmatpush1.msra.mxu0 0.0
    %370 = vmatprep.subr.mxu0 0.0
    %371 = vmatpush1.msra.mxu0 0.0
    %372 = vmatprep.subr.mxu0 0.0
    %373 = vmatpush1.msra.mxu0 0.0
    %374 = vmatprep.subr.mxu0 0.0
    %375 = vmatpush1.msra.mxu0 0.0
    %376 = vmatprep.subr.mxu0 0.0
    %377 = vmatpush1.msra.mxu0 0.0
    %378 = vmatprep.subr.mxu0 0.0
    %379 = vmatpush1.msra.mxu0 0.0
    %380 = vmatprep.subr.mxu0 0.0
    %381 = vmatpush1.msra.mxu0 0.0
    %382 = vmatprep.subr.mxu0 0.0
    %383 = vmatpush1.msra.mxu0 0.0
    %384 = vmatprep.subr.mxu0 0.0
    %385 = vmatpush1.msra.mxu0 0.0
    %386 = vmatprep.subr.mxu0 0.0
    %387 = vmatpush1.msra.mxu0 0.0
    %388 = vmatprep.subr.mxu0 0.0
    %389 = vmatpush1.msra.mxu0 0.0
    %390 = vmatprep.subr.mxu0 0.0
    %391 = vmatpush1.msra.mxu0 0.0
    %392 = vmatprep.subr.mxu0 0.0
    %393 = vmatpush1.msra.mxu0 0.0
    %394 = vmatprep.subr.mxu0 0.0
    %395 = vmatpush1.msra.mxu0 0.0
    %396 = vmatprep.subr.mxu0 0.0
    %397 = vmatpush1.msra.mxu0 0.0
    %398 = vmatprep.mubr.f32.mxu0 0.0
    %v399 = vand.u32 %v65, 4294901760
    %v400 = vsub.f32 %v65, %v399
    %v401 = vand.u32 %v400, 4294901760
    %402 = vmatmul.mubr.f32.gmra.mrb[0].mxu0 %v401
    %v403 = vpop.f32.mrb[0].mxu0
    %v404 = vadd.f32 %v326, %v403
    %v405 = vpop.f32.mrb[0].mxu0
    %406 = vdwg.mxu0
    %407 = vmatprep.subr.mxu0 0.0
    %v408 = vand.u32 %v58, 4294901760
    %v409 = vsub.f32 %v58, %v408
    %v410 = vand.u32 %v409, 4294901760
    %411 = vmatpush1.msra.mxu0 %v410
    %412 = vmatprep.subr.mxu0 0.0
    %v413 = vand.u32 %v59, 4294901760
    %v414 = vsub.f32 %v59, %v413
    %v415 = vand.u32 %v414, 4294901760
    %416 = vmatpush1.msra.mxu0 %v415
    %417 = vmatprep.subr.mxu0 0.0
    %v418 = vand.u32 %v60, 4294901760
    %v419 = vsub.f32 %v60, %v418
    %v420 = vand.u32 %v419, 4294901760
    %421 = vmatpush1.msra.mxu0 %v420
    %422 = vmatprep.subr.mxu0 0.0
    %v423 = vand.u32 %v61, 4294901760
    %v424 = vsub.f32 %v61, %v423
    %v425 = vand.u32 %v424, 4294901760
    %426 = vmatpush1.msra.mxu0 %v425
    %427 = vmatprep.subr.mxu0 0.0
    %v428 = vand.u32 %v69, 4294901760
    %v429 = vsub.f32 %v69, %v428
    %v430 = vand.u32 %v429, 4294901760
    %431 = vmatpush1.msra.mxu0 %v430
    %432 = vmatprep.subr.mxu0 0.0
    %433 = vmatpush1.msra.mxu0 0.0
    %434 = vmatprep.subr.mxu0 0.0
    %435 = vmatpush1.msra.mxu0 0.0
    %436 = vmatprep.subr.mxu0 0.0
    %437 = vmatpush1.msra.mxu0 0.0
    %438 = vmatprep.subr.mxu0 0.0
    %439 = vmatpush1.msra.mxu0 0.0
    %440 = vmatprep.subr.mxu0 0.0
    %441 = vmatpush1.msra.mxu0 0.0
    %442 = vmatprep.subr.mxu0 0.0
    %443 = vmatpush1.msra.mxu0 0.0
    %444 = vmatprep.subr.mxu0 0.0
    %445 = vmatpush1.msra.mxu0 0.0
    %446 = vmatprep.subr.mxu0 0.0
    %447 = vmatpush1.msra.mxu0 0.0
    %448 = vmatprep.subr.mxu0 0.0
    %449 = vmatpush1.msra.mxu0 0.0
    %450 = vmatprep.subr.mxu0 0.0
    %451 = vmatpush1.msra.mxu0 0.0
    %452 = vmatprep.subr.mxu0 0.0
    %453 = vmatpush1.msra.mxu0 0.0
    %454 = vmatprep.subr.mxu0 0.0
    %455 = vmatpush1.msra.mxu0 0.0
    %456 = vmatprep.subr.mxu0 0.0
    %457 = vmatpush1.msra.mxu0 0.0
    %458 = vmatprep.subr.mxu0 0.0
    %459 = vmatpush1.msra.mxu0 0.0
    %460 = vmatprep.subr.mxu0 0.0
    %461 = vmatpush1.msra.mxu0 0.0
    %462 = vmatprep.subr.mxu0 0.0
    %463 = vmatpush1.msra.mxu0 0.0
    %464 = vmatprep.subr.mxu0 0.0
    %465 = vmatpush1.msra.mxu0 0.0
    %466 = vmatprep.subr.mxu0 0.0
    %467 = vmatpush1.msra.mxu0 0.0
    %468 = vmatprep.subr.mxu0 0.0
    %469 = vmatpush1.msra.mxu0 0.0
    %470 = vmatprep.subr.mxu0 0.0
    %471 = vmatpush1.msra.mxu0 0.0
    %472 = vmatprep.subr.mxu0 0.0
    %473 = vmatpush1.msra.mxu0 0.0
    %474 = vmatprep.subr.mxu0 0.0
    %475 = vmatpush1.msra.mxu0 0.0
    %476 = vmatprep.subr.mxu0 0.0
    %477 = vmatpush1.msra.mxu0 0.0
    %478 = vmatprep.subr.mxu0 0.0
    %479 = vmatpush1.msra.mxu0 0.0
    %480 = vmatprep.subr.mxu0 0.0
    %481 = vmatpush1.msra.mxu0 0.0
    %482 = vmatprep.subr.mxu0 0.0
    %483 = vmatpush1.msra.mxu0 0.0
    %484 = vmatprep.subr.mxu0 0.0
    %485 = vmatpush1.msra.mxu0 0.0
    %486 = vmatprep.mubr.f32.mxu0 0.0
    %v487 = vand.u32 %v65, 4294901760
    %488 = vmatmul.mubr.f32.gmra.mrb[0].mxu0 %v487
    %v489 = vpop.f32.mrb[0].mxu0
    %v490 = vadd.f32 %v404, %v489
    %v491 = vpop.f32.mrb[0].mxu0
    %492 = vdwg.mxu0
    %493 = vmatprep.subr.mxu0 0.0
    %v494 = vand.u32 %v58, 4294901760
    %495 = vmatpush1.msra.mxu0 %v494
    %496 = vmatprep.subr.mxu0 0.0
    %v497 = vand.u32 %v59, 4294901760
    %498 = vmatpush1.msra.mxu0 %v497
    %499 = vmatprep.subr.mxu0 0.0
    %v500 = vand.u32 %v60, 4294901760
    %501 = vmatpush1.msra.mxu0 %v500
    %502 = vmatprep.subr.mxu0 0.0
    %v503 = vand.u32 %v61, 4294901760
    %504 = vmatpush1.msra.mxu0 %v503
    %505 = vmatprep.subr.mxu0 0.0
    %v506 = vand.u32 %v69, 4294901760
    %507 = vmatpush1.msra.mxu0 %v506
    %508 = vmatprep.subr.mxu0 0.0
    %509 = vmatpush1.msra.mxu0 0.0
    %510 = vmatprep.subr.mxu0 0.0
    %511 = vmatpush1.msra.mxu0 0.0
    %512 = vmatprep.subr.mxu0 0.0
    %513 = vmatpush1.msra.mxu0 0.0
    %514 = vmatprep.subr.mxu0 0.0
    %515 = vmatpush1.msra.mxu0 0.0
    %516 = vmatprep.subr.mxu0 0.0
    %517 = vmatpush1.msra.mxu0 0.0
    %518 = vmatprep.subr.mxu0 0.0
    %519 = vmatpush1.msra.mxu0 0.0
    %520 = vmatprep.subr.mxu0 0.0
    %521 = vmatpush1.msra.mxu0 0.0
    %522 = vmatprep.subr.mxu0 0.0
    %523 = vmatpush1.msra.mxu0 0.0
    %524 = vmatprep.subr.mxu0 0.0
    %525 = vmatpush1.msra.mxu0 0.0
    %526 = vmatprep.subr.mxu0 0.0
    %527 = vmatpush1.msra.mxu0 0.0
    %528 = vmatprep.subr.mxu0 0.0
    %529 = vmatpush1.msra.mxu0 0.0
    %530 = vmatprep.subr.mxu0 0.0
    %531 = vmatpush1.msra.mxu0 0.0
    %532 = vmatprep.subr.mxu0 0.0
    %533 = vmatpush1.msra.mxu0 0.0
    %534 = vmatprep.subr.mxu0 0.0
    %535 = vmatpush1.msra.mxu0 0.0
    %536 = vmatprep.subr.mxu0 0.0
    %537 = vmatpush1.msra.mxu0 0.0
    %538 = vmatprep.subr.mxu0 0.0
    %539 = vmatpush1.msra.mxu0 0.0
    %540 = vmatprep.subr.mxu0 0.0
    %541 = vmatpush1.msra.mxu0 0.0
    %542 = vmatprep.subr.mxu0 0.0
    %543 = vmatpush1.msra.mxu0 0.0
    %544 = vmatprep.subr.mxu0 0.0
    %545 = vmatpush1.msra.mxu0 0.0
    %546 = vmatprep.subr.mxu0 0.0
    %547 = vmatpush1.msra.mxu0 0.0
    %548 = vmatprep.subr.mxu0 0.0
    %549 = vmatpush1.msra.mxu0 0.0
    %550 = vmatprep.subr.mxu0 0.0
    %551 = vmatpush1.msra.mxu0 0.0
    %552 = vmatprep.subr.mxu0 0.0
    %553 = vmatpush1.msra.mxu0 0.0
    %554 = vmatprep.subr.mxu0 0.0
    %555 = vmatpush1.msra.mxu0 0.0
    %556 = vmatprep.subr.mxu0 0.0
    %557 = vmatpush1.msra.mxu0 0.0
    %558 = vmatprep.subr.mxu0 0.0
    %559 = vmatpush1.msra.mxu0 0.0
    %560 = vmatprep.subr.mxu0 0.0
    %561 = vmatpush1.msra.mxu0 0.0
    %562 = vmatprep.mubr.f32.mxu0 0.0
    %v563 = vand.u32 %v65, 4294901760
    %564 = vmatmul.mubr.f32.gmra.mrb[0].mxu0 %v563
    %v565 = vpop.f32.mrb[0].mxu0
    %v566 = vadd.f32 %v490, %v565
    %v567 = vpop.f32.mrb[0].mxu0
    %568 = vdwg.mxu0
    %vm569 = vcmask 1041408
    %v570 = vsel %vm569, %v566, -inf
    %571 = vmax.xlane.f32.xlu0 %v570
    %v572 = vpop.xlane.xlu0 %571
    %v573 = vsub.f32 %v566, %v572
    %v574 = vmul.f32 %v573, 1.442695
    %v575 = vpow.pop %v574
    %v576 = vsel %vm569, %v575, 0.0
    %577 = vadd.xlane.f32.xlu0 %v576
    %v578 = vpop.xlane.xlu0 %577
    %v579 = vrcp.pop %v578
    %v580 = vmul.f32 %v575, %v579
    %581 = vst [vmem:[#allocation8] sm:$0x3] %v566
    %v582 = vlaneseq
    %v583 = vshrl.u32 %v582, 7
    %v584 = vadd.s32 %v583, 8
    %v585 = vadd.s32 %v583, 16
    %v586 = vadd.s32 %v583, 24
    %v587 = vadd.s32 %v583, 32
    %v588 = vadd.s32 %v583, 40
    %v589 = vadd.s32 %v583, 48
    %v590 = vadd.s32 %v583, 56
    %v591 = vadd.s32 %v583, 64
    %v592 = vadd.s32 %v583, 72
    %v593 = vadd.s32 %v583, 80
    %v594 = vadd.s32 %v583, 88
    %v595 = vadd.s32 %v583, 96
    %v596 = vadd.s32 %v583, 104
    %v597 = vadd.s32 %v583, 112
    %v598 = vadd.s32 %v583, 120
    %v599 = vlaneseq
    %v600 = vand.u32 %v599, 127
    %v601 = vadd.s32 %v600, 128
    %v602 = vadd.s32 %v600, 256
    %v603 = vadd.s32 %v600, 384
    %v604 = vadd.s32 %v600, 512
    %v605 = vadd.s32 %v600, 640
    %v606 = vadd.s32 %v600, 768
    %v607 = vadd.s32 %v600, 896
    %v608 = vadd.s32 %v600, 1024
    %v609 = vadd.s32 %v600, 1152
    %v610 = vadd.s32 %v600, 1280
    %v611 = vadd.s32 %v600, 1408
    %v612 = vadd.s32 %v600, 1536
    %v613 = vadd.s32 %v600, 1664
    %v614 = vadd.s32 %v600, 1792
    %v615 = vadd.s32 %v600, 1920
    %v616 = vadd.s32 %v600, 2048
    %v617 = vadd.s32 %v600, 2176
    %v618 = vadd.s32 %v600, 2304
    %v619 = vadd.s32 %v600, 2432
    %v620 = vadd.s32 %v600, 2560
    %v621 = vadd.s32 %v600, 2688
    %v622 = vadd.s32 %v600, 2816
    %v623 = vadd.s32 %v600, 2944
    %v624 = vadd.s32 %v600, 3072
    %v625 = vadd.s32 %v600, 3200
    %v626 = vadd.s32 %v600, 3328
    %v627 = vadd.s32 %v600, 3456
    %v628 = vadd.s32 %v600, 3584
    %v629 = vadd.s32 %v600, 3712
    %v630 = vadd.s32 %v600, 3840
    %v631 = vadd.s32 %v600, 3968
    %v632 = vmul.u32 %v583, 32
    %v633 = vmul.u32 %v584, 32
    %v634 = vmul.u32 %v585, 32
    %v635 = vmul.u32 %v586, 32
    %v636 = vmul.u32 %v587, 32
    %v637 = vmul.u32 %v588, 32
    %v638 = vmul.u32 %v589, 32
    %v639 = vmul.u32 %v590, 32
    %v640 = vmul.u32 %v591, 32
    %v641 = vmul.u32 %v592, 32
    %v642 = vmul.u32 %v593, 32
    %v643 = vmul.u32 %v594, 32
    %v644 = vmul.u32 %v595, 32
    %v645 = vmul.u32 %v596, 32
    %v646 = vmul.u32 %v597, 32
    %v647 = vmul.u32 %v598, 32
    %vm648 = vcmp.eq.s32.totalorder %v600, %v632
    %vm649 = vcmp.eq.s32.totalorder %v601, %v632
    %vm650 = vcmp.eq.s32.totalorder %v602, %v632
    %vm651 = vcmp.eq.s32.totalorder %v603, %v632
    %vm652 = vcmp.eq.s32.totalorder %v604, %v632
    %vm653 = vcmp.eq.s32.totalorder %v605, %v632
    %vm654 = vcmp.eq.s32.totalorder %v606, %v632
    %vm655 = vcmp.eq.s32.totalorder %v607, %v632
    %vm656 = vcmp.eq.s32.totalorder %v608, %v632
    %vm657 = vcmp.eq.s32.totalorder %v609, %v632
    %vm658 = vcmp.eq.s32.totalorder %v610, %v632
    %vm659 = vcmp.eq.s32.totalorder %v611, %v632
    %vm660 = vcmp.eq.s32.totalorder %v612, %v632
    %vm661 = vcmp.eq.s32.totalorder %v613, %v632
    %vm662 = vcmp.eq.s32.totalorder %v614, %v632
    %vm663 = vcmp.eq.s32.totalorder %v615, %v632
    %vm664 = vcmp.eq.s32.totalorder %v616, %v632
    %vm665 = vcmp.eq.s32.totalorder %v617, %v632
    %vm666 = vcmp.eq.s32.totalorder %v618, %v632
    %vm667 = vcmp.eq.s32.totalorder %v619, %v632
    %vm668 = vcmp.eq.s32.totalorder %v620, %v632
    %vm669 = vcmp.eq.s32.totalorder %v621, %v632
    %vm670 = vcmp.eq.s32.totalorder %v622, %v632
    %vm671 = vcmp.eq.s32.totalorder %v623, %v632
    %vm672 = vcmp.eq.s32.totalorder %v624, %v632
    %vm673 = vcmp.eq.s32.totalorder %v625, %v632
    %vm674 = vcmp.eq.s32.totalorder %v626, %v632
    %vm675 = vcmp.eq.s32.totalorder %v627, %v632
    %vm676 = vcmp.eq.s32.totalorder %v628, %v632
    %vm677 = vcmp.eq.s32.totalorder %v629, %v632
    %vm678 = vcmp.eq.s32.totalorder %v630, %v632
    %vm679 = vcmp.eq.s32.totalorder %v631, %v632
    %vm680 = vcmp.eq.s32.totalorder %v600, %v633
    %vm681 = vcmp.eq.s32.totalorder %v601, %v633
    %vm682 = vcmp.eq.s32.totalorder %v602, %v633
    %vm683 = vcmp.eq.s32.totalorder %v603, %v633
    %vm684 = vcmp.eq.s32.totalorder %v604, %v633
    %vm685 = vcmp.eq.s32.totalorder %v605, %v633
    %vm686 = vcmp.eq.s32.totalorder %v606, %v633
    %vm687 = vcmp.eq.s32.totalorder %v607, %v633
    %vm688 = vcmp.eq.s32.totalorder %v608, %v633
    %vm689 = vcmp.eq.s32.totalorder %v609, %v633
    %vm690 = vcmp.eq.s32.totalorder %v610, %v633
    %vm691 = vcmp.eq.s32.totalorder %v611, %v633
    %vm692 = vcmp.eq.s32.totalorder %v612, %v633
    %vm693 = vcmp.eq.s32.totalorder %v613, %v633
    %vm694 = vcmp.eq.s32.totalorder %v614, %v633
    %vm695 = vcmp.eq.s32.totalorder %v615, %v633
    %vm696 = vcmp.eq.s32.totalorder %v616, %v633
    %vm697 = vcmp.eq.s32.totalorder %v617, %v633
    %vm698 = vcmp.eq.s32.totalorder %v618, %v633
    %vm699 = vcmp.eq.s32.totalorder %v619, %v633
    %vm700 = vcmp.eq.s32.totalorder %v620, %v633
    %vm701 = vcmp.eq.s32.totalorder %v621, %v633
    %vm702 = vcmp.eq.s32.totalorder %v622, %v633
    %vm703 = vcmp.eq.s32.totalorder %v623, %v633
    %vm704 = vcmp.eq.s32.totalorder %v624, %v633
    %vm705 = vcmp.eq.s32.totalorder %v625, %v633
    %vm706 = vcmp.eq.s32.totalorder %v626, %v633
    %vm707 = vcmp.eq.s32.totalorder %v627, %v633
    %vm708 = vcmp.eq.s32.totalorder %v628, %v633
    %vm709 = vcmp.eq.s32.totalorder %v629, %v633
    %vm710 = vcmp.eq.s32.totalorder %v630, %v633
    %vm711 = vcmp.eq.s32.totalorder %v631, %v633
    %vm712 = vcmp.eq.s32.totalorder %v600, %v634
    %vm713 = vcmp.eq.s32.totalorder %v601, %v634
    %vm714 = vcmp.eq.s32.totalorder %v602, %v634
    %vm715 = vcmp.eq.s32.totalorder %v603, %v634
    %vm716 = vcmp.eq.s32.totalorder %v604, %v634
    %vm717 = vcmp.eq.s32.totalorder %v605, %v634
    %vm718 = vcmp.eq.s32.totalorder %v606, %v634
    %vm719 = vcmp.eq.s32.totalorder %v607, %v634
    %vm720 = vcmp.eq.s32.totalorder %v608, %v634
    %vm721 = vcmp.eq.s32.totalorder %v609, %v634
    %vm722 = vcmp.eq.s32.totalorder %v610, %v634
    %vm723 = vcmp.eq.s32.totalorder %v611, %v634
    %vm724 = vcmp.eq.s32.totalorder %v612, %v634
    %vm725 = vcmp.eq.s32.totalorder %v613, %v634
    %vm726 = vcmp.eq.s32.totalorder %v614, %v634
    %vm727 = vcmp.eq.s32.totalorder %v615, %v634
    %vm728 = vcmp.eq.s32.totalorder %v616, %v634
    %vm729 = vcmp.eq.s32.totalorder %v617, %v634
    %vm730 = vcmp.eq.s32.totalorder %v618, %v634
    %vm731 = vcmp.eq.s32.totalorder %v619, %v634
    %vm732 = vcmp.eq.s32.totalorder %v620, %v634
    %vm733 = vcmp.eq.s32.totalorder %v621, %v634
    %vm734 = vcmp.eq.s32.totalorder %v622, %v634
    %vm735 = vcmp.eq.s32.totalorder %v623, %v634
    %vm736 = vcmp.eq.s32.totalorder %v624, %v634
    %vm737 = vcmp.eq.s32.totalorder %v625, %v634
    %vm738 = vcmp.eq.s32.totalorder %v626, %v634
    %vm739 = vcmp.eq.s32.totalorder %v627, %v634
    %vm740 = vcmp.eq.s32.totalorder %v628, %v634
    %vm741 = vcmp.eq.s32.totalorder %v629, %v634
    %vm742 = vcmp.eq.s32.totalorder %v630, %v634
    %vm743 = vcmp.eq.s32.totalorder %v631, %v634
    %vm744 = vcmp.eq.s32.totalorder %v600, %v635
    %vm745 = vcmp.eq.s32.totalorder %v601, %v635
    %vm746 = vcmp.eq.s32.totalorder %v602, %v635
    %vm747 = vcmp.eq.s32.totalorder %v603, %v635
    %vm748 = vcmp.eq.s32.totalorder %v604, %v635
    %vm749 = vcmp.eq.s32.totalorder %v605, %v635
    %vm750 = vcmp.eq.s32.totalorder %v606, %v635
    %vm751 = vcmp.eq.s32.totalorder %v607, %v635
    %vm752 = vcmp.eq.s32.totalorder %v608, %v635
    %vm753 = vcmp.eq.s32.totalorder %v609, %v635
    %vm754 = vcmp.eq.s32.totalorder %v610, %v635
    %vm755 = vcmp.eq.s32.totalorder %v611, %v635
    %vm756 = vcmp.eq.s32.totalorder %v612, %v635
    %vm757 = vcmp.eq.s32.totalorder %v613, %v635
    %vm758 = vcmp.eq.s32.totalorder %v614, %v635
    %vm759 = vcmp.eq.s32.totalorder %v615, %v635
    %vm760 = vcmp.eq.s32.totalorder %v616, %v635
    %vm761 = vcmp.eq.s32.totalorder %v617, %v635
    %vm762 = vcmp.eq.s32.totalorder %v618, %v635
    %vm763 = vcmp.eq.s32.totalorder %v619, %v635
    %vm764 = vcmp.eq.s32.totalorder %v620, %v635
    %vm765 = vcmp.eq.s32.totalorder %v621, %v635
    %vm766 = vcmp.eq.s32.totalorder %v622, %v635
    %vm767 = vcmp.eq.s32.totalorder %v623, %v635
    %vm768 = vcmp.eq.s32.totalorder %v624, %v635
    %vm769 = vcmp.eq.s32.totalorder %v625, %v635
    %vm770 = vcmp.eq.s32.totalorder %v626, %v635
    %vm771 = vcmp.eq.s32.totalorder %v627, %v635
    %vm772 = vcmp.eq.s32.totalorder %v628, %v635
    %vm773 = vcmp.eq.s32.totalorder %v629, %v635
    %vm774 = vcmp.eq.s32.totalorder %v630, %v635
    %vm775 = vcmp.eq.s32.totalorder %v631, %v635
    %vm776 = vcmp.eq.s32.totalorder %v600, %v636
    %vm777 = vcmp.eq.s32.totalorder %v601, %v636
    %vm778 = vcmp.eq.s32.totalorder %v602, %v636
    %vm779 = vcmp.eq.s32.totalorder %v603, %v636
    %vm780 = vcmp.eq.s32.totalorder %v604, %v636
    %vm781 = vcmp.eq.s32.totalorder %v605, %v636
    %vm782 = vcmp.eq.s32.totalorder %v606, %v636
    %vm783 = vcmp.eq.s32.totalorder %v607, %v636
    %vm784 = vcmp.eq.s32.totalorder %v608, %v636
    %vm785 = vcmp.eq.s32.totalorder %v609, %v636
    %vm786 = vcmp.eq.s32.totalorder %v610, %v636
    %vm787 = vcmp.eq.s32.totalorder %v611, %v636
    %vm788 = vcmp.eq.s32.totalorder %v612, %v636
    %vm789 = vcmp.eq.s32.totalorder %v613, %v636
    %vm790 = vcmp.eq.s32.totalorder %v614, %v636
    %vm791 = vcmp.eq.s32.totalorder %v615, %v636
    %vm792 = vcmp.eq.s32.totalorder %v616, %v636
    %vm793 = vcmp.eq.s32.totalorder %v617, %v636
    %vm794 = vcmp.eq.s32.totalorder %v618, %v636
    %vm795 = vcmp.eq.s32.totalorder %v619, %v636
    %vm796 = vcmp.eq.s32.totalorder %v620, %v636
    %vm797 = vcmp.eq.s32.totalorder %v621, %v636
    %vm798 = vcmp.eq.s32.totalorder %v622, %v636
    %vm799 = vcmp.eq.s32.totalorder %v623, %v636
    %vm800 = vcmp.eq.s32.totalorder %v624, %v636
    %vm801 = vcmp.eq.s32.totalorder %v625, %v636
    %vm802 = vcmp.eq.s32.totalorder %v626, %v636
    %vm803 = vcmp.eq.s32.totalorder %v627, %v636
    %vm804 = vcmp.eq.s32.totalorder %v628, %v636
    %vm805 = vcmp.eq.s32.totalorder %v629, %v636
    %vm806 = vcmp.eq.s32.totalorder %v630, %v636
    %vm807 = vcmp.eq.s32.totalorder %v631, %v636
    %vm808 = vcmp.eq.s32.totalorder %v600, %v637
    %vm809 = vcmp.eq.s32.totalorder %v601, %v637
    %vm810 = vcmp.eq.s32.totalorder %v602, %v637
    %vm811 = vcmp.eq.s32.totalorder %v603, %v637
    %vm812 = vcmp.eq.s32.totalorder %v604, %v637
    %vm813 = vcmp.eq.s32.totalorder %v605, %v637
    %vm814 = vcmp.eq.s32.totalorder %v606, %v637
    %vm815 = vcmp.eq.s32.totalorder %v607, %v637
    %vm816 = vcmp.eq.s32.totalorder %v608, %v637
    %vm817 = vcmp.eq.s32.totalorder %v609, %v637
    %vm818 = vcmp.eq.s32.totalorder %v610, %v637
    %vm819 = vcmp.eq.s32.totalorder %v611, %v637
    %vm820 = vcmp.eq.s32.totalorder %v612, %v637
    %vm821 = vcmp.eq.s32.totalorder %v613, %v637
    %vm822 = vcmp.eq.s32.totalorder %v614, %v637
    %vm823 = vcmp.eq.s32.totalorder %v615, %v637
    %vm824 = vcmp.eq.s32.totalorder %v616, %v637
    %vm825 = vcmp.eq.s32.totalorder %v617, %v637
    %vm826 = vcmp.eq.s32.totalorder %v618, %v637
    %vm827 = vcmp.eq.s32.totalorder %v619, %v637
    %vm828 = vcmp.eq.s32.totalorder %v620, %v637
    %vm829 = vcmp.eq.s32.totalorder %v621, %v637
    %vm830 = vcmp.eq.s32.totalorder %v622, %v637
    %vm831 = vcmp.eq.s32.totalorder %v623, %v637
    %vm832 = vcmp.eq.s32.totalorder %v624, %v637
    %vm833 = vcmp.eq.s32.totalorder %v625, %v637
    %vm834 = vcmp.eq.s32.totalorder %v626, %v637
    %vm835 = vcmp.eq.s32.totalorder %v627, %v637
    %vm836 = vcmp.eq.s32.totalorder %v628, %v637
    %vm837 = vcmp.eq.s32.totalorder %v629, %v637
    %vm838 = vcmp.eq.s32.totalorder %v630, %v637
    %vm839 = vcmp.eq.s32.totalorder %v631, %v637
    %vm840 = vcmp.eq.s32.totalorder %v600, %v638
    %vm841 = vcmp.eq.s32.totalorder %v601, %v638
    %vm842 = vcmp.eq.s32.totalorder %v602, %v638
    %vm843 = vcmp.eq.s32.totalorder %v603, %v638
    %vm844 = vcmp.eq.s32.totalorder %v604, %v638
    %vm845 = vcmp.eq.s32.totalorder %v605, %v638
    %vm846 = vcmp.eq.s32.totalorder %v606, %v638
    %vm847 = vcmp.eq.s32.totalorder %v607, %v638
    %vm848 = vcmp.eq.s32.totalorder %v608, %v638
    %vm849 = vcmp.eq.s32.totalorder %v609, %v638
    %vm850 = vcmp.eq.s32.totalorder %v610, %v638
    %vm851 = vcmp.eq.s32.totalorder %v611, %v638
    %vm852 = vcmp.eq.s32.totalorder %v612, %v638
    %vm853 = vcmp.eq.s32.totalorder %v613, %v638
    %vm854 = vcmp.eq.s32.totalorder %v614, %v638
    %vm855 = vcmp.eq.s32.totalorder %v615, %v638
    %vm856 = vcmp.eq.s32.totalorder %v616, %v638
    %vm857 = vcmp.eq.s32.totalorder %v617, %v638
    %vm858 = vcmp.eq.s32.totalorder %v618, %v638
    %vm859 = vcmp.eq.s32.totalorder %v619, %v638
    %vm860 = vcmp.eq.s32.totalorder %v620, %v638
    %vm861 = vcmp.eq.s32.totalorder %v621, %v638
    %vm862 = vcmp.eq.s32.totalorder %v622, %v638
    %vm863 = vcmp.eq.s32.totalorder %v623, %v638
    %vm864 = vcmp.eq.s32.totalorder %v624, %v638
    %vm865 = vcmp.eq.s32.totalorder %v625, %v638
    %vm866 = vcmp.eq.s32.totalorder %v626, %v638
    %vm867 = vcmp.eq.s32.totalorder %v627, %v638
    %vm868 = vcmp.eq.s32.totalorder %v628, %v638
    %vm869 = vcmp.eq.s32.totalorder %v629, %v638
    %vm870 = vcmp.eq.s32.totalorder %v630, %v638
    %vm871 = vcmp.eq.s32.totalorder %v631, %v638
    %vm872 = vcmp.eq.s32.totalorder %v600, %v639
    %vm873 = vcmp.eq.s32.totalorder %v601, %v639
    %vm874 = vcmp.eq.s32.totalorder %v602, %v639
    %vm875 = vcmp.eq.s32.totalorder %v603, %v639
    %vm876 = vcmp.eq.s32.totalorder %v604, %v639
    %vm877 = vcmp.eq.s32.totalorder %v605, %v639
    %vm878 = vcmp.eq.s32.totalorder %v606, %v639
    %vm879 = vcmp.eq.s32.totalorder %v607, %v639
    %vm880 = vcmp.eq.s32.totalorder %v608, %v639
    %vm881 = vcmp.eq.s32.totalorder %v609, %v639
    %vm882 = vcmp.eq.s32.totalorder %v610, %v639
    %vm883 = vcmp.eq.s32.totalorder %v611, %v639
    %vm884 = vcmp.eq.s32.totalorder %v612, %v639
    %vm885 = vcmp.eq.s32.totalorder %v613, %v639
    %vm886 = vcmp.eq.s32.totalorder %v614, %v639
    %vm887 = vcmp.eq.s32.totalorder %v615, %v639
    %vm888 = vcmp.eq.s32.totalorder %v616, %v639
    %vm889 = vcmp.eq.s32.totalorder %v617, %v639
    %vm890 = vcmp.eq.s32.totalorder %v618, %v639
    %vm891 = vcmp.eq.s32.totalorder %v619, %v639
    %vm892 = vcmp.eq.s32.totalorder %v620, %v639
    %vm893 = vcmp.eq.s32.totalorder %v621, %v639
    %vm894 = vcmp.eq.s32.totalorder %v622, %v639
    %vm895 = vcmp.eq.s32.totalorder %v623, %v639
    %vm896 = vcmp.eq.s32.totalorder %v624, %v639
    %vm897 = vcmp.eq.s32.totalorder %v625, %v639
    %vm898 = vcmp.eq.s32.totalorder %v626, %v639
    %vm899 = vcmp.eq.s32.totalorder %v627, %v639
    %vm900 = vcmp.eq.s32.totalorder %v628, %v639
    %vm901 = vcmp.eq.s32.totalorder %v629, %v639
    %vm902 = vcmp.eq.s32.totalorder %v630, %v639
    %vm903 = vcmp.eq.s32.totalorder %v631, %v639
    %vm904 = vcmp.eq.s32.totalorder %v600, %v640
    %vm905 = vcmp.eq.s32.totalorder %v601, %v640
    %vm906 = vcmp.eq.s32.totalorder %v602, %v640
    %vm907 = vcmp.eq.s32.totalorder %v603, %v640
    %vm908 = vcmp.eq.s32.totalorder %v604, %v640
    %vm909 = vcmp.eq.s32.totalorder %v605, %v640
    %vm910 = vcmp.eq.s32.totalorder %v606, %v640
    %vm911 = vcmp.eq.s32.totalorder %v607, %v640
    %vm912 = vcmp.eq.s32.totalorder %v608, %v640
    %vm913 = vcmp.eq.s32.totalorder %v609, %v640
    %vm914 = vcmp.eq.s32.totalorder %v610, %v640
    %vm915 = vcmp.eq.s32.totalorder %v611, %v640
    %vm916 = vcmp.eq.s32.totalorder %v612, %v640
    %vm917 = vcmp.eq.s32.totalorder %v613, %v640
    %vm918 = vcmp.eq.s32.totalorder %v614, %v640
    %vm919 = vcmp.eq.s32.totalorder %v615, %v640
    %vm920 = vcmp.eq.s32.totalorder %v616, %v640
    %vm921 = vcmp.eq.s32.totalorder %v617, %v640
    %vm922 = vcmp.eq.s32.totalorder %v618, %v640
    %vm923 = vcmp.eq.s32.totalorder %v619, %v640
    %vm924 = vcmp.eq.s32.totalorder %v620, %v640
    %vm925 = vcmp.eq.s32.totalorder %v621, %v640
    %vm926 = vcmp.eq.s32.totalorder %v622, %v640
    %vm927 = vcmp.eq.s32.totalorder %v623, %v640
    %vm928 = vcmp.eq.s32.totalorder %v624, %v640
    %vm929 = vcmp.eq.s32.totalorder %v625, %v640
    %vm930 = vcmp.eq.s32.totalorder %v626, %v640
    %vm931 = vcmp.eq.s32.totalorder %v627, %v640
    %vm932 = vcmp.eq.s32.totalorder %v628, %v640
    %vm933 = vcmp.eq.s32.totalorder %v629, %v640
    %vm934 = vcmp.eq.s32.totalorder %v630, %v640
    %vm935 = vcmp.eq.s32.totalorder %v631, %v640
    %vm936 = vcmp.eq.s32.totalorder %v600, %v641
    %vm937 = vcmp.eq.s32.totalorder %v601, %v641
    %vm938 = vcmp.eq.s32.totalorder %v602, %v641
    %vm939 = vcmp.eq.s32.totalorder %v603, %v641
    %vm940 = vcmp.eq.s32.totalorder %v604, %v641
    %vm941 = vcmp.eq.s32.totalorder %v605, %v641
    %vm942 = vcmp.eq.s32.totalorder %v606, %v641
    %vm943 = vcmp.eq.s32.totalorder %v607, %v641
    %vm944 = vcmp.eq.s32.totalorder %v608, %v641
    %vm945 = vcmp.eq.s32.totalorder %v609, %v641
    %vm946 = vcmp.eq.s32.totalorder %v610, %v641
    %vm947 = vcmp.eq.s32.totalorder %v611, %v641
    %vm948 = vcmp.eq.s32.totalorder %v612, %v641
    %vm949 = vcmp.eq.s32.totalorder %v613, %v641
    %vm950 = vcmp.eq.s32.totalorder %v614, %v641
    %vm951 = vcmp.eq.s32.totalorder %v615, %v641
    %vm952 = vcmp.eq.s32.totalorder %v616, %v641
    %vm953 = vcmp.eq.s32.totalorder %v617, %v641
    %vm954 = vcmp.eq.s32.totalorder %v618, %v641
    %vm955 = vcmp.eq.s32.totalorder %v619, %v641
    %vm956 = vcmp.eq.s32.totalorder %v620, %v641
    %vm957 = vcmp.eq.s32.totalorder %v621, %v641
    %vm958 = vcmp.eq.s32.totalorder %v622, %v641
    %vm959 = vcmp.eq.s32.totalorder %v623, %v641
    %vm960 = vcmp.eq.s32.totalorder %v624, %v641
    %vm961 = vcmp.eq.s32.totalorder %v625, %v641
    %vm962 = vcmp.eq.s32.totalorder %v626, %v641
    %vm963 = vcmp.eq.s32.totalorder %v627, %v641
    %vm964 = vcmp.eq.s32.totalorder %v628, %v641
    %vm965 = vcmp.eq.s32.totalorder %v629, %v641
    %vm966 = vcmp.eq.s32.totalorder %v630, %v641
    %vm967 = vcmp.eq.s32.totalorder %v631, %v641
    %vm968 = vcmp.eq.s32.totalorder %v600, %v642
    %vm969 = vcmp.eq.s32.totalorder %v601, %v642
    %vm970 = vcmp.eq.s32.totalorder %v602, %v642
    %vm971 = vcmp.eq.s32.totalorder %v603, %v642
    %vm972 = vcmp.eq.s32.totalorder %v604, %v642
    %vm973 = vcmp.eq.s32.totalorder %v605, %v642
    %vm974 = vcmp.eq.s32.totalorder %v606, %v642
    %vm975 = vcmp.eq.s32.totalorder %v607, %v642
    %vm976 = vcmp.eq.s32.totalorder %v608, %v642
    %vm977 = vcmp.eq.s32.totalorder %v609, %v642
    %vm978 = vcmp.eq.s32.totalorder %v610, %v642
    %vm979 = vcmp.eq.s32.totalorder %v611, %v642
    %vm980 = vcmp.eq.s32.totalorder %v612, %v642
    %vm981 = vcmp.eq.s32.totalorder %v613, %v642
    %vm982 = vcmp.eq.s32.totalorder %v614, %v642
    %vm983 = vcmp.eq.s32.totalorder %v615, %v642
    %vm984 = vcmp.eq.s32.totalorder %v616, %v642
    %vm985 = vcmp.eq.s32.totalorder %v617, %v642
    %vm986 = vcmp.eq.s32.totalorder %v618, %v642
    %vm987 = vcmp.eq.s32.totalorder %v619, %v642
    %vm988 = vcmp.eq.s32.totalorder %v620, %v642
    %vm989 = vcmp.eq.s32.totalorder %v621, %v642
    %vm990 = vcmp.eq.s32.totalorder %v622, %v642
    %vm991 = vcmp.eq.s32.totalorder %v623, %v642
    %vm992 = vcmp.eq.s32.totalorder %v624, %v642
    %vm993 = vcmp.eq.s32.totalorder %v625, %v642
    %vm994 = vcmp.eq.s32.totalorder %v626, %v642
    %vm995 = vcmp.eq.s32.totalorder %v627, %v642
    %vm996 = vcmp.eq.s32.totalorder %v628, %v642
    %vm997 = vcmp.eq.s32.totalorder %v629, %v642
    %vm998 = vcmp.eq.s32.totalorder %v630, %v642
    %vm999 = vcmp.eq.s32.totalorder %v631, %v642
    %vm1000 = vcmp.eq.s32.totalorder %v600, %v643
    %vm1001 = vcmp.eq.s32.totalorder %v601, %v643
    %vm1002 = vcmp.eq.s32.totalorder %v602, %v643
    %vm1003 = vcmp.eq.s32.totalorder %v603, %v643
    %vm1004 = vcmp.eq.s32.totalorder %v604, %v643
    %vm1005 = vcmp.eq.s32.totalorder %v605, %v643
    %vm1006 = vcmp.eq.s32.totalorder %v606, %v643
    %vm1007 = vcmp.eq.s32.totalorder %v607, %v643
    %vm1008 = vcmp.eq.s32.totalorder %v608, %v643
    %vm1009 = vcmp.eq.s32.totalorder %v609, %v643
    %vm1010 = vcmp.eq.s32.totalorder %v610, %v643
    %vm1011 = vcmp.eq.s32.totalorder %v611, %v643
    %vm1012 = vcmp.eq.s32.totalorder %v612, %v643
    %vm1013 = vcmp.eq.s32.totalorder %v613, %v643
    %vm1014 = vcmp.eq.s32.totalorder %v614, %v643
    %vm1015 = vcmp.eq.s32.totalorder %v615, %v643
    %vm1016 = vcmp.eq.s32.totalorder %v616, %v643
    %vm1017 = vcmp.eq.s32.totalorder %v617, %v643
    %vm1018 = vcmp.eq.s32.totalorder %v618, %v643
    %vm1019 = vcmp.eq.s32.totalorder %v619, %v643
    %vm1020 = vcmp.eq.s32.totalorder %v620, %v643
    %vm1021 = vcmp.eq.s32.totalorder %v621, %v643
    %vm1022 = vcmp.eq.s32.totalorder %v622, %v643
    %vm1023 = vcmp.eq.s32.totalorder %v623, %v643
    %vm1024 = vcmp.eq.s32.totalorder %v624, %v643
    %vm1025 = vcmp.eq.s32.totalorder %v625, %v643
    %vm1026 = vcmp.eq.s32.totalorder %v626, %v643
    %vm1027 = vcmp.eq.s32.totalorder %v627, %v643
    %vm1028 = vcmp.eq.s32.totalorder %v628, %v643
    %vm1029 = vcmp.eq.s32.totalorder %v629, %v643
    %vm1030 = vcmp.eq.s32.totalorder %v630, %v643
    %vm1031 = vcmp.eq.s32.totalorder %v631, %v643
    %vm1032 = vcmp.eq.s32.totalorder %v600, %v644
    %vm1033 = vcmp.eq.s32.totalorder %v601, %v644
    %vm1034 = vcmp.eq.s32.totalorder %v602, %v644
    %vm1035 = vcmp.eq.s32.totalorder %v603, %v644
    %vm1036 = vcmp.eq.s32.totalorder %v604, %v644
    %vm1037 = vcmp.eq.s32.totalorder %v605, %v644
    %vm1038 = vcmp.eq.s32.totalorder %v606, %v644
    %vm1039 = vcmp.eq.s32.totalorder %v607, %v644
    %vm1040 = vcmp.eq.s32.totalorder %v608, %v644
    %vm1041 = vcmp.eq.s32.totalorder %v609, %v644
    %vm1042 = vcmp.eq.s32.totalorder %v610, %v644
    %vm1043 = vcmp.eq.s32.totalorder %v611, %v644
    %vm1044 = vcmp.eq.s32.totalorder %v612, %v644
    %vm1045 = vcmp.eq.s32.totalorder %v613, %v644
    %vm1046 = vcmp.eq.s32.totalorder %v614, %v644
    %vm1047 = vcmp.eq.s32.totalorder %v615, %v644
    %vm1048 = vcmp.eq.s32.totalorder %v616, %v644
    %vm1049 = vcmp.eq.s32.totalorder %v617, %v644
    %vm1050 = vcmp.eq.s32.totalorder %v618, %v644
    %vm1051 = vcmp.eq.s32.totalorder %v619, %v644
    %vm1052 = vcmp.eq.s32.totalorder %v620, %v644
    %vm1053 = vcmp.eq.s32.totalorder %v621, %v644
    %vm1054 = vcmp.eq.s32.totalorder %v622, %v644
    %vm1055 = vcmp.eq.s32.totalorder %v623, %v644
    %vm1056 = vcmp.eq.s32.totalorder %v624, %v644
    %vm1057 = vcmp.eq.s32.totalorder %v625, %v644
    %vm1058 = vcmp.eq.s32.totalorder %v626, %v644
    %vm1059 = vcmp.eq.s32.totalorder %v627, %v644
    %vm1060 = vcmp.eq.s32.totalorder %v628, %v644
    %vm1061 = vcmp.eq.s32.totalorder %v629, %v644
    %vm1062 = vcmp.eq.s32.totalorder %v630, %v644
    %vm1063 = vcmp.eq.s32.totalorder %v631, %v644
    %vm1064 = vcmp.eq.s32.totalorder %v600, %v645
    %vm1065 = vcmp.eq.s32.totalorder %v601, %v645
    %vm1066 = vcmp.eq.s32.totalorder %v602, %v645
    %vm1067 = vcmp.eq.s32.totalorder %v603, %v645
    %vm1068 = vcmp.eq.s32.totalorder %v604, %v645
    %vm1069 = vcmp.eq.s32.totalorder %v605, %v645
    %vm1070 = vcmp.eq.s32.totalorder %v606, %v645
    %vm1071 = vcmp.eq.s32.totalorder %v607, %v645
    %vm1072 = vcmp.eq.s32.totalorder %v608, %v645
    %vm1073 = vcmp.eq.s32.totalorder %v609, %v645
    %vm1074 = vcmp.eq.s32.totalorder %v610, %v645
    %vm1075 = vcmp.eq.s32.totalorder %v611, %v645
    %vm1076 = vcmp.eq.s32.totalorder %v612, %v645
    %vm1077 = vcmp.eq.s32.totalorder %v613, %v645
    %vm1078 = vcmp.eq.s32.totalorder %v614, %v645
    %vm1079 = vcmp.eq.s32.totalorder %v615, %v645
    %vm1080 = vcmp.eq.s32.totalorder %v616, %v645
    %vm1081 = vcmp.eq.s32.totalorder %v617, %v645
    %vm1082 = vcmp.eq.s32.totalorder %v618, %v645
    %vm1083 = vcmp.eq.s32.totalorder %v619, %v645
    %vm1084 = vcmp.eq.s32.totalorder %v620, %v645
    %vm1085 = vcmp.eq.s32.totalorder %v621, %v645
    %vm1086 = vcmp.eq.s32.totalorder %v622, %v645
    %vm1087 = vcmp.eq.s32.totalorder %v623, %v645
    %vm1088 = vcmp.eq.s32.totalorder %v624, %v645
    %vm1089 = vcmp.eq.s32.totalorder %v625, %v645
    %vm1090 = vcmp.eq.s32.totalorder %v626, %v645
    %vm1091 = vcmp.eq.s32.totalorder %v627, %v645
    %vm1092 = vcmp.eq.s32.totalorder %v628, %v645
    %vm1093 = vcmp.eq.s32.totalorder %v629, %v645
    %vm1094 = vcmp.eq.s32.totalorder %v630, %v645
    %vm1095 = vcmp.eq.s32.totalorder %v631, %v645
    %vm1096 = vcmp.eq.s32.totalorder %v600, %v646
    %vm1097 = vcmp.eq.s32.totalorder %v601, %v646
    %vm1098 = vcmp.eq.s32.totalorder %v602, %v646
    %vm1099 = vcmp.eq.s32.totalorder %v603, %v646
    %vm1100 = vcmp.eq.s32.totalorder %v604, %v646
    %vm1101 = vcmp.eq.s32.totalorder %v605, %v646
    %vm1102 = vcmp.eq.s32.totalorder %v606, %v646
    %vm1103 = vcmp.eq.s32.totalorder %v607, %v646
    %vm1104 = vcmp.eq.s32.totalorder %v608, %v646
    %vm1105 = vcmp.eq.s32.totalorder %v609, %v646
    %vm1106 = vcmp.eq.s32.totalorder %v610, %v646
    %vm1107 = vcmp.eq.s32.totalorder %v611, %v646
    %vm1108 = vcmp.eq.s32.totalorder %v612, %v646
    %vm1109 = vcmp.eq.s32.totalorder %v613, %v646
    %vm1110 = vcmp.eq.s32.totalorder %v614, %v646
    %vm1111 = vcmp.eq.s32.totalorder %v615, %v646
    %vm1112 = vcmp.eq.s32.totalorder %v616, %v646
    %vm1113 = vcmp.eq.s32.totalorder %v617, %v646
    %vm1114 = vcmp.eq.s32.totalorder %v618, %v646
    %vm1115 = vcmp.eq.s32.totalorder %v619, %v646
    %vm1116 = vcmp.eq.s32.totalorder %v620, %v646
    %vm1117 = vcmp.eq.s32.totalorder %v621, %v646
    %vm1118 = vcmp.eq.s32.totalorder %v622, %v646
    %vm1119 = vcmp.eq.s32.totalorder %v623, %v646
    %vm1120 = vcmp.eq.s32.totalorder %v624, %v646
    %vm1121 = vcmp.eq.s32.totalorder %v625, %v646
    %vm1122 = vcmp.eq.s32.totalorder %v626, %v646
    %vm1123 = vcmp.eq.s32.totalorder %v627, %v646
    %vm1124 = vcmp.eq.s32.totalorder %v628, %v646
    %vm1125 = vcmp.eq.s32.totalorder %v629, %v646
    %vm1126 = vcmp.eq.s32.totalorder %v630, %v646
    %vm1127 = vcmp.eq.s32.totalorder %v631, %v646
    %vm1128 = vcmp.eq.s32.totalorder %v600, %v647
    %vm1129 = vcmp.eq.s32.totalorder %v601, %v647
    %vm1130 = vcmp.eq.s32.totalorder %v602, %v647
    %vm1131 = vcmp.eq.s32.totalorder %v603, %v647
    %vm1132 = vcmp.eq.s32.totalorder %v604, %v647
    %vm1133 = vcmp.eq.s32.totalorder %v605, %v647
    %vm1134 = vcmp.eq.s32.totalorder %v606, %v647
    %vm1135 = vcmp.eq.s32.totalorder %v607, %v647
    %vm1136 = vcmp.eq.s32.totalorder %v608, %v647
    %vm1137 = vcmp.eq.s32.totalorder %v609, %v647
    %vm1138 = vcmp.eq.s32.totalorder %v610, %v647
    %vm1139 = vcmp.eq.s32.totalorder %v611, %v647
    %vm1140 = vcmp.eq.s32.totalorder %v612, %v647
    %vm1141 = vcmp.eq.s32.totalorder %v613, %v647
    %vm1142 = vcmp.eq.s32.totalorder %v614, %v647
    %vm1143 = vcmp.eq.s32.totalorder %v615, %v647
    %vm1144 = vcmp.eq.s32.totalorder %v616, %v647
    %vm1145 = vcmp.eq.s32.totalorder %v617, %v647
    %vm1146 = vcmp.eq.s32.totalorder %v618, %v647
    %vm1147 = vcmp.eq.s32.totalorder %v619, %v647
    %vm1148 = vcmp.eq.s32.totalorder %v620, %v647
    %vm1149 = vcmp.eq.s32.totalorder %v621, %v647
    %vm1150 = vcmp.eq.s32.totalorder %v622, %v647
    %vm1151 = vcmp.eq.s32.totalorder %v623, %v647
    %vm1152 = vcmp.eq.s32.totalorder %v624, %v647
    %vm1153 = vcmp.eq.s32.totalorder %v625, %v647
    %vm1154 = vcmp.eq.s32.totalorder %v626, %v647
    %vm1155 = vcmp.eq.s32.totalorder %v627, %v647
    %vm1156 = vcmp.eq.s32.totalorder %v628, %v647
    %vm1157 = vcmp.eq.s32.totalorder %v629, %v647
    %vm1158 = vcmp.eq.s32.totalorder %v630, %v647
    %vm1159 = vcmp.eq.s32.totalorder %v631, %v647
    %v1160 = vsel %vm648, 1.0, 0.0
    %v1161 = vsel %vm649, 1.0, 0.0
    %v1162 = vsel %vm650, 1.0, 0.0
    %v1163 = vsel %vm651, 1.0, 0.0
    %v1164 = vsel %vm652, 1.0, 0.0
    %v1165 = vsel %vm653, 1.0, 0.0
    %v1166 = vsel %vm654, 1.0, 0.0
    %v1167 = vsel %vm655, 1.0, 0.0
    %v1168 = vsel %vm656, 1.0, 0.0
    %v1169 = vsel %vm657, 1.0, 0.0
    %v1170 = vsel %vm658, 1.0, 0.0
    %v1171 = vsel %vm659, 1.0, 0.0
    %v1172 = vsel %vm660, 1.0, 0.0
    %v1173 = vsel %vm661, 1.0, 0.0
    %v1174 = vsel %vm662, 1.0, 0.0
    %v1175 = vsel %vm663, 1.0, 0.0
    %v1176 = vsel %vm664, 1.0, 0.0
    %v1177 = vsel %vm665, 1.0, 0.0
    %v1178 = vsel %vm666, 1.0, 0.0
    %v1179 = vsel %vm667, 1.0, 0.0
    %v1180 = vsel %vm668, 1.0, 0.0
    %v1181 = vsel %vm669, 1.0, 0.0
    %v1182 = vsel %vm670, 1.0, 0.0
    %v1183 = vsel %vm671, 1.0, 0.0
    %v1184 = vsel %vm672, 1.0, 0.0
    %v1185 = vsel %vm673, 1.0, 0.0
    %v1186 = vsel %vm674, 1.0, 0.0
    %v1187 = vsel %vm675, 1.0, 0.0
    %v1188 = vsel %vm676, 1.0, 0.0
    %v1189 = vsel %vm677, 1.0, 0.0
    %v1190 = vsel %vm678, 1.0, 0.0
    %v1191 = vsel %vm679, 1.0, 0.0
    %v1192 = vsel %vm680, 1.0, 0.0
    %v1193 = vsel %vm681, 1.0, 0.0
    %v1194 = vsel %vm682, 1.0, 0.0
    %v1195 = vsel %vm683, 1.0, 0.0
    %v1196 = vsel %vm684, 1.0, 0.0
    %v1197 = vsel %vm685, 1.0, 0.0
    %v1198 = vsel %vm686, 1.0, 0.0
    %v1199 = vsel %vm687, 1.0, 0.0
    %v1200 = vsel %vm688, 1.0, 0.0
    %v1201 = vsel %vm689, 1.0, 0.0
    %v1202 = vsel %vm690, 1.0, 0.0
    %v1203 = vsel %vm691, 1.0, 0.0
    %v1204 = vsel %vm692, 1.0, 0.0
    %v1205 = vsel %vm693, 1.0, 0.0
    %v1206 = vsel %vm694, 1.0, 0.0
    %v1207 = vsel %vm695, 1.0, 0.0
    %v1208 = vsel %vm696, 1.0, 0.0
    %v1209 = vsel %vm697, 1.0, 0.0
    %v1210 = vsel %vm698, 1.0, 0.0
    %v1211 = vsel %vm699, 1.0, 0.0
    %v1212 = vsel %vm700, 1.0, 0.0
    %v1213 = vsel %vm701, 1.0, 0.0
    %v1214 = vsel %vm702, 1.0, 0.0
    %v1215 = vsel %vm703, 1.0, 0.0
    %v1216 = vsel %vm704, 1.0, 0.0
    %v1217 = vsel %vm705, 1.0, 0.0
    %v1218 = vsel %vm706, 1.0, 0.0
    %v1219 = vsel %vm707, 1.0, 0.0
    %v1220 = vsel %vm708, 1.0, 0.0
    %v1221 = vsel %vm709, 1.0, 0.0
    %v1222 = vsel %vm710, 1.0, 0.0
    %v1223 = vsel %vm711, 1.0, 0.0
    %v1224 = vsel %vm712, 1.0, 0.0
    %v1225 = vsel %vm713, 1.0, 0.0
    %v1226 = vsel %vm714, 1.0, 0.0
    %v1227 = vsel %vm715, 1.0, 0.0
    %v1228 = vsel %vm716, 1.0, 0.0
    %v1229 = vsel %vm717, 1.0, 0.0
    %v1230 = vsel %vm718, 1.0, 0.0
    %v1231 = vsel %vm719, 1.0, 0.0
    %v1232 = vsel %vm720, 1.0, 0.0
    %v1233 = vsel %vm721, 1.0, 0.0
    %v1234 = vsel %vm722, 1.0, 0.0
    %v1235 = vsel %vm723, 1.0, 0.0
    %v1236 = vsel %vm724, 1.0, 0.0
    %v1237 = vsel %vm725, 1.0, 0.0
    %v1238 = vsel %vm726, 1.0, 0.0
    %v1239 = vsel %vm727, 1.0, 0.0
    %v1240 = vsel %vm728, 1.0, 0.0
    %v1241 = vsel %vm729, 1.0, 0.0
    %v1242 = vsel %vm730, 1.0, 0.0
    %v1243 = vsel %vm731, 1.0, 0.0
    %v1244 = vsel %vm732, 1.0, 0.0
    %v1245 = vsel %vm733, 1.0, 0.0
    %v1246 = vsel %vm734, 1.0, 0.0
    %v1247 = vsel %vm735, 1.0, 0.0
    %v1248 = vsel %vm736, 1.0, 0.0
    %v1249 = vsel %vm737, 1.0, 0.0
    %v1250 = vsel %vm738, 1.0, 0.0
    %v1251 = vsel %vm739, 1.0, 0.0
    %v1252 = vsel %vm740, 1.0, 0.0
    %v1253 = vsel %vm741, 1.0, 0.0
    %v1254 = vsel %vm742, 1.0, 0.0
    %v1255 = vsel %vm743, 1.0, 0.0
    %v1256 = vsel %vm744, 1.0, 0.0
    %v1257 = vsel %vm745, 1.0, 0.0
    %v1258 = vsel %vm746, 1.0, 0.0
    %v1259 = vsel %vm747, 1.0, 0.0
    %v1260 = vsel %vm748, 1.0, 0.0
    %v1261 = vsel %vm749, 1.0, 0.0
    %v1262 = vsel %vm750, 1.0, 0.0
    %v1263 = vsel %vm751, 1.0, 0.0
    %v1264 = vsel %vm752, 1.0, 0.0
    %v1265 = vsel %vm753, 1.0, 0.0
    %v1266 = vsel %vm754, 1.0, 0.0
    %v1267 = vsel %vm755, 1.0, 0.0
    %v1268 = vsel %vm756, 1.0, 0.0
    %v1269 = vsel %vm757, 1.0, 0.0
    %v1270 = vsel %vm758, 1.0, 0.0
    %v1271 = vsel %vm759, 1.0, 0.0
    %v1272 = vsel %vm760, 1.0, 0.0
    %v1273 = vsel %vm761, 1.0, 0.0
    %v1274 = vsel %vm762, 1.0, 0.0
    %v1275 = vsel %vm763, 1.0, 0.0
    %v1276 = vsel %vm764, 1.0, 0.0
    %v1277 = vsel %vm765, 1.0, 0.0
    %v1278 = vsel %vm766, 1.0, 0.0
    %v1279 = vsel %vm767, 1.0, 0.0
    %v1280 = vsel %vm768, 1.0, 0.0
    %v1281 = vsel %vm769, 1.0, 0.0
    %v1282 = vsel %vm770, 1.0, 0.0
    %v1283 = vsel %vm771, 1.0, 0.0
    %v1284 = vsel %vm772, 1.0, 0.0
    %v1285 = vsel %vm773, 1.0, 0.0
    %v1286 = vsel %vm774, 1.0, 0.0
    %v1287 = vsel %vm775, 1.0, 0.0
    %v1288 = vsel %vm776, 1.0, 0.0
    %v1289 = vsel %vm777, 1.0, 0.0
    %v1290 = vsel %vm778, 1.0, 0.0
    %v1291 = vsel %vm779, 1.0, 0.0
    %v1292 = vsel %vm780, 1.0, 0.0
    %v1293 = vsel %vm781, 1.0, 0.0
    %v1294 = vsel %vm782, 1.0, 0.0
    %v1295 = vsel %vm783, 1.0, 0.0
    %v1296 = vsel %vm784, 1.0, 0.0
    %v1297 = vsel %vm785, 1.0, 0.0
    %v1298 = vsel %vm786, 1.0, 0.0
    %v1299 = vsel %vm787, 1.0, 0.0
    %v1300 = vsel %vm788, 1.0, 0.0
    %v1301 = vsel %vm789, 1.0, 0.0
    %v1302 = vsel %vm790, 1.0, 0.0
    %v1303 = vsel %vm791, 1.0, 0.0
    %v1304 = vsel %vm792, 1.0, 0.0
    %v1305 = vsel %vm793, 1.0, 0.0
    %v1306 = vsel %vm794, 1.0, 0.0
    %v1307 = vsel %vm795, 1.0, 0.0
    %v1308 = vsel %vm796, 1.0, 0.0
    %v1309 = vsel %vm797, 1.0, 0.0
    %v1310 = vsel %vm798, 1.0, 0.0
    %v1311 = vsel %vm799, 1.0, 0.0
    %v1312 = vsel %vm800, 1.0, 0.0
    %v1313 = vsel %vm801, 1.0, 0.0
    %v1314 = vsel %vm802, 1.0, 0.0
    %v1315 = vsel %vm803, 1.0, 0.0
    %v1316 = vsel %vm804, 1.0, 0.0
    %v1317 = vsel %vm805, 1.0, 0.0
    %v1318 = vsel %vm806, 1.0, 0.0
    %v1319 = vsel %vm807, 1.0, 0.0
    %v1320 = vsel %vm808, 1.0, 0.0
    %v1321 = vsel %vm809, 1.0, 0.0
    %v1322 = vsel %vm810, 1.0, 0.0
    %v1323 = vsel %vm811, 1.0, 0.0
    %v1324 = vsel %vm812, 1.0, 0.0
    %v1325 = vsel %vm813, 1.0, 0.0
    %v1326 = vsel %vm814, 1.0, 0.0
    %v1327 = vsel %vm815, 1.0, 0.0
    %v1328 = vsel %vm816, 1.0, 0.0
    %v1329 = vsel %vm817, 1.0, 0.0
    %v1330 = vsel %vm818, 1.0, 0.0
    %v1331 = vsel %vm819, 1.0, 0.0
    %v1332 = vsel %vm820, 1.0, 0.0
    %v1333 = vsel %vm821, 1.0, 0.0
    %v1334 = vsel %vm822, 1.0, 0.0
    %v1335 = vsel %vm823, 1.0, 0.0
    %v1336 = vsel %vm824, 1.0, 0.0
    %v1337 = vsel %vm825, 1.0, 0.0
    %v1338 = vsel %vm826, 1.0, 0.0
    %v1339 = vsel %vm827, 1.0, 0.0
    %v1340 = vsel %vm828, 1.0, 0.0
    %v1341 = vsel %vm829, 1.0, 0.0
    %v1342 = vsel %vm830, 1.0, 0.0
    %v1343 = vsel %vm831, 1.0, 0.0
    %v1344 = vsel %vm832, 1.0, 0.0
    %v1345 = vsel %vm833, 1.0, 0.0
    %v1346 = vsel %vm834, 1.0, 0.0
    %v1347 = vsel %vm835, 1.0, 0.0
    %v1348 = vsel %vm836, 1.0, 0.0
    %v1349 = vsel %vm837, 1.0, 0.0
    %v1350 = vsel %vm838, 1.0, 0.0
    %v1351 = vsel %vm839, 1.0, 0.0
    %v1352 = vsel %vm840, 1.0, 0.0
    %v1353 = vsel %vm841, 1.0, 0.0
    %v1354 = vsel %vm842, 1.0, 0.0
    %v1355 = vsel %vm843, 1.0, 0.0
    %v1356 = vsel %vm844, 1.0, 0.0
    %v1357 = vsel %vm845, 1.0, 0.0
    %v1358 = vsel %vm846, 1.0, 0.0
    %v1359 = vsel %vm847, 1.0, 0.0
    %v1360 = vsel %vm848, 1.0, 0.0
    %v1361 = vsel %vm849, 1.0, 0.0
    %v1362 = vsel %vm850, 1.0, 0.0
    %v1363 = vsel %vm851, 1.0, 0.0
    %v1364 = vsel %vm852, 1.0, 0.0
    %v1365 = vsel %vm853, 1.0, 0.0
    %v1366 = vsel %vm854, 1.0, 0.0
    %v1367 = vsel %vm855, 1.0, 0.0
    %v1368 = vsel %vm856, 1.0, 0.0
    %v1369 = vsel %vm857, 1.0, 0.0
    %v1370 = vsel %vm858, 1.0, 0.0
    %v1371 = vsel %vm859, 1.0, 0.0
    %v1372 = vsel %vm860, 1.0, 0.0
    %v1373 = vsel %vm861, 1.0, 0.0
    %v1374 = vsel %vm862, 1.0, 0.0
    %v1375 = vsel %vm863, 1.0, 0.0
    %v1376 = vsel %vm864, 1.0, 0.0
    %v1377 = vsel %vm865, 1.0, 0.0
    %v1378 = vsel %vm866, 1.0, 0.0
    %v1379 = vsel %vm867, 1.0, 0.0
    %v1380 = vsel %vm868, 1.0, 0.0
    %v1381 = vsel %vm869, 1.0, 0.0
    %v1382 = vsel %vm870, 1.0, 0.0
    %v1383 = vsel %vm871, 1.0, 0.0
    %v1384 = vsel %vm872, 1.0, 0.0
    %v1385 = vsel %vm873, 1.0, 0.0
    %v1386 = vsel %vm874, 1.0, 0.0
    %v1387 = vsel %vm875, 1.0, 0.0
    %v1388 = vsel %vm876, 1.0, 0.0
    %v1389 = vsel %vm877, 1.0, 0.0
    %v1390 = vsel %vm878, 1.0, 0.0
    %v1391 = vsel %vm879, 1.0, 0.0
    %v1392 = vsel %vm880, 1.0, 0.0
    %v1393 = vsel %vm881, 1.0, 0.0
    %v1394 = vsel %vm882, 1.0, 0.0
    %v1395 = vsel %vm883, 1.0, 0.0
    %v1396 = vsel %vm884, 1.0, 0.0
    %v1397 = vsel %vm885, 1.0, 0.0
    %v1398 = vsel %vm886, 1.0, 0.0
    %v1399 = vsel %vm887, 1.0, 0.0
    %v1400 = vsel %vm888, 1.0, 0.0
    %v1401 = vsel %vm889, 1.0, 0.0
    %v1402 = vsel %vm890, 1.0, 0.0
    %v1403 = vsel %vm891, 1.0, 0.0
    %v1404 = vsel %vm892, 1.0, 0.0
    %v1405 = vsel %vm893, 1.0, 0.0
    %v1406 = vsel %vm894, 1.0, 0.0
    %v1407 = vsel %vm895, 1.0, 0.0
    %v1408 = vsel %vm896, 1.0, 0.0
    %v1409 = vsel %vm897, 1.0, 0.0
    %v1410 = vsel %vm898, 1.0, 0.0
    %v1411 = vsel %vm899, 1.0, 0.0
    %v1412 = vsel %vm900, 1.0, 0.0
    %v1413 = vsel %vm901, 1.0, 0.0
    %v1414 = vsel %vm902, 1.0, 0.0
    %v1415 = vsel %vm903, 1.0, 0.0
    %v1416 = vsel %vm904, 1.0, 0.0
    %v1417 = vsel %vm905, 1.0, 0.0
    %v1418 = vsel %vm906, 1.0, 0.0
    %v1419 = vsel %vm907, 1.0, 0.0
    %v1420 = vsel %vm908, 1.0, 0.0
    %v1421 = vsel %vm909, 1.0, 0.0
    %v1422 = vsel %vm910, 1.0, 0.0
    %v1423 = vsel %vm911, 1.0, 0.0
    %v1424 = vsel %vm912, 1.0, 0.0
    %v1425 = vsel %vm913, 1.0, 0.0
    %v1426 = vsel %vm914, 1.0, 0.0
    %v1427 = vsel %vm915, 1.0, 0.0
    %v1428 = vsel %vm916, 1.0, 0.0
    %v1429 = vsel %vm917, 1.0, 0.0
    %v1430 = vsel %vm918, 1.0, 0.0
    %v1431 = vsel %vm919, 1.0, 0.0
    %v1432 = vsel %vm920, 1.0, 0.0
    %v1433 = vsel %vm921, 1.0, 0.0
    %v1434 = vsel %vm922, 1.0, 0.0
    %v1435 = vsel %vm923, 1.0, 0.0
    %v1436 = vsel %vm924, 1.0, 0.0
    %v1437 = vsel %vm925, 1.0, 0.0
    %v1438 = vsel %vm926, 1.0, 0.0
    %v1439 = vsel %vm927, 1.0, 0.0
    %v1440 = vsel %vm928, 1.0, 0.0
    %v1441 = vsel %vm929, 1.0, 0.0
    %v1442 = vsel %vm930, 1.0, 0.0
    %v1443 = vsel %vm931, 1.0, 0.0
    %v1444 = vsel %vm932, 1.0, 0.0
    %v1445 = vsel %vm933, 1.0, 0.0
    %v1446 = vsel %vm934, 1.0, 0.0
    %v1447 = vsel %vm935, 1.0, 0.0
    %v1448 = vsel %vm936, 1.0, 0.0
    %v1449 = vsel %vm937, 1.0, 0.0
    %v1450 = vsel %vm938, 1.0, 0.0
    %v1451 = vsel %vm939, 1.0, 0.0
    %v1452 = vsel %vm940, 1.0, 0.0
    %v1453 = vsel %vm941, 1.0, 0.0
    %v1454 = vsel %vm942, 1.0, 0.0
    %v1455 = vsel %vm943, 1.0, 0.0
    %v1456 = vsel %vm944, 1.0, 0.0
    %v1457 = vsel %vm945, 1.0, 0.0
    %v1458 = vsel %vm946, 1.0, 0.0
    %v1459 = vsel %vm947, 1.0, 0.0
    %v1460 = vsel %vm948, 1.0, 0.0
    %v1461 = vsel %vm949, 1.0, 0.0
    %v1462 = vsel %vm950, 1.0, 0.0
    %v1463 = vsel %vm951, 1.0, 0.0
    %v1464 = vsel %vm952, 1.0, 0.0
    %v1465 = vsel %vm953, 1.0, 0.0
    %v1466 = vsel %vm954, 1.0, 0.0
    %v1467 = vsel %vm955, 1.0, 0.0
    %v1468 = vsel %vm956, 1.0, 0.0
    %v1469 = vsel %vm957, 1.0, 0.0
    %v1470 = vsel %vm958, 1.0, 0.0
    %v1471 = vsel %vm959, 1.0, 0.0
    %v1472 = vsel %vm960, 1.0, 0.0
    %v1473 = vsel %vm961, 1.0, 0.0
    %v1474 = vsel %vm962, 1.0, 0.0
    %v1475 = vsel %vm963, 1.0, 0.0
    %v1476 = vsel %vm964, 1.0, 0.0
    %v1477 = vsel %vm965, 1.0, 0.0
    %v1478 = vsel %vm966, 1.0, 0.0
    %v1479 = vsel %vm967, 1.0, 0.0
    %v1480 = vsel %vm968, 1.0, 0.0
    %v1481 = vsel %vm969, 1.0, 0.0
    %v1482 = vsel %vm970, 1.0, 0.0
    %v1483 = vsel %vm971, 1.0, 0.0
    %v1484 = vsel %vm972, 1.0, 0.0
    %v1485 = vsel %vm973, 1.0, 0.0
    %v1486 = vsel %vm974, 1.0, 0.0
    %v1487 = vsel %vm975, 1.0, 0.0
    %v1488 = vsel %vm976, 1.0, 0.0
    %v1489 = vsel %vm977, 1.0, 0.0
    %v1490 = vsel %vm978, 1.0, 0.0
    %v1491 = vsel %vm979, 1.0, 0.0
    %v1492 = vsel %vm980, 1.0, 0.0
    %v1493 = vsel %vm981, 1.0, 0.0
    %v1494 = vsel %vm982, 1.0, 0.0
    %v1495 = vsel %vm983, 1.0, 0.0
    %v1496 = vsel %vm984, 1.0, 0.0
    %v1497 = vsel %vm985, 1.0, 0.0
    %v1498 = vsel %vm986, 1.0, 0.0
    %v1499 = vsel %vm987, 1.0, 0.0
    %v1500 = vsel %vm988, 1.0, 0.0
    %v1501 = vsel %vm989, 1.0, 0.0
    %v1502 = vsel %vm990, 1.0, 0.0
    %v1503 = vsel %vm991, 1.0, 0.0
    %v1504 = vsel %vm992, 1.0, 0.0
    %v1505 = vsel %vm993, 1.0, 0.0
    %v1506 = vsel %vm994, 1.0, 0.0
    %v1507 = vsel %vm995, 1.0, 0.0
    %v1508 = vsel %vm996, 1.0, 0.0
    %v1509 = vsel %vm997, 1.0, 0.0
    %v1510 = vsel %vm998, 1.0, 0.0
    %v1511 = vsel %vm999, 1.0, 0.0
    %v1512 = vsel %vm1000, 1.0, 0.0
    %v1513 = vsel %vm1001, 1.0, 0.0
    %v1514 = vsel %vm1002, 1.0, 0.0
    %v1515 = vsel %vm1003, 1.0, 0.0
    %v1516 = vsel %vm1004, 1.0, 0.0
    %v1517 = vsel %vm1005, 1.0, 0.0
    %v1518 = vsel %vm1006, 1.0, 0.0
    %v1519 = vsel %vm1007, 1.0, 0.0
    %v1520 = vsel %vm1008, 1.0, 0.0
    %v1521 = vsel %vm1009, 1.0, 0.0
    %v1522 = vsel %vm1010, 1.0, 0.0
    %v1523 = vsel %vm1011, 1.0, 0.0
    %v1524 = vsel %vm1012, 1.0, 0.0
    %v1525 = vsel %vm1013, 1.0, 0.0
    %v1526 = vsel %vm1014, 1.0, 0.0
    %v1527 = vsel %vm1015, 1.0, 0.0
    %v1528 = vsel %vm1016, 1.0, 0.0
    %v1529 = vsel %vm1017, 1.0, 0.0
    %v1530 = vsel %vm1018, 1.0, 0.0
    %v1531 = vsel %vm1019, 1.0, 0.0
    %v1532 = vsel %vm1020, 1.0, 0.0
    %v1533 = vsel %vm1021, 1.0, 0.0
    %v1534 = vsel %vm1022, 1.0, 0.0
    %v1535 = vsel %vm1023, 1.0, 0.0
    %v1536 = vsel %vm1024, 1.0, 0.0
    %v1537 = vsel %vm1025, 1.0, 0.0
    %v1538 = vsel %vm1026, 1.0, 0.0
    %v1539 = vsel %vm1027, 1.0, 0.0
    %v1540 = vsel %vm1028, 1.0, 0.0
    %v1541 = vsel %vm1029, 1.0, 0.0
    %v1542 = vsel %vm1030, 1.0, 0.0
    %v1543 = vsel %vm1031, 1.0, 0.0
    %v1544 = vsel %vm1032, 1.0, 0.0
    %v1545 = vsel %vm1033, 1.0, 0.0
    %v1546 = vsel %vm1034, 1.0, 0.0
    %v1547 = vsel %vm1035, 1.0, 0.0
    %v1548 = vsel %vm1036, 1.0, 0.0
    %v1549 = vsel %vm1037, 1.0, 0.0
    %v1550 = vsel %vm1038, 1.0, 0.0
    %v1551 = vsel %vm1039, 1.0, 0.0
    %v1552 = vsel %vm1040, 1.0, 0.0
    %v1553 = vsel %vm1041, 1.0, 0.0
    %v1554 = vsel %vm1042, 1.0, 0.0
    %v1555 = vsel %vm1043, 1.0, 0.0
    %v1556 = vsel %vm1044, 1.0, 0.0
    %v1557 = vsel %vm1045, 1.0, 0.0
    %v1558 = vsel %vm1046, 1.0, 0.0
    %v1559 = vsel %vm1047, 1.0, 0.0
    %v1560 = vsel %vm1048, 1.0, 0.0
    %v1561 = vsel %vm1049, 1.0, 0.0
    %v1562 = vsel %vm1050, 1.0, 0.0
    %v1563 = vsel %vm1051, 1.0, 0.0
    %v1564 = vsel %vm1052, 1.0, 0.0
    %v1565 = vsel %vm1053, 1.0, 0.0
    %v1566 = vsel %vm1054, 1.0, 0.0
    %v1567 = vsel %vm1055, 1.0, 0.0
    %v1568 = vsel %vm1056, 1.0, 0.0
    %v1569 = vsel %vm1057, 1.0, 0.0
    %v1570 = vsel %vm1058, 1.0, 0.0
    %v1571 = vsel %vm1059, 1.0, 0.0
    %v1572 = vsel %vm1060, 1.0, 0.0
    %v1573 = vsel %vm1061, 1.0, 0.0
    %v1574 = vsel %vm1062, 1.0, 0.0
    %v1575 = vsel %vm1063, 1.0, 0.0
    %v1576 = vsel %vm1064, 1.0, 0.0
    %v1577 = vsel %vm1065, 1.0, 0.0
    %v1578 = vsel %vm1066, 1.0, 0.0
    %v1579 = vsel %vm1067, 1.0, 0.0
    %v1580 = vsel %vm1068, 1.0, 0.0
    %v1581 = vsel %vm1069, 1.0, 0.0
    %v1582 = vsel %vm1070, 1.0, 0.0
    %v1583 = vsel %vm1071, 1.0, 0.0
    %v1584 = vsel %vm1072, 1.0, 0.0
    %v1585 = vsel %vm1073, 1.0, 0.0
    %v1586 = vsel %vm1074, 1.0, 0.0
    %v1587 = vsel %vm1075, 1.0, 0.0
    %v1588 = vsel %vm1076, 1.0, 0.0
    %v1589 = vsel %vm1077, 1.0, 0.0
    %v1590 = vsel %vm1078, 1.0, 0.0
    %v1591 = vsel %vm1079, 1.0, 0.0
    %v1592 = vsel %vm1080, 1.0, 0.0
    %v1593 = vsel %vm1081, 1.0, 0.0
    %v1594 = vsel %vm1082, 1.0, 0.0
    %v1595 = vsel %vm1083, 1.0, 0.0
    %v1596 = vsel %vm1084, 1.0, 0.0
    %v1597 = vsel %vm1085, 1.0, 0.0
    %v1598 = vsel %vm1086, 1.0, 0.0
    %v1599 = vsel %vm1087, 1.0, 0.0
    %v1600 = vsel %vm1088, 1.0, 0.0
    %v1601 = vsel %vm1089, 1.0, 0.0
    %v1602 = vsel %vm1090, 1.0, 0.0
    %v1603 = vsel %vm1091, 1.0, 0.0
    %v1604 = vsel %vm1092, 1.0, 0.0
    %v1605 = vsel %vm1093, 1.0, 0.0
    %v1606 = vsel %vm1094, 1.0, 0.0
    %v1607 = vsel %vm1095, 1.0, 0.0
    %v1608 = vsel %vm1096, 1.0, 0.0
    %v1609 = vsel %vm1097, 1.0, 0.0
    %v1610 = vsel %vm1098, 1.0, 0.0
    %v1611 = vsel %vm1099, 1.0, 0.0
    %v1612 = vsel %vm1100, 1.0, 0.0
    %v1613 = vsel %vm1101, 1.0, 0.0
    %v1614 = vsel %vm1102, 1.0, 0.0
    %v1615 = vsel %vm1103, 1.0, 0.0
    %v1616 = vsel %vm1104, 1.0, 0.0
    %v1617 = vsel %vm1105, 1.0, 0.0
    %v1618 = vsel %vm1106, 1.0, 0.0
    %v1619 = vsel %vm1107, 1.0, 0.0
    %v1620 = vsel %vm1108, 1.0, 0.0
    %v1621 = vsel %vm1109, 1.0, 0.0
    %v1622 = vsel %vm1110, 1.0, 0.0
    %v1623 = vsel %vm1111, 1.0, 0.0
    %v1624 = vsel %vm1112, 1.0, 0.0
    %v1625 = vsel %vm1113, 1.0, 0.0
    %v1626 = vsel %vm1114, 1.0, 0.0
    %v1627 = vsel %vm1115, 1.0, 0.0
    %v1628 = vsel %vm1116, 1.0, 0.0
    %v1629 = vsel %vm1117, 1.0, 0.0
    %v1630 = vsel %vm1118, 1.0, 0.0
    %v1631 = vsel %vm1119, 1.0, 0.0
    %v1632 = vsel %vm1120, 1.0, 0.0
    %v1633 = vsel %vm1121, 1.0, 0.0
    %v1634 = vsel %vm1122, 1.0, 0.0
    %v1635 = vsel %vm1123, 1.0, 0.0
    %v1636 = vsel %vm1124, 1.0, 0.0
    %v1637 = vsel %vm1125, 1.0, 0.0
    %v1638 = vsel %vm1126, 1.0, 0.0
    %v1639 = vsel %vm1127, 1.0, 0.0
    %v1640 = vsel %vm1128, 1.0, 0.0
    %v1641 = vsel %vm1129, 1.0, 0.0
    %v1642 = vsel %vm1130, 1.0, 0.0
    %v1643 = vsel %vm1131, 1.0, 0.0
    %v1644 = vsel %vm1132, 1.0, 0.0
    %v1645 = vsel %vm1133, 1.0, 0.0
    %v1646 = vsel %vm1134, 1.0, 0.0
    %v1647 = vsel %vm1135, 1.0, 0.0
    %v1648 = vsel %vm1136, 1.0, 0.0
    %v1649 = vsel %vm1137, 1.0, 0.0
    %v1650 = vsel %vm1138, 1.0, 0.0
    %v1651 = vsel %vm1139, 1.0, 0.0
    %v1652 = vsel %vm1140, 1.0, 0.0
    %v1653 = vsel %vm1141, 1.0, 0.0
    %v1654 = vsel %vm1142, 1.0, 0.0
    %v1655 = vsel %vm1143, 1.0, 0.0
    %v1656 = vsel %vm1144, 1.0, 0.0
    %v1657 = vsel %vm1145, 1.0, 0.0
    %v1658 = vsel %vm1146, 1.0, 0.0
    %v1659 = vsel %vm1147, 1.0, 0.0
    %v1660 = vsel %vm1148, 1.0, 0.0
    %v1661 = vsel %vm1149, 1.0, 0.0
    %v1662 = vsel %vm1150, 1.0, 0.0
    %v1663 = vsel %vm1151, 1.0, 0.0
    %v1664 = vsel %vm1152, 1.0, 0.0
    %v1665 = vsel %vm1153, 1.0, 0.0
    %v1666 = vsel %vm1154, 1.0, 0.0
    %v1667 = vsel %vm1155, 1.0, 0.0
    %v1668 = vsel %vm1156, 1.0, 0.0
    %v1669 = vsel %vm1157, 1.0, 0.0
    %v1670 = vsel %vm1158, 1.0, 0.0
    %v1671 = vsel %vm1159, 1.0, 0.0
    %v1672 = vpack.c.bf16 %v1192, %v1160
    %v1673 = vpack.c.bf16 %v1193, %v1161
    %v1674 = vpack.c.bf16 %v1194, %v1162
    %v1675 = vpack.c.bf16 %v1195, %v1163
    %v1676 = vpack.c.bf16 %v1196, %v1164
    %v1677 = vpack.c.bf16 %v1197, %v1165
    %v1678 = vpack.c.bf16 %v1198, %v1166
    %v1679 = vpack.c.bf16 %v1199, %v1167
    %v1680 = vpack.c.bf16 %v1200, %v1168
    %v1681 = vpack.c.bf16 %v1201, %v1169
    %v1682 = vpack.c.bf16 %v1202, %v1170
    %v1683 = vpack.c.bf16 %v1203, %v1171
    %v1684 = vpack.c.bf16 %v1204, %v1172
    %v1685 = vpack.c.bf16 %v1205, %v1173
    %v1686 = vpack.c.bf16 %v1206, %v1174
    %v1687 = vpack.c.bf16 %v1207, %v1175
    %v1688 = vpack.c.bf16 %v1208, %v1176
    %v1689 = vpack.c.bf16 %v1209, %v1177
    %v1690 = vpack.c.bf16 %v1210, %v1178
    %v1691 = vpack.c.bf16 %v1211, %v1179
    %v1692 = vpack.c.bf16 %v1212, %v1180
    %v1693 = vpack.c.bf16 %v1213, %v1181
    %v1694 = vpack.c.bf16 %v1214, %v1182
    %v1695 = vpack.c.bf16 %v1215, %v1183
    %v1696 = vpack.c.bf16 %v1216, %v1184
    %v1697 = vpack.c.bf16 %v1217, %v1185
    %v1698 = vpack.c.bf16 %v1218, %v1186
    %v1699 = vpack.c.bf16 %v1219, %v1187
    %v1700 = vpack.c.bf16 %v1220, %v1188
    %v1701 = vpack.c.bf16 %v1221, %v1189
    %v1702 = vpack.c.bf16 %v1222, %v1190
    %v1703 = vpack.c.bf16 %v1223, %v1191
    %v1704 = vpack.c.bf16 %v1256, %v1224
    %v1705 = vpack.c.bf16 %v1257, %v1225
    %v1706 = vpack.c.bf16 %v1258, %v1226
    %v1707 = vpack.c.bf16 %v1259, %v1227
    %v1708 = vpack.c.bf16 %v1260, %v1228
    %v1709 = vpack.c.bf16 %v1261, %v1229
    %v1710 = vpack.c.bf16 %v1262, %v1230
    %v1711 = vpack.c.bf16 %v1263, %v1231
    %v1712 = vpack.c.bf16 %v1264, %v1232
    %v1713 = vpack.c.bf16 %v1265, %v1233
    %v1714 = vpack.c.bf16 %v1266, %v1234
    %v1715 = vpack.c.bf16 %v1267, %v1235
    %v1716 = vpack.c.bf16 %v1268, %v1236
    %v1717 = vpack.c.bf16 %v1269, %v1237
    %v1718 = vpack.c.bf16 %v1270, %v1238
    %v1719 = vpack.c.bf16 %v1271, %v1239
    %v1720 = vpack.c.bf16 %v1272, %v1240
    %v1721 = vpack.c.bf16 %v1273, %v1241
    %v1722 = vpack.c.bf16 %v1274, %v1242
    %v1723 = vpack.c.bf16 %v1275, %v1243
    %v1724 = vpack.c.bf16 %v1276, %v1244
    %v1725 = vpack.c.bf16 %v1277, %v1245
    %v1726 = vpack.c.bf16 %v1278, %v1246
    %v1727 = vpack.c.bf16 %v1279, %v1247
    %v1728 = vpack.c.bf16 %v1280, %v1248
    %v1729 = vpack.c.bf16 %v1281, %v1249
    %v1730 = vpack.c.bf16 %v1282, %v1250
    %v1731 = vpack.c.bf16 %v1283, %v1251
    %v1732 = vpack.c.bf16 %v1284, %v1252
    %v1733 = vpack.c.bf16 %v1285, %v1253
    %v1734 = vpack.c.bf16 %v1286, %v1254
    %v1735 = vpack.c.bf16 %v1287, %v1255
    %v1736 = vpack.c.bf16 %v1320, %v1288
    %v1737 = vpack.c.bf16 %v1321, %v1289
    %v1738 = vpack.c.bf16 %v1322, %v1290
    %v1739 = vpack.c.bf16 %v1323, %v1291
    %v1740 = vpack.c.bf16 %v1324, %v1292
    %v1741 = vpack.c.bf16 %v1325, %v1293
    %v1742 = vpack.c.bf16 %v1326, %v1294
    %v1743 = vpack.c.bf16 %v1327, %v1295
    %v1744 = vpack.c.bf16 %v1328, %v1296
    %v1745 = vpack.c.bf16 %v1329, %v1297
    %v1746 = vpack.c.bf16 %v1330, %v1298
    %v1747 = vpack.c.bf16 %v1331, %v1299
    %v1748 = vpack.c.bf16 %v1332, %v1300
    %v1749 = vpack.c.bf16 %v1333, %v1301
    %v1750 = vpack.c.bf16 %v1334, %v1302
    %v1751 = vpack.c.bf16 %v1335, %v1303
    %v1752 = vpack.c.bf16 %v1336, %v1304
    %v1753 = vpack.c.bf16 %v1337, %v1305
    %v1754 = vpack.c.bf16 %v1338, %v1306
    %v1755 = vpack.c.bf16 %v1339, %v1307
    %v1756 = vpack.c.bf16 %v1340, %v1308
    %v1757 = vpack.c.bf16 %v1341, %v1309
    %v1758 = vpack.c.bf16 %v1342, %v1310
    %v1759 = vpack.c.bf16 %v1343, %v1311
    %v1760 = vpack.c.bf16 %v1344, %v1312
    %v1761 = vpack.c.bf16 %v1345, %v1313
    %v1762 = vpack.c.bf16 %v1346, %v1314
    %v1763 = vpack.c.bf16 %v1347, %v1315
    %v1764 = vpack.c.bf16 %v1348, %v1316
    %v1765 = vpack.c.bf16 %v1349, %v1317
    %v1766 = vpack.c.bf16 %v1350, %v1318
    %v1767 = vpack.c.bf16 %v1351, %v1319
    %v1768 = vpack.c.bf16 %v1384, %v1352
    %v1769 = vpack.c.bf16 %v1385, %v1353
    %v1770 = vpack.c.bf16 %v1386, %v1354
    %v1771 = vpack.c.bf16 %v1387, %v1355
    %v1772 = vpack.c.bf16 %v1388, %v1356
    %v1773 = vpack.c.bf16 %v1389, %v1357
    %v1774 = vpack.c.bf16 %v1390, %v1358
    %v1775 = vpack.c.bf16 %v1391, %v1359
    %v1776 = vpack.c.bf16 %v1392, %v1360
    %v1777 = vpack.c.bf16 %v1393, %v1361
    %v1778 = vpack.c.bf16 %v1394, %v1362
    %v1779 = vpack.c.bf16 %v1395, %v1363
    %v1780 = vpack.c.bf16 %v1396, %v1364
    %v1781 = vpack.c.bf16 %v1397, %v1365
    %v1782 = vpack.c.bf16 %v1398, %v1366
    %v1783 = vpack.c.bf16 %v1399, %v1367
    %v1784 = vpack.c.bf16 %v1400, %v1368
    %v1785 = vpack.c.bf16 %v1401, %v1369
    %v1786 = vpack.c.bf16 %v1402, %v1370
    %v1787 = vpack.c.bf16 %v1403, %v1371
    %v1788 = vpack.c.bf16 %v1404, %v1372
    %v1789 = vpack.c.bf16 %v1405, %v1373
    %v1790 = vpack.c.bf16 %v1406, %v1374
    %v1791 = vpack.c.bf16 %v1407, %v1375
    %v1792 = vpack.c.bf16 %v1408, %v1376
    %v1793 = vpack.c.bf16 %v1409, %v1377
    %v1794 = vpack.c.bf16 %v1410, %v1378
    %v1795 = vpack.c.bf16 %v1411, %v1379
    %v1796 = vpack.c.bf16 %v1412, %v1380
    %v1797 = vpack.c.bf16 %v1413, %v1381
    %v1798 = vpack.c.bf16 %v1414, %v1382
    %v1799 = vpack.c.bf16 %v1415, %v1383
    %v1800 = vpack.c.bf16 %v1448, %v1416
    %v1801 = vpack.c.bf16 %v1449, %v1417
    %v1802 = vpack.c.bf16 %v1450, %v1418
    %v1803 = vpack.c.bf16 %v1451, %v1419
    %v1804 = vpack.c.bf16 %v1452, %v1420
    %v1805 = vpack.c.bf16 %v1453, %v1421
    %v1806 = vpack.c.bf16 %v1454, %v1422
    %v1807 = vpack.c.bf16 %v1455, %v1423
    %v1808 = vpack.c.bf16 %v1456, %v1424
    %v1809 = vpack.c.bf16 %v1457, %v1425
    %v1810 = vpack.c.bf16 %v1458, %v1426
    %v1811 = vpack.c.bf16 %v1459, %v1427
    %v1812 = vpack.c.bf16 %v1460, %v1428
    %v1813 = vpack.c.bf16 %v1461, %v1429
    %v1814 = vpack.c.bf16 %v1462, %v1430
    %v1815 = vpack.c.bf16 %v1463, %v1431
    %v1816 = vpack.c.bf16 %v1464, %v1432
    %v1817 = vpack.c.bf16 %v1465, %v1433
    %v1818 = vpack.c.bf16 %v1466, %v1434
    %v1819 = vpack.c.bf16 %v1467, %v1435
    %v1820 = vpack.c.bf16 %v1468, %v1436
    %v1821 = vpack.c.bf16 %v1469, %v1437
    %v1822 = vpack.c.bf16 %v1470, %v1438
    %v1823 = vpack.c.bf16 %v1471, %v1439
    %v1824 = vpack.c.bf16 %v1472, %v1440
    %v1825 = vpack.c.bf16 %v1473, %v1441
    %v1826 = vpack.c.bf16 %v1474, %v1442
    %v1827 = vpack.c.bf16 %v1475, %v1443
    %v1828 = vpack.c.bf16 %v1476, %v1444
    %v1829 = vpack.c.bf16 %v1477, %v1445
    %v1830 = vpack.c.bf16 %v1478, %v1446
    %v1831 = vpack.c.bf16 %v1479, %v1447
    %v1832 = vpack.c.bf16 %v1512, %v1480
    %v1833 = vpack.c.bf16 %v1513, %v1481
    %v1834 = vpack.c.bf16 %v1514, %v1482
    %v1835 = vpack.c.bf16 %v1515, %v1483
    %v1836 = vpack.c.bf16 %v1516, %v1484
    %v1837 = vpack.c.bf16 %v1517, %v1485
    %v1838 = vpack.c.bf16 %v1518, %v1486
    %v1839 = vpack.c.bf16 %v1519, %v1487
    %v1840 = vpack.c.bf16 %v1520, %v1488
    %v1841 = vpack.c.bf16 %v1521, %v1489
    %v1842 = vpack.c.bf16 %v1522, %v1490
    %v1843 = vpack.c.bf16 %v1523, %v1491
    %v1844 = vpack.c.bf16 %v1524, %v1492
    %v1845 = vpack.c.bf16 %v1525, %v1493
    %v1846 = vpack.c.bf16 %v1526, %v1494
    %v1847 = vpack.c.bf16 %v1527, %v1495
    %v1848 = vpack.c.bf16 %v1528, %v1496
    %v1849 = vpack.c.bf16 %v1529, %v1497
    %v1850 = vpack.c.bf16 %v1530, %v1498
    %v1851 = vpack.c.bf16 %v1531, %v1499
    %v1852 = vpack.c.bf16 %v1532, %v1500
    %v1853 = vpack.c.bf16 %v1533, %v1501
    %v1854 = vpack.c.bf16 %v1534, %v1502
    %v1855 = vpack.c.bf16 %v1535, %v1503
    %v1856 = vpack.c.bf16 %v1536, %v1504
    %v1857 = vpack.c.bf16 %v1537, %v1505
    %v1858 = vpack.c.bf16 %v1538, %v1506
    %v1859 = vpack.c.bf16 %v1539, %v1507
    %v1860 = vpack.c.bf16 %v1540, %v1508
    %v1861 = vpack.c.bf16 %v1541, %v1509
    %v1862 = vpack.c.bf16 %v1542, %v1510
    %v1863 = vpack.c.bf16 %v1543, %v1511
    %v1864 = vpack.c.bf16 %v1576, %v1544
    %v1865 = vpack.c.bf16 %v1577, %v1545
    %v1866 = vpack.c.bf16 %v1578, %v1546
    %v1867 = vpack.c.bf16 %v1579, %v1547
    %v1868 = vpack.c.bf16 %v1580, %v1548
    %v1869 = vpack.c.bf16 %v1581, %v1549
    %v1870 = vpack.c.bf16 %v1582, %v1550
    %v1871 = vpack.c.bf16 %v1583, %v1551
    %v1872 = vpack.c.bf16 %v1584, %v1552
    %v1873 = vpack.c.bf16 %v1585, %v1553
    %v1874 = vpack.c.bf16 %v1586, %v1554
    %v1875 = vpack.c.bf16 %v1587, %v1555
    %v1876 = vpack.c.bf16 %v1588, %v1556
    %v1877 = vpack.c.bf16 %v1589, %v1557
    %v1878 = vpack.c.bf16 %v1590, %v1558
    %v1879 = vpack.c.bf16 %v1591, %v1559
    %v1880 = vpack.c.bf16 %v1592, %v1560
    %v1881 = vpack.c.bf16 %v1593, %v1561
    %v1882 = vpack.c.bf16 %v1594, %v1562
    %v1883 = vpack.c.bf16 %v1595, %v1563
    %v1884 = vpack.c.bf16 %v1596, %v1564
    %v1885 = vpack.c.bf16 %v1597, %v1565
    %v1886 = vpack.c.bf16 %v1598, %v1566
    %v1887 = vpack.c.bf16 %v1599, %v1567
    %v1888 = vpack.c.bf16 %v1600, %v1568
    %v1889 = vpack.c.bf16 %v1601, %v1569
    %v1890 = vpack.c.bf16 %v1602, %v1570
    %v1891 = vpack.c.bf16 %v1603, %v1571
    %v1892 = vpack.c.bf16 %v1604, %v1572
    %v1893 = vpack.c.bf16 %v1605, %v1573
    %v1894 = vpack.c.bf16 %v1606, %v1574
    %v1895 = vpack.c.bf16 %v1607, %v1575
    %v1896 = vpack.c.bf16 %v1640, %v1608
    %v1897 = vpack.c.bf16 %v1641, %v1609
    %v1898 = vpack.c.bf16 %v1642, %v1610
    %v1899 = vpack.c.bf16 %v1643, %v1611
    %v1900 = vpack.c.bf16 %v1644, %v1612
    %v1901 = vpack.c.bf16 %v1645, %v1613
    %v1902 = vpack.c.bf16 %v1646, %v1614
    %v1903 = vpack.c.bf16 %v1647, %v1615
    %v1904 = vpack.c.bf16 %v1648, %v1616
    %v1905 = vpack.c.bf16 %v1649, %v1617
    %v1906 = vpack.c.bf16 %v1650, %v1618
    %v1907 = vpack.c.bf16 %v1651, %v1619
    %v1908 = vpack.c.bf16 %v1652, %v1620
    %v1909 = vpack.c.bf16 %v1653, %v1621
    %v1910 = vpack.c.bf16 %v1654, %v1622
    %v1911 = vpack.c.bf16 %v1655, %v1623
    %v1912 = vpack.c.bf16 %v1656, %v1624
    %v1913 = vpack.c.bf16 %v1657, %v1625
    %v1914 = vpack.c.bf16 %v1658, %v1626
    %v1915 = vpack.c.bf16 %v1659, %v1627
    %v1916 = vpack.c.bf16 %v1660, %v1628
    %v1917 = vpack.c.bf16 %v1661, %v1629
    %v1918 = vpack.c.bf16 %v1662, %v1630
    %v1919 = vpack.c.bf16 %v1663, %v1631
    %v1920 = vpack.c.bf16 %v1664, %v1632
    %v1921 = vpack.c.bf16 %v1665, %v1633
    %v1922 = vpack.c.bf16 %v1666, %v1634
    %v1923 = vpack.c.bf16 %v1667, %v1635
    %v1924 = vpack.c.bf16 %v1668, %v1636
    %v1925 = vpack.c.bf16 %v1669, %v1637
    %v1926 = vpack.c.bf16 %v1670, %v1638
    %v1927 = vpack.c.bf16 %v1671, %v1639
    %v1928 = vpack.c.bf16 %v580, %v580
    %v1929 = vunpack.c.l.bf16 %v1928
    %v1930 = vsub.f32 %v580, %v1929
    %v1931 = vpack.c.bf16 %v1930, %v1930
    %1932 = vmatprep.subr.bf16.mxu0 %v1673
    %1933 = vmatpush1.bf16.msra.mxu0 %v1672
    %1934 = vmatprep.subr.bf16.mxu0 %v1705
    %1935 = vmatpush1.bf16.msra.mxu0 %v1704
    %1936 = vmatprep.subr.bf16.mxu0 %v1737
    %1937 = vmatpush1.bf16.msra.mxu0 %v1736
    %1938 = vmatprep.subr.bf16.mxu0 %v1769
    %1939 = vmatpush1.bf16.msra.mxu0 %v1768
    %1940 = vmatprep.subr.bf16.mxu0 %v1801
    %1941 = vmatpush1.bf16.msra.mxu0 %v1800
    %1942 = vmatprep.subr.bf16.mxu0 %v1833
    %1943 = vmatpush1.bf16.msra.mxu0 %v1832
    %1944 = vmatprep.subr.bf16.mxu0 %v1865
    %1945 = vmatpush1.bf16.msra.mxu0 %v1864
    %1946 = vmatprep.subr.bf16.mxu0 %v1897
    %1947 = vmatpush1.bf16.msra.mxu0 %v1896
    %1948 = vmatprep.subr.bf16.mxu0 0
    %1949 = vmatpush1.bf16.msra.mxu0 0
    %1950 = vmatprep.subr.bf16.mxu0 0
    %1951 = vmatpush1.bf16.msra.mxu0 0
    %1952 = vmatprep.subr.bf16.mxu0 0
    %1953 = vmatpush1.bf16.msra.mxu0 0
    %1954 = vmatprep.subr.bf16.mxu0 0
    %1955 = vmatpush1.bf16.msra.mxu0 0
    %1956 = vmatprep.subr.bf16.mxu0 0
    %1957 = vmatpush1.bf16.msra.mxu0 0
    %1958 = vmatprep.subr.bf16.mxu0 0
    %1959 = vmatpush1.bf16.msra.mxu0 0
    %1960 = vmatprep.subr.bf16.mxu0 0
    %1961 = vmatpush1.bf16.msra.mxu0 0
    %1962 = vmatprep.subr.bf16.mxu0 0
    %1963 = vmatpush1.bf16.msra.mxu0 0
    %1964 = vmatprep.mubr.bf16.mxu0 0
    %1965 = vmatmul.mubr.bf16.gmra.mrb[0].mxu0 %v1931
    %v1966 = vpop.f32.mrb[0].mxu0
    %v1967 = vadd.f32 0.0, %v1966
    %v1968 = vpop.f32.mrb[0].mxu0
    %v1969 = vadd.f32 0.0, %v1968
    %v1970 = vpop.f32.mrb[0].mxu0
    %v1971 = vpop.f32.mrb[0].mxu0
    %1972 = vdwg.mxu0
    %1973 = vmatprep.subr.bf16.mxu0 %v1675
    %1974 = vmatpush1.bf16.msra.mxu0 %v1674
    %1975 = vmatprep.subr.bf16.mxu0 %v1707
    %1976 = vmatpush1.bf16.msra.mxu0 %v1706
    %1977 = vmatprep.subr.bf16.mxu0 %v1739
    %1978 = vmatpush1.bf16.msra.mxu0 %v1738
    %1979 = vmatprep.subr.bf16.mxu0 %v1771
    %1980 = vmatpush1.bf16.msra.mxu0 %v1770
    %1981 = vmatprep.subr.bf16.mxu0 %v1803
    %1982 = vmatpush1.bf16.msra.mxu0 %v1802
    %1983 = vmatprep.subr.bf16.mxu0 %v1835
    %1984 = vmatpush1.bf16.msra.mxu0 %v1834
    %1985 = vmatprep.subr.bf16.mxu0 %v1867
    %1986 = vmatpush1.bf16.msra.mxu0 %v1866
    %1987 = vmatprep.subr.bf16.mxu0 %v1899
    %1988 = vmatpush1.bf16.msra.mxu0 %v1898
    %1989 = vmatprep.subr.bf16.mxu0 0
    %1990 = vmatpush1.bf16.msra.mxu0 0
    %1991 = vmatprep.subr.bf16.mxu0 0
    %1992 = vmatpush1.bf16.msra.mxu0 0
    %1993 = vmatprep.subr.bf16.mxu0 0
    %1994 = vmatpush1.bf16.msra.mxu0 0
    %1995 = vmatprep.subr.bf16.mxu0 0
    %1996 = vmatpush1.bf16.msra.mxu0 0
    %1997 = vmatprep.subr.bf16.mxu0 0
    %1998 = vmatpush1.bf16.msra.mxu0 0
    %1999 = vmatprep.subr.bf16.mxu0 0
    %2000 = vmatpush1.bf16.msra.mxu0 0
    %2001 = vmatprep.subr.bf16.mxu0 0
    %2002 = vmatpush1.bf16.msra.mxu0 0
    %2003 = vmatprep.subr.bf16.mxu0 0
    %2004 = vmatpush1.bf16.msra.mxu0 0
    %2005 = vmatprep.mubr.bf16.mxu0 0
    %2006 = vmatmul.mubr.bf16.gmra.mrb[0].mxu0 %v1931
    %v2007 = vpop.f32.mrb[0].mxu0
    %v2008 = vadd.f32 0.0, %v2007
    %v2009 = vpop.f32.mrb[0].mxu0
    %v2010 = vadd.f32 0.0, %v2009
    %v2011 = vpop.f32.mrb[0].mxu0
    %v2012 = vpop.f32.mrb[0].mxu0
    %2013 = vdwg.mxu0
    %2014 = vmatprep.subr.bf16.mxu0 %v1677
    %2015 = vmatpush1.bf16.msra.mxu0 %v1676
    %2016 = vmatprep.subr.bf16.mxu0 %v1709
    %2017 = vmatpush1.bf16.msra.mxu0 %v1708
    %2018 = vmatprep.subr.bf16.mxu0 %v1741
    %2019 = vmatpush1.bf16.msra.mxu0 %v1740
    %2020 = vmatprep.subr.bf16.mxu0 %v1773
    %2021 = vmatpush1.bf16.msra.mxu0 %v1772
    %2022 = vmatprep.subr.bf16.mxu0 %v1805
    %2023 = vmatpush1.bf16.msra.mxu0 %v1804
    %2024 = vmatprep.subr.bf16.mxu0 %v1837
    %2025 = vmatpush1.bf16.msra.mxu0 %v1836
    %2026 = vmatprep.subr.bf16.mxu0 %v1869
    %2027 = vmatpush1.bf16.msra.mxu0 %v1868
    %2028 = vmatprep.subr.bf16.mxu0 %v1901
    %2029 = vmatpush1.bf16.msra.mxu0 %v1900
    %2030 = vmatprep.subr.bf16.mxu0 0
    %2031 = vmatpush1.bf16.msra.mxu0 0
    %2032 = vmatprep.subr.bf16.mxu0 0
    %2033 = vmatpush1.bf16.msra.mxu0 0
    %2034 = vmatprep.subr.bf16.mxu0 0
    %2035 = vmatpush1.bf16.msra.mxu0 0
    %2036 = vmatprep.subr.bf16.mxu0 0
    %2037 = vmatpush1.bf16.msra.mxu0 0
    %2038 = vmatprep.subr.bf16.mxu0 0
    %2039 = vmatpush1.bf16.msra.mxu0 0
    %2040 = vmatprep.subr.bf16.mxu0 0
    %2041 = vmatpush1.bf16.msra.mxu0 0
    %2042 = vmatprep.subr.bf16.mxu0 0
    %2043 = vmatpush1.bf16.msra.mxu0 0
    %2044 = vmatprep.subr.bf16.mxu0 0
    %2045 = vmatpush1.bf16.msra.mxu0 0
    %2046 = vmatprep.mubr.bf16.mxu0 0
    %2047 = vmatmul.mubr.bf16.gmra.mrb[0].mxu0 %v1931
    %v2048 = vpop.f32.mrb[0].mxu0
    %v2049 = vadd.f32 0.0, %v2048
    %v2050 = vpop.f32.mrb[0].mxu0
    %v2051 = vadd.f32 0.0, %v2050
    %v2052 = vpop.f32.mrb[0].mxu0
    %v2053 = vpop.f32.mrb[0].mxu0
    %2054 = vdwg.mxu0
    %2055 = vmatprep.subr.bf16.mxu0 %v1679
    %2056 = vmatpush1.bf16.msra.mxu0 %v1678
    %2057 = vmatprep.subr.bf16.mxu0 %v1711
    %2058 = vmatpush1.bf16.msra.mxu0 %v1710
    %2059 = vmatprep.subr.bf16.mxu0 %v1743
    %2060 = vmatpush1.bf16.msra.mxu0 %v1742
    %2061 = vmatprep.subr.bf16.mxu0 %v1775
    %2062 = vmatpush1.bf16.msra.mxu0 %v1774
    %2063 = vmatprep.subr.bf16.mxu0 %v1807
    %2064 = vmatpush1.bf16.msra.mxu0 %v1806
    %2065 = vmatprep.subr.bf16.mxu0 %v1839
    %2066 = vmatpush1.bf16.msra.mxu0 %v1838
    %2067 = vmatprep.subr.bf16.mxu0 %v1871
    %2068 = vmatpush1.bf16.msra.mxu0 %v1870
    %2069 = vmatprep.subr.bf16.mxu0 %v1903
    %2070 = vmatpush1.bf16.msra.mxu0 %v1902
    %2071 = vmatprep.subr.bf16.mxu0 0
    %2072 = vmatpush1.bf16.msra.mxu0 0
    %2073 = vmatprep.subr.bf16.mxu0 0
    %2074 = vmatpush1.bf16.msra.mxu0 0
    %2075 = vmatprep.subr.bf16.mxu0 0
    %2076 = vmatpush1.bf16.msra.mxu0 0
    %2077 = vmatprep.subr.bf16.mxu0 0
    %2078 = vmatpush1.bf16.msra.mxu0 0
    %2079 = vmatprep.subr.bf16.mxu0 0
    %2080 = vmatpush1.bf16.msra.mxu0 0
    %2081 = vmatprep.subr.bf16.mxu0 0
    %2082 = vmatpush1.bf16.msra.mxu0 0
    %2083 = vmatprep.subr.bf16.mxu0 0
    %2084 = vmatpush1.bf16.msra.mxu0 0
    %2085 = vmatprep.subr.bf16.mxu0 0
    %2086 = vmatpush1.bf16.msra.mxu0 0
    %2087 = vmatprep.mubr.bf16.mxu0 0
    %2088 = vmatmul.mubr.bf16.gmra.mrb[0].mxu0 %v1931
    %v2089 = vpop.f32.mrb[0].mxu0
    %v2090 = vadd.f32 0.0, %v2089
    %v2091 = vpop.f32.mrb[0].mxu0
    %v2092 = vadd.f32 0.0, %v2091
    %v2093 = vpop.f32.mrb[0].mxu0
    %v2094 = vpop.f32.mrb[0].mxu0
    %2095 = vdwg.mxu0
    %2096 = vmatprep.subr.bf16.mxu0 %v1681
    %2097 = vmatpush1.bf16.msra.mxu0 %v1680
    %2098 = vmatprep.subr.bf16.mxu0 %v1713
    %2099 = vmatpush1.bf16.msra.mxu0 %v1712
    %2100 = vmatprep.subr.bf16.mxu0 %v1745
    %2101 = vmatpush1.bf16.msra.mxu0 %v1744
    %2102 = vmatprep.subr.bf16.mxu0 %v1777
    %2103 = vmatpush1.bf16.msra.mxu0 %v1776
    %2104 = vmatprep.subr.bf16.mxu0 %v1809
    %2105 = vmatpush1.bf16.msra.mxu0 %v1808
    %2106 = vmatprep.subr.bf16.mxu0 %v1841
    %2107 = vmatpush1.bf16.msra.mxu0 %v1840
    %2108 = vmatprep.subr.bf16.mxu0 %v1873
    %2109 = vmatpush1.bf16.msra.mxu0 %v1872
    %2110 = vmatprep.subr.bf16.mxu0 %v1905
    %2111 = vmatpush1.bf16.msra.mxu0 %v1904
    %2112 = vmatprep.subr.bf16.mxu0 0
    %2113 = vmatpush1.bf16.msra.mxu0 0
    %2114 = vmatprep.subr.bf16.mxu0 0
    %2115 = vmatpush1.bf16.msra.mxu0 0
    %2116 = vmatprep.subr.bf16.mxu0 0
    %2117 = vmatpush1.bf16.msra.mxu0 0
    %2118 = vmatprep.subr.bf16.mxu0 0
    %2119 = vmatpush1.bf16.msra.mxu0 0
    %2120 = vmatprep.subr.bf16.mxu0 0
    %2121 = vmatpush1.bf16.msra.mxu0 0
    %2122 = vmatprep.subr.bf16.mxu0 0
    %2123 = vmatpush1.bf16.msra.mxu0 0
    %2124 = vmatprep.subr.bf16.mxu0 0
    %2125 = vmatpush1.bf16.msra.mxu0 0
    %2126 = vmatprep.subr.bf16.mxu0 0
    %2127 = vmatpush1.bf16.msra.mxu0 0
    %2128 = vmatprep.mubr.bf16.mxu0 0
    %2129 = vmatmul.mubr.bf16.gmra.mrb[0].mxu0 %v1931
    %v2130 = vpop.f32.mrb[0].mxu0
    %v2131 = vadd.f32 0.0, %v2130
    %v2132 = vpop.f32.mrb[0].mxu0
    %v2133 = vadd.f32 0.0, %v2132
    %v2134 = vpop.f32.mrb[0].mxu0
    %v2135 = vpop.f32.mrb[0].mxu0
    %2136 = vdwg.mxu0
    %2137 = vmatprep.subr.bf16.mxu0 %v1683
    %2138 = vmatpush1.bf16.msra.mxu0 %v1682
    %2139 = vmatprep.subr.bf16.mxu0 %v1715
    %2140 = vmatpush1.bf16.msra.mxu0 %v1714
    %2141 = vmatprep.subr.bf16.mxu0 %v1747
    %2142 = vmatpush1.bf16.msra.mxu0 %v1746
    %2143 = vmatprep.subr.bf16.mxu0 %v1779
    %2144 = vmatpush1.bf16.msra.mxu0 %v1778
    %2145 = vmatprep.subr.bf16.mxu0 %v1811
    %2146 = vmatpush1.bf16.msra.mxu0 %v1810
    %2147 = vmatprep.subr.bf16.mxu0 %v1843
    %2148 = vmatpush1.bf16.msra.mxu0 %v1842
    %2149 = vmatprep.subr.bf16.mxu0 %v1875
    %2150 = vmatpush1.bf16.msra.mxu0 %v1874
    %2151 = vmatprep.subr.bf16.mxu0 %v1907
    %2152 = vmatpush1.bf16.msra.mxu0 %v1906
    %2153 = vmatprep.subr.bf16.mxu0 0
    %2154 = vmatpush1.bf16.msra.mxu0 0
    %2155 = vmatprep.subr.bf16.mxu0 0
    %2156 = vmatpush1.bf16.msra.mxu0 0
    %2157 = vmatprep.subr.bf16.mxu0 0
    %2158 = vmatpush1.bf16.msra.mxu0 0
    %2159 = vmatprep.subr.bf16.mxu0 0
    %2160 = vmatpush1.bf16.msra.mxu0 0
    %2161 = vmatprep.subr.bf16.mxu0 0
    %2162 = vmatpush1.bf16.msra.mxu0 0
    %2163 = vmatprep.subr.bf16.mxu0 0
    %2164 = vmatpush1.bf16.msra.mxu0 0
    %2165 = vmatprep.subr.bf16.mxu0 0
    %2166 = vmatpush1.bf16.msra.mxu0 0
    %2167 = vmatprep.subr.bf16.mxu0 0
    %2168 = vmatpush1.bf16.msra.mxu0 0
    %2169 = vmatprep.mubr.bf16.mxu0 0
    %2170 = vmatmul.mubr.bf16.gmra.mrb[0].mxu0 %v1931
    %v2171 = vpop.f32.mrb[0].mxu0
    %v2172 = vadd.f32 0.0, %v2171
    %v2173 = vpop.f32.mrb[0].mxu0
    %v2174 = vadd.f32 0.0, %v2173
    %v2175 = vpop.f32.mrb[0].mxu0
    %v2176 = vpop.f32.mrb[0].mxu0
    %2177 = vdwg.mxu0
    %2178 = vmatprep.subr.bf16.mxu0 %v1685
    %2179 = vmatpush1.bf16.msra.mxu0 %v1684
    %2180 = vmatprep.subr.bf16.mxu0 %v1717
    %2181 = vmatpush1.bf16.msra.mxu0 %v1716
    %2182 = vmatprep.subr.bf16.mxu0 %v1749
    %2183 = vmatpush1.bf16.msra.mxu0 %v1748
    %2184 = vmatprep.subr.bf16.mxu0 %v1781
    %2185 = vmatpush1.bf16.msra.mxu0 %v1780
    %2186 = vmatprep.subr.bf16.mxu0 %v1813
    %2187 = vmatpush1.bf16.msra.mxu0 %v1812
    %2188 = vmatprep.subr.bf16.mxu0 %v1845
    %2189 = vmatpush1.bf16.msra.mxu0 %v1844
    %2190 = vmatprep.subr.bf16.mxu0 %v1877
    %2191 = vmatpush1.bf16.msra.mxu0 %v1876
    %2192 = vmatprep.subr.bf16.mxu0 %v1909
    %2193 = vmatpush1.bf16.msra.mxu0 %v1908
    %2194 = vmatprep.subr.bf16.mxu0 0
    %2195 = vmatpush1.bf16.msra.mxu0 0
    %2196 = vmatprep.subr.bf16.mxu0 0
    %2197 = vmatpush1.bf16.msra.mxu0 0
    %2198 = vmatprep.subr.bf16.mxu0 0
    %2199 = vmatpush1.bf16.msra.mxu0 0
    %2200 = vmatprep.subr.bf16.mxu0 0
    %2201 = vmatpush1.bf16.msra.mxu0 0
    %2202 = vmatprep.subr.bf16.mxu0 0
    %2203 = vmatpush1.bf16.msra.mxu0 0
    %2204 = vmatprep.subr.bf16.mxu0 0
    %2205 = vmatpush1.bf16.msra.mxu0 0
    %2206 = vmatprep.subr.bf16.mxu0 0
    %2207 = vmatpush1.bf16.msra.mxu0 0
    %2208 = vmatprep.subr.bf16.mxu0 0
    %2209 = vmatpush1.bf16.msra.mxu0 0
    %2210 = vmatprep.mubr.bf16.mxu0 0
    %2211 = vmatmul.mubr.bf16.gmra.mrb[0].mxu0 %v1931
    %v2212 = vpop.f32.mrb[0].mxu0
    %v2213 = vadd.f32 0.0, %v2212
    %v2214 = vpop.f32.mrb[0].mxu0
    %v2215 = vadd.f32 0.0, %v2214
    %v2216 = vpop.f32.mrb[0].mxu0
    %v2217 = vpop.f32.mrb[0].mxu0
    %2218 = vdwg.mxu0
    %2219 = vmatprep.subr.bf16.mxu0 %v1687
    %2220 = vmatpush1.bf16.msra.mxu0 %v1686
    %2221 = vmatprep.subr.bf16.mxu0 %v1719
    %2222 = vmatpush1.bf16.msra.mxu0 %v1718
    %2223 = vmatprep.subr.bf16.mxu0 %v1751
    %2224 = vmatpush1.bf16.msra.mxu0 %v1750
    %2225 = vmatprep.subr.bf16.mxu0 %v1783
    %2226 = vmatpush1.bf16.msra.mxu0 %v1782
    %2227 = vmatprep.subr.bf16.mxu0 %v1815
    %2228 = vmatpush1.bf16.msra.mxu0 %v1814
    %2229 = vmatprep.subr.bf16.mxu0 %v1847
    %2230 = vmatpush1.bf16.msra.mxu0 %v1846
    %2231 = vmatprep.subr.bf16.mxu0 %v1879
    %2232 = vmatpush1.bf16.msra.mxu0 %v1878
    %2233 = vmatprep.subr.bf16.mxu0 %v1911
    %2234 = vmatpush1.bf16.msra.mxu0 %v1910
    %2235 = vmatprep.subr.bf16.mxu0 0
    %2236 = vmatpush1.bf16.msra.mxu0 0
    %2237 = vmatprep.subr.bf16.mxu0 0
    %2238 = vmatpush1.bf16.msra.mxu0 0
    %2239 = vmatprep.subr.bf16.mxu0 0
    %2240 = vmatpush1.bf16.msra.mxu0 0
    %2241 = vmatprep.subr.bf16.mxu0 0
    %2242 = vmatpush1.bf16.msra.mxu0 0
    %2243 = vmatprep.subr.bf16.mxu0 0
    %2244 = vmatpush1.bf16.msra.mxu0 0
    %2245 = vmatprep.subr.bf16.mxu0 0
    %2246 = vmatpush1.bf16.msra.mxu0 0
    %2247 = vmatprep.subr.bf16.mxu0 0
    %2248 = vmatpush1.bf16.msra.mxu0 0
    %2249 = vmatprep.subr.bf16.mxu0 0
    %2250 = vmatpush1.bf16.msra.mxu0 0
    %2251 = vmatprep.mubr.bf16.mxu0 0
    %2252 = vmatmul.mubr.bf16.gmra.mrb[0].mxu0 %v1931
    %v2253 = vpop.f32.mrb[0].mxu0
    %v2254 = vadd.f32 0.0, %v2253
    %v2255 = vpop.f32.mrb[0].mxu0
    %v2256 = vadd.f32 0.0, %v2255
    %v2257 = vpop.f32.mrb[0].mxu0
    %v2258 = vpop.f32.mrb[0].mxu0
    %2259 = vdwg.mxu0
    %2260 = vmatprep.subr.bf16.mxu0 %v1689
    %2261 = vmatpush1.bf16.msra.mxu0 %v1688
    %2262 = vmatprep.subr.bf16.mxu0 %v1721
    %2263 = vmatpush1.bf16.msra.mxu0 %v1720
    %2264 = vmatprep.subr.bf16.mxu0 %v1753
    %2265 = vmatpush1.bf16.msra.mxu0 %v1752
    %2266 = vmatprep.subr.bf16.mxu0 %v1785
    %2267 = vmatpush1.bf16.msra.mxu0 %v1784
    %2268 = vmatprep.subr.bf16.mxu0 %v1817
    %2269 = vmatpush1.bf16.msra.mxu0 %v1816
    %2270 = vmatprep.subr.bf16.mxu0 %v1849
    %2271 = vmatpush1.bf16.msra.mxu0 %v1848
    %2272 = vmatprep.subr.bf16.mxu0 %v1881
    %2273 = vmatpush1.bf16.msra.mxu0 %v1880
    %2274 = vmatprep.subr.bf16.mxu0 %v1913
    %2275 = vmatpush1.bf16.msra.mxu0 %v1912
    %2276 = vmatprep.subr.bf16.mxu0 0
    %2277 = vmatpush1.bf16.msra.mxu0 0
    %2278 = vmatprep.subr.bf16.mxu0 0
    %2279 = vmatpush1.bf16.msra.mxu0 0
    %2280 = vmatprep.subr.bf16.mxu0 0
    %2281 = vmatpush1.bf16.msra.mxu0 0
    %2282 = vmatprep.subr.bf16.mxu0 0
    %2283 = vmatpush1.bf16.msra.mxu0 0
    %2284 = vmatprep.subr.bf16.mxu0 0
    %2285 = vmatpush1.bf16.msra.mxu0 0
    %2286 = vmatprep.subr.bf16.mxu0 0
    %2287 = vmatpush1.bf16.msra.mxu0 0
    %2288 = vmatprep.subr.bf16.mxu0 0
    %2289 = vmatpush1.bf16.msra.mxu0 0
    %2290 = vmatprep.subr.bf16.mxu0 0
    %2291 = vmatpush1.bf16.msra.mxu0 0
    %2292 = vmatprep.mubr.bf16.mxu0 0
    %2293 = vmatmul.mubr.bf16.gmra.mrb[0].mxu0 %v1931
    %v2294 = vpop.f32.mrb[0].mxu0
    %v2295 = vadd.f32 0.0, %v2294
    %v2296 = vpop.f32.mrb[0].mxu0
    %v2297 = vadd.f32 0.0, %v2296
    %v2298 = vpop.f32.mrb[0].mxu0
    %v2299 = vpop.f32.mrb[0].mxu0
    %2300 = vdwg.mxu0
    %2301 = vmatprep.subr.bf16.mxu0 %v1691
    %2302 = vmatpush1.bf16.msra.mxu0 %v1690
    %2303 = vmatprep.subr.bf16.mxu0 %v1723
    %2304 = vmatpush1.bf16.msra.mxu0 %v1722
    %2305 = vmatprep.subr.bf16.mxu0 %v1755
    %2306 = vmatpush1.bf16.msra.mxu0 %v1754
    %2307 = vmatprep.subr.bf16.mxu0 %v1787
    %2308 = vmatpush1.bf16.msra.mxu0 %v1786
    %2309 = vmatprep.subr.bf16.mxu0 %v1819
    %2310 = vmatpush1.bf16.msra.mxu0 %v1818
    %2311 = vmatprep.subr.bf16.mxu0 %v1851
    %2312 = vmatpush1.bf16.msra.mxu0 %v1850
    %2313 = vmatprep.subr.bf16.mxu0 %v1883
    %2314 = vmatpush1.bf16.msra.mxu0 %v1882
    %2315 = vmatprep.subr.bf16.mxu0 %v1915
    %2316 = vmatpush1.bf16.msra.mxu0 %v1914
    %2317 = vmatprep.subr.bf16.mxu0 0
    %2318 = vmatpush1.bf16.msra.mxu0 0
    %2319 = vmatprep.subr.bf16.mxu0 0
    %2320 = vmatpush1.bf16.msra.mxu0 0
    %2321 = vmatprep.subr.bf16.mxu0 0
    %2322 = vmatpush1.bf16.msra.mxu0 0
    %2323 = vmatprep.subr.bf16.mxu0 0
    %2324 = vmatpush1.bf16.msra.mxu0 0
    %2325 = vmatprep.subr.bf16.mxu0 0
    %2326 = vmatpush1.bf16.msra.mxu0 0
    %2327 = vmatprep.subr.bf16.mxu0 0
    %2328 = vmatpush1.bf16.msra.mxu0 0
    %2329 = vmatprep.subr.bf16.mxu0 0
    %2330 = vmatpush1.bf16.msra.mxu0 0
    %2331 = vmatprep.subr.bf16.mxu0 0
    %2332 = vmatpush1.bf16.msra.mxu0 0
    %2333 = vmatprep.mubr.bf16.mxu0 0
    %2334 = vmatmul.mubr.bf16.gmra.mrb[0].mxu0 %v1931
    %v2335 = vpop.f32.mrb[0].mxu0
    %v2336 = vadd.f32 0.0, %v2335
    %v2337 = vpop.f32.mrb[0].mxu0
    %v2338 = vadd.f32 0.0, %v2337
    %v2339 = vpop.f32.mrb[0].mxu0
    %v2340 = vpop.f32.mrb[0].mxu0
    %2341 = vdwg.mxu0
    %2342 = vmatprep.subr.bf16.mxu0 %v1693
    %2343 = vmatpush1.bf16.msra.mxu0 %v1692
    %2344 = vmatprep.subr.bf16.mxu0 %v1725
    %2345 = vmatpush1.bf16.msra.mxu0 %v1724
    %2346 = vmatprep.subr.bf16.mxu0 %v1757
    %2347 = vmatpush1.bf16.msra.mxu0 %v1756
    %2348 = vmatprep.subr.bf16.mxu0 %v1789
    %2349 = vmatpush1.bf16.msra.mxu0 %v1788
    %2350 = vmatprep.subr.bf16.mxu0 %v1821
    %2351 = vmatpush1.bf16.msra.mxu0 %v1820
    %2352 = vmatprep.subr.bf16.mxu0 %v1853
    %2353 = vmatpush1.bf16.msra.mxu0 %v1852
    %2354 = vmatprep.subr.bf16.mxu0 %v1885
    %2355 = vmatpush1.bf16.msra.mxu0 %v1884
    %2356 = vmatprep.subr.bf16.mxu0 %v1917
    %2357 = vmatpush1.bf16.msra.mxu0 %v1916
    %2358 = vmatprep.subr.bf16.mxu0 0
    %2359 = vmatpush1.bf16.msra.mxu0 0
    %2360 = vmatprep.subr.bf16.mxu0 0
    %2361 = vmatpush1.bf16.msra.mxu0 0
    %2362 = vmatprep.subr.bf16.mxu0 0
    %2363 = vmatpush1.bf16.msra.mxu0 0
    %2364 = vmatprep.subr.bf16.mxu0 0
    %2365 = vmatpush1.bf16.msra.mxu0 0
    %2366 = vmatprep.subr.bf16.mxu0 0
    %2367 = vmatpush1.bf16.msra.mxu0 0
    %2368 = vmatprep.subr.bf16.mxu0 0
    %2369 = vmatpush1.bf16.msra.mxu0 0
    %2370 = vmatprep.subr.bf16.mxu0 0
    %2371 = vmatpush1.bf16.msra.mxu0 0
    %2372 = vmatprep.subr.bf16.mxu0 0
    %2373 = vmatpush1.bf16.msra.mxu0 0
    %2374 = vmatprep.mubr.bf16.mxu0 0
    %2375 = vmatmul.mubr.bf16.gmra.mrb[0].mxu0 %v1931
    %v2376 = vpop.f32.mrb[0].mxu0
    %v2377 = vadd.f32 0.0, %v2376
    %v2378 = vpop.f32.mrb[0].mxu0
    %v2379 = vadd.f32 0.0, %v2378
    %v2380 = vpop.f32.mrb[0].mxu0
    %v2381 = vpop.f32.mrb[0].mxu0
    %2382 = vdwg.mxu0
    %2383 = vmatprep.subr.bf16.mxu0 %v1695
    %2384 = vmatpush1.bf16.msra.mxu0 %v1694
    %2385 = vmatprep.subr.bf16.mxu0 %v1727
    %2386 = vmatpush1.bf16.msra.mxu0 %v1726
    %2387 = vmatprep.subr.bf16.mxu0 %v1759
    %2388 = vmatpush1.bf16.msra.mxu0 %v1758
    %2389 = vmatprep.subr.bf16.mxu0 %v1791
    %2390 = vmatpush1.bf16.msra.mxu0 %v1790
    %2391 = vmatprep.subr.bf16.mxu0 %v1823
    %2392 = vmatpush1.bf16.msra.mxu0 %v1822
    %2393 = vmatprep.subr.bf16.mxu0 %v1855
    %2394 = vmatpush1.bf16.msra.mxu0 %v1854
    %2395 = vmatprep.subr.bf16.mxu0 %v1887
    %2396 = vmatpush1.bf16.msra.mxu0 %v1886
    %2397 = vmatprep.subr.bf16.mxu0 %v1919
    %2398 = vmatpush1.bf16.msra.mxu0 %v1918
    %2399 = vmatprep.subr.bf16.mxu0 0
    %2400 = vmatpush1.bf16.msra.mxu0 0
    %2401 = vmatprep.subr.bf16.mxu0 0
    %2402 = vmatpush1.bf16.msra.mxu0 0
    %2403 = vmatprep.subr.bf16.mxu0 0
    %2404 = vmatpush1.bf16.msra.mxu0 0
    %2405 = vmatprep.subr.bf16.mxu0 0
    %2406 = vmatpush1.bf16.msra.mxu0 0
    %2407 = vmatprep.subr.bf16.mxu0 0
    %2408 = vmatpush1.bf16.msra.mxu0 0
    %2409 = vmatprep.subr.bf16.mxu0 0
    %2410 = vmatpush1.bf16.msra.mxu0 0
    %2411 = vmatprep.subr.bf16.mxu0 0
    %2412 = vmatpush1.bf16.msra.mxu0 0
    %2413 = vmatprep.subr.bf16.mxu0 0
    %2414 = vmatpush1.bf16.msra.mxu0 0
    %2415 = vmatprep.mubr.bf16.mxu0 0
    %2416 = vmatmul.mubr.bf16.gmra.mrb[0].mxu0 %v1931
    %v2417 = vpop.f32.mrb[0].mxu0
    %v2418 = vadd.f32 0.0, %v2417
    %v2419 = vpop.f32.mrb[0].mxu0
    %v2420 = vadd.f32 0.0, %v2419
    %v2421 = vpop.f32.mrb[0].mxu0
    %v2422 = vpop.f32.mrb[0].mxu0
    %2423 = vdwg.mxu0
    %2424 = vmatprep.subr.bf16.mxu0 %v1697
    %2425 = vmatpush1.bf16.msra.mxu0 %v1696
    %2426 = vmatprep.subr.bf16.mxu0 %v1729
    %2427 = vmatpush1.bf16.msra.mxu0 %v1728
    %2428 = vmatprep.subr.bf16.mxu0 %v1761
    %2429 = vmatpush1.bf16.msra.mxu0 %v1760
    %2430 = vmatprep.subr.bf16.mxu0 %v1793
    %2431 = vmatpush1.bf16.msra.mxu0 %v1792
    %2432 = vmatprep.subr.bf16.mxu0 %v1825
    %2433 = vmatpush1.bf16.msra.mxu0 %v1824
    %2434 = vmatprep.subr.bf16.mxu0 %v1857
    %2435 = vmatpush1.bf16.msra.mxu0 %v1856
    %2436 = vmatprep.subr.bf16.mxu0 %v1889
    %2437 = vmatpush1.bf16.msra.mxu0 %v1888
    %2438 = vmatprep.subr.bf16.mxu0 %v1921
    %2439 = vmatpush1.bf16.msra.mxu0 %v1920
    %2440 = vmatprep.subr.bf16.mxu0 0
    %2441 = vmatpush1.bf16.msra.mxu0 0
    %2442 = vmatprep.subr.bf16.mxu0 0
    %2443 = vmatpush1.bf16.msra.mxu0 0
    %2444 = vmatprep.subr.bf16.mxu0 0
    %2445 = vmatpush1.bf16.msra.mxu0 0
    %2446 = vmatprep.subr.bf16.mxu0 0
    %2447 = vmatpush1.bf16.msra.mxu0 0
    %2448 = vmatprep.subr.bf16.mxu0 0
    %2449 = vmatpush1.bf16.msra.mxu0 0
    %2450 = vmatprep.subr.bf16.mxu0 0
    %2451 = vmatpush1.bf16.msra.mxu0 0
    %2452 = vmatprep.subr.bf16.mxu0 0
    %2453 = vmatpush1.bf16.msra.mxu0 0
    %2454 = vmatprep.subr.bf16.mxu0 0
    %2455 = vmatpush1.bf16.msra.mxu0 0
    %2456 = vmatprep.mubr.bf16.mxu0 0
    %2457 = vmatmul.mubr.bf16.gmra.mrb[0].mxu0 %v1931
    %v2458 = vpop.f32.mrb[0].mxu0
    %v2459 = vadd.f32 0.0, %v2458
    %v2460 = vpop.f32.mrb[0].mxu0
    %v2461 = vadd.f32 0.0, %v2460
    %v2462 = vpop.f32.mrb[0].mxu0
    %v2463 = vpop.f32.mrb[0].mxu0
    %2464 = vdwg.mxu0
    %2465 = vmatprep.subr.bf16.mxu0 %v1699
    %2466 = vmatpush1.bf16.msra.mxu0 %v1698
    %2467 = vmatprep.subr.bf16.mxu0 %v1731
    %2468 = vmatpush1.bf16.msra.mxu0 %v1730
    %2469 = vmatprep.subr.bf16.mxu0 %v1763
    %2470 = vmatpush1.bf16.msra.mxu0 %v1762
    %2471 = vmatprep.subr.bf16.mxu0 %v1795
    %2472 = vmatpush1.bf16.msra.mxu0 %v1794
    %2473 = vmatprep.subr.bf16.mxu0 %v1827
    %2474 = vmatpush1.bf16.msra.mxu0 %v1826
    %2475 = vmatprep.subr.bf16.mxu0 %v1859
    %2476 = vmatpush1.bf16.msra.mxu0 %v1858
    %2477 = vmatprep.subr.bf16.mxu0 %v1891
    %2478 = vmatpush1.bf16.msra.mxu0 %v1890
    %2479 = vmatprep.subr.bf16.mxu0 %v1923
    %2480 = vmatpush1.bf16.msra.mxu0 %v1922
    %2481 = vmatprep.subr.bf16.mxu0 0
    %2482 = vmatpush1.bf16.msra.mxu0 0
    %2483 = vmatprep.subr.bf16.mxu0 0
    %2484 = vmatpush1.bf16.msra.mxu0 0
    %2485 = vmatprep.subr.bf16.mxu0 0
    %2486 = vmatpush1.bf16.msra.mxu0 0
    %2487 = vmatprep.subr.bf16.mxu0 0
    %2488 = vmatpush1.bf16.msra.mxu0 0
    %2489 = vmatprep.subr.bf16.mxu0 0
    %2490 = vmatpush1.bf16.msra.mxu0 0
    %2491 = vmatprep.subr.bf16.mxu0 0
    %2492 = vmatpush1.bf16.msra.mxu0 0
    %2493 = vmatprep.subr.bf16.mxu0 0
    %2494 = vmatpush1.bf16.msra.mxu0 0
    %2495 = vmatprep.subr.bf16.mxu0 0
    %2496 = vmatpush1.bf16.msra.mxu0 0
    %2497 = vmatprep.mubr.bf16.mxu0 0
    %2498 = vmatmul.mubr.bf16.gmra.mrb[0].mxu0 %v1931
    %v2499 = vpop.f32.mrb[0].mxu0
    %v2500 = vadd.f32 0.0, %v2499
    %v2501 = vpop.f32.mrb[0].mxu0
    %v2502 = vadd.f32 0.0, %v2501
    %v2503 = vpop.f32.mrb[0].mxu0
    %v2504 = vpop.f32.mrb[0].mxu0
    %2505 = vdwg.mxu0
    %2506 = vmatprep.subr.bf16.mxu0 %v1701
    %2507 = vmatpush1.bf16.msra.mxu0 %v1700
    %2508 = vmatprep.subr.bf16.mxu0 %v1733
    %2509 = vmatpush1.bf16.msra.mxu0 %v1732
    %2510 = vmatprep.subr.bf16.mxu0 %v1765
    %2511 = vmatpush1.bf16.msra.mxu0 %v1764
    %2512 = vmatprep.subr.bf16.mxu0 %v1797
    %2513 = vmatpush1.bf16.msra.mxu0 %v1796
    %2514 = vmatprep.subr.bf16.mxu0 %v1829
    %2515 = vmatpush1.bf16.msra.mxu0 %v1828
    %2516 = vmatprep.subr.bf16.mxu0 %v1861
    %2517 = vmatpush1.bf16.msra.mxu0 %v1860
    %2518 = vmatprep.subr.bf16.mxu0 %v1893
    %2519 = vmatpush1.bf16.msra.mxu0 %v1892
    %2520 = vmatprep.subr.bf16.mxu0 %v1925
    %2521 = vmatpush1.bf16.msra.mxu0 %v1924
    %2522 = vmatprep.subr.bf16.mxu0 0
    %2523 = vmatpush1.bf16.msra.mxu0 0
    %2524 = vmatprep.subr.bf16.mxu0 0
    %2525 = vmatpush1.bf16.msra.mxu0 0
    %2526 = vmatprep.subr.bf16.mxu0 0
    %2527 = vmatpush1.bf16.msra.mxu0 0
    %2528 = vmatprep.subr.bf16.mxu0 0
    %2529 = vmatpush1.bf16.msra.mxu0 0
    %2530 = vmatprep.subr.bf16.mxu0 0
    %2531 = vmatpush1.bf16.msra.mxu0 0
    %2532 = vmatprep.subr.bf16.mxu0 0
    %2533 = vmatpush1.bf16.msra.mxu0 0
    %2534 = vmatprep.subr.bf16.mxu0 0
    %2535 = vmatpush1.bf16.msra.mxu0 0
    %2536 = vmatprep.subr.bf16.mxu0 0
    %2537 = vmatpush1.bf16.msra.mxu0 0
    %2538 = vmatprep.mubr.bf16.mxu0 0
    %2539 = vmatmul.mubr.bf16.gmra.mrb[0].mxu0 %v1931
    %v2540 = vpop.f32.mrb[0].mxu0
    %v2541 = vadd.f32 0.0, %v2540
    %v2542 = vpop.f32.mrb[0].mxu0
    %v2543 = vadd.f32 0.0, %v2542
    %v2544 = vpop.f32.mrb[0].mxu0
    %v2545 = vpop.f32.mrb[0].mxu0
    %2546 = vdwg.mxu0
    %2547 = vmatprep.subr.bf16.mxu0 %v1703
    %2548 = vmatpush1.bf16.msra.mxu0 %v1702
    %2549 = vmatprep.subr.bf16.mxu0 %v1735
    %2550 = vmatpush1.bf16.msra.mxu0 %v1734
    %2551 = vmatprep.subr.bf16.mxu0 %v1767
    %2552 = vmatpush1.bf16.msra.mxu0 %v1766
    %2553 = vmatprep.subr.bf16.mxu0 %v1799
    %2554 = vmatpush1.bf16.msra.mxu0 %v1798
    %2555 = vmatprep.subr.bf16.mxu0 %v1831
    %2556 = vmatpush1.bf16.msra.mxu0 %v1830
    %2557 = vmatprep.subr.bf16.mxu0 %v1863
    %2558 = vmatpush1.bf16.msra.mxu0 %v1862
    %2559 = vmatprep.subr.bf16.mxu0 %v1895
    %2560 = vmatpush1.bf16.msra.mxu0 %v1894
    %2561 = vmatprep.subr.bf16.mxu0 %v1927
    %2562 = vmatpush1.bf16.msra.mxu0 %v1926
    %2563 = vmatprep.subr.bf16.mxu0 0
    %2564 = vmatpush1.bf16.msra.mxu0 0
    %2565 = vmatprep.subr.bf16.mxu0 0
    %2566 = vmatpush1.bf16.msra.mxu0 0
    %2567 = vmatprep.subr.bf16.mxu0 0
    %2568 = vmatpush1.bf16.msra.mxu0 0
    %2569 = vmatprep.subr.bf16.mxu0 0
    %2570 = vmatpush1.bf16.msra.mxu0 0
    %2571 = vmatprep.subr.bf16.mxu0 0
    %2572 = vmatpush1.bf16.msra.mxu0 0
    %2573 = vmatprep.subr.bf16.mxu0 0
    %2574 = vmatpush1.bf16.msra.mxu0 0
    %2575 = vmatprep.subr.bf16.mxu0 0
    %2576 = vmatpush1.bf16.msra.mxu0 0
    %2577 = vmatprep.subr.bf16.mxu0 0
    %2578 = vmatpush1.bf16.msra.mxu0 0
    %2579 = vmatprep.mubr.bf16.mxu0 0
    %2580 = vmatmul.mubr.bf16.gmra.mrb[0].mxu0 %v1931
    %v2581 = vpop.f32.mrb[0].mxu0
    %v2582 = vadd.f32 0.0, %v2581
    %v2583 = vpop.f32.mrb[0].mxu0
    %v2584 = vadd.f32 0.0, %v2583
    %v2585 = vpop.f32.mrb[0].mxu0
    %v2586 = vpop.f32.mrb[0].mxu0
    %2587 = vdwg.mxu0
    %2588 = vmatprep.subr.bf16.mxu0 %v1673
    %2589 = vmatpush1.bf16.msra.mxu0 %v1672
    %2590 = vmatprep.subr.bf16.mxu0 %v1705
    %2591 = vmatpush1.bf16.msra.mxu0 %v1704
    %2592 = vmatprep.subr.bf16.mxu0 %v1737
    %2593 = vmatpush1.bf16.msra.mxu0 %v1736
    %2594 = vmatprep.subr.bf16.mxu0 %v1769
    %2595 = vmatpush1.bf16.msra.mxu0 %v1768
    %2596 = vmatprep.subr.bf16.mxu0 %v1801
    %2597 = vmatpush1.bf16.msra.mxu0 %v1800
    %2598 = vmatprep.subr.bf16.mxu0 %v1833
    %2599 = vmatpush1.bf16.msra.mxu0 %v1832
    %2600 = vmatprep.subr.bf16.mxu0 %v1865
    %2601 = vmatpush1.bf16.msra.mxu0 %v1864
    %2602 = vmatprep.subr.bf16.mxu0 %v1897
    %2603 = vmatpush1.bf16.msra.mxu0 %v1896
    %2604 = vmatprep.subr.bf16.mxu0 0
    %2605 = vmatpush1.bf16.msra.mxu0 0
    %2606 = vmatprep.subr.bf16.mxu0 0
    %2607 = vmatpush1.bf16.msra.mxu0 0
    %2608 = vmatprep.subr.bf16.mxu0 0
    %2609 = vmatpush1.bf16.msra.mxu0 0
    %2610 = vmatprep.subr.bf16.mxu0 0
    %2611 = vmatpush1.bf16.msra.mxu0 0
    %2612 = vmatprep.subr.bf16.mxu0 0
    %2613 = vmatpush1.bf16.msra.mxu0 0
    %2614 = vmatprep.subr.bf16.mxu0 0
    %2615 = vmatpush1.bf16.msra.mxu0 0
    %2616 = vmatprep.subr.bf16.mxu0 0
    %2617 = vmatpush1.bf16.msra.mxu0 0
    %2618 = vmatprep.subr.bf16.mxu0 0
    %2619 = vmatpush1.bf16.msra.mxu0 0
    %2620 = vmatprep.mubr.bf16.mxu0 0
    %2621 = vmatmul.mubr.bf16.gmra.mrb[0].mxu0 %v1928
    %v2622 = vpop.f32.mrb[0].mxu0
    %v2623 = vadd.f32 %v1967, %v2622
    %v2624 = vpop.f32.mrb[0].mxu0
    %v2625 = vadd.f32 %v1969, %v2624
    %v2626 = vpop.f32.mrb[0].mxu0
    %v2627 = vpop.f32.mrb[0].mxu0
    %2628 = vdwg.mxu0
    %2629 = vmatprep.subr.bf16.mxu0 %v1675
    %2630 = vmatpush1.bf16.msra.mxu0 %v1674
    %2631 = vmatprep.subr.bf16.mxu0 %v1707
    %2632 = vmatpush1.bf16.msra.mxu0 %v1706
    %2633 = vmatprep.subr.bf16.mxu0 %v1739
    %2634 = vmatpush1.bf16.msra.mxu0 %v1738
    %2635 = vmatprep.subr.bf16.mxu0 %v1771
    %2636 = vmatpush1.bf16.msra.mxu0 %v1770
    %2637 = vmatprep.subr.bf16.mxu0 %v1803
    %2638 = vmatpush1.bf16.msra.mxu0 %v1802
    %2639 = vmatprep.subr.bf16.mxu0 %v1835
    %2640 = vmatpush1.bf16.msra.mxu0 %v1834
    %2641 = vmatprep.subr.bf16.mxu0 %v1867
    %2642 = vmatpush1.bf16.msra.mxu0 %v1866
    %2643 = vmatprep.subr.bf16.mxu0 %v1899
    %2644 = vmatpush1.bf16.msra.mxu0 %v1898
    %2645 = vmatprep.subr.bf16.mxu0 0
    %2646 = vmatpush1.bf16.msra.mxu0 0
    %2647 = vmatprep.subr.bf16.mxu0 0
    %2648 = vmatpush1.bf16.msra.mxu0 0
    %2649 = vmatprep.subr.bf16.mxu0 0
    %2650 = vmatpush1.bf16.msra.mxu0 0
    %2651 = vmatprep.subr.bf16.mxu0 0
    %2652 = vmatpush1.bf16.msra.mxu0 0
    %2653 = vmatprep.subr.bf16.mxu0 0
    %2654 = vmatpush1.bf16.msra.mxu0 0
    %2655 = vmatprep.subr.bf16.mxu0 0
    %2656 = vmatpush1.bf16.msra.mxu0 0
    %2657 = vmatprep.subr.bf16.mxu0 0
    %2658 = vmatpush1.bf16.msra.mxu0 0
    %2659 = vmatprep.subr.bf16.mxu0 0
    %2660 = vmatpush1.bf16.msra.mxu0 0
    %2661 = vmatprep.mubr.bf16.mxu0 0
    %2662 = vmatmul.mubr.bf16.gmra.mrb[0].mxu0 %v1928
    %v2663 = vpop.f32.mrb[0].mxu0
    %v2664 = vadd.f32 %v2008, %v2663
    %v2665 = vpop.f32.mrb[0].mxu0
    %v2666 = vadd.f32 %v2010, %v2665
    %v2667 = vpop.f32.mrb[0].mxu0
    %v2668 = vpop.f32.mrb[0].mxu0
    %2669 = vdwg.mxu0
    %2670 = vmatprep.subr.bf16.mxu0 %v1677
    %2671 = vmatpush1.bf16.msra.mxu0 %v1676
    %2672 = vmatprep.subr.bf16.mxu0 %v1709
    %2673 = vmatpush1.bf16.msra.mxu0 %v1708
    %2674 = vmatprep.subr.bf16.mxu0 %v1741
    %2675 = vmatpush1.bf16.msra.mxu0 %v1740
    %2676 = vmatprep.subr.bf16.mxu0 %v1773
    %2677 = vmatpush1.bf16.msra.mxu0 %v1772
    %2678 = vmatprep.subr.bf16.mxu0 %v1805
    %2679 = vmatpush1.bf16.msra.mxu0 %v1804
    %2680 = vmatprep.subr.bf16.mxu0 %v1837
    %2681 = vmatpush1.bf16.msra.mxu0 %v1836
    %2682 = vmatprep.subr.bf16.mxu0 %v1869
    %2683 = vmatpush1.bf16.msra.mxu0 %v1868
    %2684 = vmatprep.subr.bf16.mxu0 %v1901
    %2685 = vmatpush1.bf16.msra.mxu0 %v1900
    %2686 = vmatprep.subr.bf16.mxu0 0
    %2687 = vmatpush1.bf16.msra.mxu0 0
    %2688 = vmatprep.subr.bf16.mxu0 0
    %2689 = vmatpush1.bf16.msra.mxu0 0
    %2690 = vmatprep.subr.bf16.mxu0 0
    %2691 = vmatpush1.bf16.msra.mxu0 0
    %2692 = vmatprep.subr.bf16.mxu0 0
    %2693 = vmatpush1.bf16.msra.mxu0 0
    %2694 = vmatprep.subr.bf16.mxu0 0
    %2695 = vmatpush1.bf16.msra.mxu0 0
    %2696 = vmatprep.subr.bf16.mxu0 0
    %2697 = vmatpush1.bf16.msra.mxu0 0
    %2698 = vmatprep.subr.bf16.mxu0 0
    %2699 = vmatpush1.bf16.msra.mxu0 0
    %2700 = vmatprep.subr.bf16.mxu0 0
    %2701 = vmatpush1.bf16.msra.mxu0 0
    %2702 = vmatprep.mubr.bf16.mxu0 0
    %2703 = vmatmul.mubr.bf16.gmra.mrb[0].mxu0 %v1928
    %v2704 = vpop.f32.mrb[0].mxu0
    %v2705 = vadd.f32 %v2049, %v2704
    %v2706 = vpop.f32.mrb[0].mxu0
    %v2707 = vadd.f32 %v2051, %v2706
    %v2708 = vpop.f32.mrb[0].mxu0
    %v2709 = vpop.f32.mrb[0].mxu0
    %2710 = vdwg.mxu0
    %2711 = vmatprep.subr.bf16.mxu0 %v1679
    %2712 = vmatpush1.bf16.msra.mxu0 %v1678
    %2713 = vmatprep.subr.bf16.mxu0 %v1711
    %2714 = vmatpush1.bf16.msra.mxu0 %v1710
    %2715 = vmatprep.subr.bf16.mxu0 %v1743
    %2716 = vmatpush1.bf16.msra.mxu0 %v1742
    %2717 = vmatprep.subr.bf16.mxu0 %v1775
    %2718 = vmatpush1.bf16.msra.mxu0 %v1774
    %2719 = vmatprep.subr.bf16.mxu0 %v1807
    %2720 = vmatpush1.bf16.msra.mxu0 %v1806
    %2721 = vmatprep.subr.bf16.mxu0 %v1839
    %2722 = vmatpush1.bf16.msra.mxu0 %v1838
    %2723 = vmatprep.subr.bf16.mxu0 %v1871
    %2724 = vmatpush1.bf16.msra.mxu0 %v1870
    %2725 = vmatprep.subr.bf16.mxu0 %v1903
    %2726 = vmatpush1.bf16.msra.mxu0 %v1902
    %2727 = vmatprep.subr.bf16.mxu0 0
    %2728 = vmatpush1.bf16.msra.mxu0 0
    %2729 = vmatprep.subr.bf16.mxu0 0
    %2730 = vmatpush1.bf16.msra.mxu0 0
    %2731 = vmatprep.subr.bf16.mxu0 0
    %2732 = vmatpush1.bf16.msra.mxu0 0
    %2733 = vmatprep.subr.bf16.mxu0 0
    %2734 = vmatpush1.bf16.msra.mxu0 0
    %2735 = vmatprep.subr.bf16.mxu0 0
    %2736 = vmatpush1.bf16.msra.mxu0 0
    %2737 = vmatprep.subr.bf16.mxu0 0
    %2738 = vmatpush1.bf16.msra.mxu0 0
    %2739 = vmatprep.subr.bf16.mxu0 0
    %2740 = vmatpush1.bf16.msra.mxu0 0
    %2741 = vmatprep.subr.bf16.mxu0 0
    %2742 = vmatpush1.bf16.msra.mxu0 0
    %2743 = vmatprep.mubr.bf16.mxu0 0
    %2744 = vmatmul.mubr.bf16.gmra.mrb[0].mxu0 %v1928
    %v2745 = vpop.f32.mrb[0].mxu0
    %v2746 = vadd.f32 %v2090, %v2745
    %v2747 = vpop.f32.mrb[0].mxu0
    %v2748 = vadd.f32 %v2092, %v2747
    %v2749 = vpop.f32.mrb[0].mxu0
    %v2750 = vpop.f32.mrb[0].mxu0
    %2751 = vdwg.mxu0
    %2752 = vmatprep.subr.bf16.mxu0 %v1681
    %2753 = vmatpush1.bf16.msra.mxu0 %v1680
    %2754 = vmatprep.subr.bf16.mxu0 %v1713
    %2755 = vmatpush1.bf16.msra.mxu0 %v1712
    %2756 = vmatprep.subr.bf16.mxu0 %v1745
    %2757 = vmatpush1.bf16.msra.mxu0 %v1744
    %2758 = vmatprep.subr.bf16.mxu0 %v1777
    %2759 = vmatpush1.bf16.msra.mxu0 %v1776
    %2760 = vmatprep.subr.bf16.mxu0 %v1809
    %2761 = vmatpush1.bf16.msra.mxu0 %v1808
    %2762 = vmatprep.subr.bf16.mxu0 %v1841
    %2763 = vmatpush1.bf16.msra.mxu0 %v1840
    %2764 = vmatprep.subr.bf16.mxu0 %v1873
    %2765 = vmatpush1.bf16.msra.mxu0 %v1872
    %2766 = vmatprep.subr.bf16.mxu0 %v1905
    %2767 = vmatpush1.bf16.msra.mxu0 %v1904
    %2768 = vmatprep.subr.bf16.mxu0 0
    %2769 = vmatpush1.bf16.msra.mxu0 0
    %2770 = vmatprep.subr.bf16.mxu0 0
    %2771 = vmatpush1.bf16.msra.mxu0 0
    %2772 = vmatprep.subr.bf16.mxu0 0
    %2773 = vmatpush1.bf16.msra.mxu0 0
    %2774 = vmatprep.subr.bf16.mxu0 0
    %2775 = vmatpush1.bf16.msra.mxu0 0
    %2776 = vmatprep.subr.bf16.mxu0 0
    %2777 = vmatpush1.bf16.msra.mxu0 0
    %2778 = vmatprep.subr.bf16.mxu0 0
    %2779 = vmatpush1.bf16.msra.mxu0 0
    %2780 = vmatprep.subr.bf16.mxu0 0
    %2781 = vmatpush1.bf16.msra.mxu0 0
    %2782 = vmatprep.subr.bf16.mxu0 0
    %2783 = vmatpush1.bf16.msra.mxu0 0
    %2784 = vmatprep.mubr.bf16.mxu0 0
    %2785 = vmatmul.mubr.bf16.gmra.mrb[0].mxu0 %v1928
    %v2786 = vpop.f32.mrb[0].mxu0
    %v2787 = vadd.f32 %v2131, %v2786
    %v2788 = vpop.f32.mrb[0].mxu0
    %v2789 = vadd.f32 %v2133, %v2788
    %v2790 = vpop.f32.mrb[0].mxu0
    %v2791 = vpop.f32.mrb[0].mxu0
    %2792 = vdwg.mxu0
    %2793 = vmatprep.subr.bf16.mxu0 %v1683
    %2794 = vmatpush1.bf16.msra.mxu0 %v1682
    %2795 = vmatprep.subr.bf16.mxu0 %v1715
    %2796 = vmatpush1.bf16.msra.mxu0 %v1714
    %2797 = vmatprep.subr.bf16.mxu0 %v1747
    %2798 = vmatpush1.bf16.msra.mxu0 %v1746
    %2799 = vmatprep.subr.bf16.mxu0 %v1779
    %2800 = vmatpush1.bf16.msra.mxu0 %v1778
    %2801 = vmatprep.subr.bf16.mxu0 %v1811
    %2802 = vmatpush1.bf16.msra.mxu0 %v1810
    %2803 = vmatprep.subr.bf16.mxu0 %v1843
    %2804 = vmatpush1.bf16.msra.mxu0 %v1842
    %2805 = vmatprep.subr.bf16.mxu0 %v1875
    %2806 = vmatpush1.bf16.msra.mxu0 %v1874
    %2807 = vmatprep.subr.bf16.mxu0 %v1907
    %2808 = vmatpush1.bf16.msra.mxu0 %v1906
    %2809 = vmatprep.subr.bf16.mxu0 0
    %2810 = vmatpush1.bf16.msra.mxu0 0
    %2811 = vmatprep.subr.bf16.mxu0 0
    %2812 = vmatpush1.bf16.msra.mxu0 0
    %2813 = vmatprep.subr.bf16.mxu0 0
    %2814 = vmatpush1.bf16.msra.mxu0 0
    %2815 = vmatprep.subr.bf16.mxu0 0
    %2816 = vmatpush1.bf16.msra.mxu0 0
    %2817 = vmatprep.subr.bf16.mxu0 0
    %2818 = vmatpush1.bf16.msra.mxu0 0
    %2819 = vmatprep.subr.bf16.mxu0 0
    %2820 = vmatpush1.bf16.msra.mxu0 0
    %2821 = vmatprep.subr.bf16.mxu0 0
    %2822 = vmatpush1.bf16.msra.mxu0 0
    %2823 = vmatprep.subr.bf16.mxu0 0
    %2824 = vmatpush1.bf16.msra.mxu0 0
    %2825 = vmatprep.mubr.bf16.mxu0 0
    %2826 = vmatmul.mubr.bf16.gmra.mrb[0].mxu0 %v1928
    %v2827 = vpop.f32.mrb[0].mxu0
    %v2828 = vadd.f32 %v2172, %v2827
    %v2829 = vpop.f32.mrb[0].mxu0
    %v2830 = vadd.f32 %v2174, %v2829
    %v2831 = vpop.f32.mrb[0].mxu0
    %v2832 = vpop.f32.mrb[0].mxu0
    %2833 = vdwg.mxu0
    %2834 = vmatprep.subr.bf16.mxu0 %v1685
    %2835 = vmatpush1.bf16.msra.mxu0 %v1684
    %2836 = vmatprep.subr.bf16.mxu0 %v1717
    %2837 = vmatpush1.bf16.msra.mxu0 %v1716
    %2838 = vmatprep.subr.bf16.mxu0 %v1749
    %2839 = vmatpush1.bf16.msra.mxu0 %v1748
    %2840 = vmatprep.subr.bf16.mxu0 %v1781
    %2841 = vmatpush1.bf16.msra.mxu0 %v1780
    %2842 = vmatprep.subr.bf16.mxu0 %v1813
    %2843 = vmatpush1.bf16.msra.mxu0 %v1812
    %2844 = vmatprep.subr.bf16.mxu0 %v1845
    %2845 = vmatpush1.bf16.msra.mxu0 %v1844
    %2846 = vmatprep.subr.bf16.mxu0 %v1877
    %2847 = vmatpush1.bf16.msra.mxu0 %v1876
    %2848 = vmatprep.subr.bf16.mxu0 %v1909
    %2849 = vmatpush1.bf16.msra.mxu0 %v1908
    %2850 = vmatprep.subr.bf16.mxu0 0
    %2851 = vmatpush1.bf16.msra.mxu0 0
    %2852 = vmatprep.subr.bf16.mxu0 0
    %2853 = vmatpush1.bf16.msra.mxu0 0
    %2854 = vmatprep.subr.bf16.mxu0 0
    %2855 = vmatpush1.bf16.msra.mxu0 0
    %2856 = vmatprep.subr.bf16.mxu0 0
    %2857 = vmatpush1.bf16.msra.mxu0 0
    %2858 = vmatprep.subr.bf16.mxu0 0
    %2859 = vmatpush1.bf16.msra.mxu0 0
    %2860 = vmatprep.subr.bf16.mxu0 0
    %2861 = vmatpush1.bf16.msra.mxu0 0
    %2862 = vmatprep.subr.bf16.mxu0 0
    %2863 = vmatpush1.bf16.msra.mxu0 0
    %2864 = vmatprep.subr.bf16.mxu0 0
    %2865 = vmatpush1.bf16.msra.mxu0 0
    %2866 = vmatprep.mubr.bf16.mxu0 0
    %2867 = vmatmul.mubr.bf16.gmra.mrb[0].mxu0 %v1928
    %v2868 = vpop.f32.mrb[0].mxu0
    %v2869 = vadd.f32 %v2213, %v2868
    %v2870 = vpop.f32.mrb[0].mxu0
    %v2871 = vadd.f32 %v2215, %v2870
    %v2872 = vpop.f32.mrb[0].mxu0
    %v2873 = vpop.f32.mrb[0].mxu0
    %2874 = vdwg.mxu0
    %2875 = vmatprep.subr.bf16.mxu0 %v1687
    %2876 = vmatpush1.bf16.msra.mxu0 %v1686
    %2877 = vmatprep.subr.bf16.mxu0 %v1719
    %2878 = vmatpush1.bf16.msra.mxu0 %v1718
    %2879 = vmatprep.subr.bf16.mxu0 %v1751
    %2880 = vmatpush1.bf16.msra.mxu0 %v1750
    %2881 = vmatprep.subr.bf16.mxu0 %v1783
    %2882 = vmatpush1.bf16.msra.mxu0 %v1782
    %2883 = vmatprep.subr.bf16.mxu0 %v1815
    %2884 = vmatpush1.bf16.msra.mxu0 %v1814
    %2885 = vmatprep.subr.bf16.mxu0 %v1847
    %2886 = vmatpush1.bf16.msra.mxu0 %v1846
    %2887 = vmatprep.subr.bf16.mxu0 %v1879
    %2888 = vmatpush1.bf16.msra.mxu0 %v1878
    %2889 = vmatprep.subr.bf16.mxu0 %v1911
    %2890 = vmatpush1.bf16.msra.mxu0 %v1910
    %2891 = vmatprep.subr.bf16.mxu0 0
    %2892 = vmatpush1.bf16.msra.mxu0 0
    %2893 = vmatprep.subr.bf16.mxu0 0
    %2894 = vmatpush1.bf16.msra.mxu0 0
    %2895 = vmatprep.subr.bf16.mxu0 0
    %2896 = vmatpush1.bf16.msra.mxu0 0
    %2897 = vmatprep.subr.bf16.mxu0 0
    %2898 = vmatpush1.bf16.msra.mxu0 0
    %2899 = vmatprep.subr.bf16.mxu0 0
    %2900 = vmatpush1.bf16.msra.mxu0 0
    %2901 = vmatprep.subr.bf16.mxu0 0
    %2902 = vmatpush1.bf16.msra.mxu0 0
    %2903 = vmatprep.subr.bf16.mxu0 0
    %2904 = vmatpush1.bf16.msra.mxu0 0
    %2905 = vmatprep.subr.bf16.mxu0 0
    %2906 = vmatpush1.bf16.msra.mxu0 0
    %2907 = vmatprep.mubr.bf16.mxu0 0
    %2908 = vmatmul.mubr.bf16.gmra.mrb[0].mxu0 %v1928
    %v2909 = vpop.f32.mrb[0].mxu0
    %v2910 = vadd.f32 %v2254, %v2909
    %v2911 = vpop.f32.mrb[0].mxu0
    %v2912 = vadd.f32 %v2256, %v2911
    %v2913 = vpop.f32.mrb[0].mxu0
    %v2914 = vpop.f32.mrb[0].mxu0
    %2915 = vdwg.mxu0
    %2916 = vmatprep.subr.bf16.mxu0 %v1689
    %2917 = vmatpush1.bf16.msra.mxu0 %v1688
    %2918 = vmatprep.subr.bf16.mxu0 %v1721
    %2919 = vmatpush1.bf16.msra.mxu0 %v1720
    %2920 = vmatprep.subr.bf16.mxu0 %v1753
    %2921 = vmatpush1.bf16.msra.mxu0 %v1752
    %2922 = vmatprep.subr.bf16.mxu0 %v1785
    %2923 = vmatpush1.bf16.msra.mxu0 %v1784
    %2924 = vmatprep.subr.bf16.mxu0 %v1817
    %2925 = vmatpush1.bf16.msra.mxu0 %v1816
    %2926 = vmatprep.subr.bf16.mxu0 %v1849
    %2927 = vmatpush1.bf16.msra.mxu0 %v1848
    %2928 = vmatprep.subr.bf16.mxu0 %v1881
    %2929 = vmatpush1.bf16.msra.mxu0 %v1880
    %2930 = vmatprep.subr.bf16.mxu0 %v1913
    %2931 = vmatpush1.bf16.msra.mxu0 %v1912
    %2932 = vmatprep.subr.bf16.mxu0 0
    %2933 = vmatpush1.bf16.msra.mxu0 0
    %2934 = vmatprep.subr.bf16.mxu0 0
    %2935 = vmatpush1.bf16.msra.mxu0 0
    %2936 = vmatprep.subr.bf16.mxu0 0
    %2937 = vmatpush1.bf16.msra.mxu0 0
    %2938 = vmatprep.subr.bf16.mxu0 0
    %2939 = vmatpush1.bf16.msra.mxu0 0
    %2940 = vmatprep.subr.bf16.mxu0 0
    %2941 = vmatpush1.bf16.msra.mxu0 0
    %2942 = vmatprep.subr.bf16.mxu0 0
    %2943 = vmatpush1.bf16.msra.mxu0 0
    %2944 = vmatprep.subr.bf16.mxu0 0
    %2945 = vmatpush1.bf16.msra.mxu0 0
    %2946 = vmatprep.subr.bf16.mxu0 0
    %2947 = vmatpush1.bf16.msra.mxu0 0
    %2948 = vmatprep.mubr.bf16.mxu0 0
    %2949 = vmatmul.mubr.bf16.gmra.mrb[0].mxu0 %v1928
    %v2950 = vpop.f32.mrb[0].mxu0
    %v2951 = vadd.f32 %v2295, %v2950
    %v2952 = vpop.f32.mrb[0].mxu0
    %v2953 = vadd.f32 %v2297, %v2952
    %v2954 = vpop.f32.mrb[0].mxu0
    %v2955 = vpop.f32.mrb[0].mxu0
    %2956 = vdwg.mxu0
    %2957 = vmatprep.subr.bf16.mxu0 %v1691
    %2958 = vmatpush1.bf16.msra.mxu0 %v1690
    %2959 = vmatprep.subr.bf16.mxu0 %v1723
    %2960 = vmatpush1.bf16.msra.mxu0 %v1722
    %2961 = vmatprep.subr.bf16.mxu0 %v1755
    %2962 = vmatpush1.bf16.msra.mxu0 %v1754
    %2963 = vmatprep.subr.bf16.mxu0 %v1787
    %2964 = vmatpush1.bf16.msra.mxu0 %v1786
    %2965 = vmatprep.subr.bf16.mxu0 %v1819
    %2966 = vmatpush1.bf16.msra.mxu0 %v1818
    %2967 = vmatprep.subr.bf16.mxu0 %v1851
    %2968 = vmatpush1.bf16.msra.mxu0 %v1850
    %2969 = vmatprep.subr.bf16.mxu0 %v1883
    %2970 = vmatpush1.bf16.msra.mxu0 %v1882
    %2971 = vmatprep.subr.bf16.mxu0 %v1915
    %2972 = vmatpush1.bf16.msra.mxu0 %v1914
    %2973 = vmatprep.subr.bf16.mxu0 0
    %2974 = vmatpush1.bf16.msra.mxu0 0
    %2975 = vmatprep.subr.bf16.mxu0 0
    %2976 = vmatpush1.bf16.msra.mxu0 0
    %2977 = vmatprep.subr.bf16.mxu0 0
    %2978 = vmatpush1.bf16.msra.mxu0 0
    %2979 = vmatprep.subr.bf16.mxu0 0
    %2980 = vmatpush1.bf16.msra.mxu0 0
    %2981 = vmatprep.subr.bf16.mxu0 0
    %2982 = vmatpush1.bf16.msra.mxu0 0
    %2983 = vmatprep.subr.bf16.mxu0 0
    %2984 = vmatpush1.bf16.msra.mxu0 0
    %2985 = vmatprep.subr.bf16.mxu0 0
    %2986 = vmatpush1.bf16.msra.mxu0 0
    %2987 = vmatprep.subr.bf16.mxu0 0
    %2988 = vmatpush1.bf16.msra.mxu0 0
    %2989 = vmatprep.mubr.bf16.mxu0 0
    %2990 = vmatmul.mubr.bf16.gmra.mrb[0].mxu0 %v1928
    %v2991 = vpop.f32.mrb[0].mxu0
    %v2992 = vadd.f32 %v2336, %v2991
    %v2993 = vpop.f32.mrb[0].mxu0
    %v2994 = vadd.f32 %v2338, %v2993
    %v2995 = vpop.f32.mrb[0].mxu0
    %v2996 = vpop.f32.mrb[0].mxu0
    %2997 = vdwg.mxu0
    %2998 = vmatprep.subr.bf16.mxu0 %v1693
    %2999 = vmatpush1.bf16.msra.mxu0 %v1692
    %3000 = vmatprep.subr.bf16.mxu0 %v1725
    %3001 = vmatpush1.bf16.msra.mxu0 %v1724
    %3002 = vmatprep.subr.bf16.mxu0 %v1757
    %3003 = vmatpush1.bf16.msra.mxu0 %v1756
    %3004 = vmatprep.subr.bf16.mxu0 %v1789
    %3005 = vmatpush1.bf16.msra.mxu0 %v1788
    %3006 = vmatprep.subr.bf16.mxu0 %v1821
    %3007 = vmatpush1.bf16.msra.mxu0 %v1820
    %3008 = vmatprep.subr.bf16.mxu0 %v1853
    %3009 = vmatpush1.bf16.msra.mxu0 %v1852
    %3010 = vmatprep.subr.bf16.mxu0 %v1885
    %3011 = vmatpush1.bf16.msra.mxu0 %v1884
    %3012 = vmatprep.subr.bf16.mxu0 %v1917
    %3013 = vmatpush1.bf16.msra.mxu0 %v1916
    %3014 = vmatprep.subr.bf16.mxu0 0
    %3015 = vmatpush1.bf16.msra.mxu0 0
    %3016 = vmatprep.subr.bf16.mxu0 0
    %3017 = vmatpush1.bf16.msra.mxu0 0
    %3018 = vmatprep.subr.bf16.mxu0 0
    %3019 = vmatpush1.bf16.msra.mxu0 0
    %3020 = vmatprep.subr.bf16.mxu0 0
    %3021 = vmatpush1.bf16.msra.mxu0 0
    %3022 = vmatprep.subr.bf16.mxu0 0
    %3023 = vmatpush1.bf16.msra.mxu0 0
    %3024 = vmatprep.subr.bf16.mxu0 0
    %3025 = vmatpush1.bf16.msra.mxu0 0
    %3026 = vmatprep.subr.bf16.mxu0 0
    %3027 = vmatpush1.bf16.msra.mxu0 0
    %3028 = vmatprep.subr.bf16.mxu0 0
    %3029 = vmatpush1.bf16.msra.mxu0 0
    %3030 = vmatprep.mubr.bf16.mxu0 0
    %3031 = vmatmul.mubr.bf16.gmra.mrb[0].mxu0 %v1928
    %v3032 = vpop.f32.mrb[0].mxu0
    %v3033 = vadd.f32 %v2377, %v3032
    %v3034 = vpop.f32.mrb[0].mxu0
    %v3035 = vadd.f32 %v2379, %v3034
    %v3036 = vpop.f32.mrb[0].mxu0
    %v3037 = vpop.f32.mrb[0].mxu0
    %3038 = vdwg.mxu0
    %3039 = vmatprep.subr.bf16.mxu0 %v1695
    %3040 = vmatpush1.bf16.msra.mxu0 %v1694
    %3041 = vmatprep.subr.bf16.mxu0 %v1727
    %3042 = vmatpush1.bf16.msra.mxu0 %v1726
    %3043 = vmatprep.subr.bf16.mxu0 %v1759
    %3044 = vmatpush1.bf16.msra.mxu0 %v1758
    %3045 = vmatprep.subr.bf16.mxu0 %v1791
    %3046 = vmatpush1.bf16.msra.mxu0 %v1790
    %3047 = vmatprep.subr.bf16.mxu0 %v1823
    %3048 = vmatpush1.bf16.msra.mxu0 %v1822
    %3049 = vmatprep.subr.bf16.mxu0 %v1855
    %3050 = vmatpush1.bf16.msra.mxu0 %v1854
    %3051 = vmatprep.subr.bf16.mxu0 %v1887
    %3052 = vmatpush1.bf16.msra.mxu0 %v1886
    %3053 = vmatprep.subr.bf16.mxu0 %v1919
    %3054 = vmatpush1.bf16.msra.mxu0 %v1918
    %3055 = vmatprep.subr.bf16.mxu0 0
    %3056 = vmatpush1.bf16.msra.mxu0 0
    %3057 = vmatprep.subr.bf16.mxu0 0
    %3058 = vmatpush1.bf16.msra.mxu0 0
    %3059 = vmatprep.subr.bf16.mxu0 0
    %3060 = vmatpush1.bf16.msra.mxu0 0
    %3061 = vmatprep.subr.bf16.mxu0 0
    %3062 = vmatpush1.bf16.msra.mxu0 0
    %3063 = vmatprep.subr.bf16.mxu0 0
    %3064 = vmatpush1.bf16.msra.mxu0 0
    %3065 = vmatprep.subr.bf16.mxu0 0
    %3066 = vmatpush1.bf16.msra.mxu0 0
    %3067 = vmatprep.subr.bf16.mxu0 0
    %3068 = vmatpush1.bf16.msra.mxu0 0
    %3069 = vmatprep.subr.bf16.mxu0 0
    %3070 = vmatpush1.bf16.msra.mxu0 0
    %3071 = vmatprep.mubr.bf16.mxu0 0
    %3072 = vmatmul.mubr.bf16.gmra.mrb[0].mxu0 %v1928
    %v3073 = vpop.f32.mrb[0].mxu0
    %v3074 = vadd.f32 %v2418, %v3073
    %v3075 = vpop.f32.mrb[0].mxu0
    %v3076 = vadd.f32 %v2420, %v3075
    %v3077 = vpop.f32.mrb[0].mxu0
    %v3078 = vpop.f32.mrb[0].mxu0
    %3079 = vdwg.mxu0
    %3080 = vmatprep.subr.bf16.mxu0 %v1697
    %3081 = vmatpush1.bf16.msra.mxu0 %v1696
    %3082 = vmatprep.subr.bf16.mxu0 %v1729
    %3083 = vmatpush1.bf16.msra.mxu0 %v1728
    %3084 = vmatprep.subr.bf16.mxu0 %v1761
    %3085 = vmatpush1.bf16.msra.mxu0 %v1760
    %3086 = vmatprep.subr.bf16.mxu0 %v1793
    %3087 = vmatpush1.bf16.msra.mxu0 %v1792
    %3088 = vmatprep.subr.bf16.mxu0 %v1825
    %3089 = vmatpush1.bf16.msra.mxu0 %v1824
    %3090 = vmatprep.subr.bf16.mxu0 %v1857
    %3091 = vmatpush1.bf16.msra.mxu0 %v1856
    %3092 = vmatprep.subr.bf16.mxu0 %v1889
    %3093 = vmatpush1.bf16.msra.mxu0 %v1888
    %3094 = vmatprep.subr.bf16.mxu0 %v1921
    %3095 = vmatpush1.bf16.msra.mxu0 %v1920
    %3096 = vmatprep.subr.bf16.mxu0 0
    %3097 = vmatpush1.bf16.msra.mxu0 0
    %3098 = vmatprep.subr.bf16.mxu0 0
    %3099 = vmatpush1.bf16.msra.mxu0 0
    %3100 = vmatprep.subr.bf16.mxu0 0
    %3101 = vmatpush1.bf16.msra.mxu0 0
    %3102 = vmatprep.subr.bf16.mxu0 0
    %3103 = vmatpush1.bf16.msra.mxu0 0
    %3104 = vmatprep.subr.bf16.mxu0 0
    %3105 = vmatpush1.bf16.msra.mxu0 0
    %3106 = vmatprep.subr.bf16.mxu0 0
    %3107 = vmatpush1.bf16.msra.mxu0 0
    %3108 = vmatprep.subr.bf16.mxu0 0
    %3109 = vmatpush1.bf16.msra.mxu0 0
    %3110 = vmatprep.subr.bf16.mxu0 0
    %3111 = vmatpush1.bf16.msra.mxu0 0
    %3112 = vmatprep.mubr.bf16.mxu0 0
    %3113 = vmatmul.mubr.bf16.gmra.mrb[0].mxu0 %v1928
    %v3114 = vpop.f32.mrb[0].mxu0
    %v3115 = vadd.f32 %v2459, %v3114
    %v3116 = vpop.f32.mrb[0].mxu0
    %v3117 = vadd.f32 %v2461, %v3116
    %v3118 = vpop.f32.mrb[0].mxu0
    %v3119 = vpop.f32.mrb[0].mxu0
    %3120 = vdwg.mxu0
    %3121 = vmatprep.subr.bf16.mxu0 %v1699
    %3122 = vmatpush1.bf16.msra.mxu0 %v1698
    %3123 = vmatprep.subr.bf16.mxu0 %v1731
    %3124 = vmatpush1.bf16.msra.mxu0 %v1730
    %3125 = vmatprep.subr.bf16.mxu0 %v1763
    %3126 = vmatpush1.bf16.msra.mxu0 %v1762
    %3127 = vmatprep.subr.bf16.mxu0 %v1795
    %3128 = vmatpush1.bf16.msra.mxu0 %v1794
    %3129 = vmatprep.subr.bf16.mxu0 %v1827
    %3130 = vmatpush1.bf16.msra.mxu0 %v1826
    %3131 = vmatprep.subr.bf16.mxu0 %v1859
    %3132 = vmatpush1.bf16.msra.mxu0 %v1858
    %3133 = vmatprep.subr.bf16.mxu0 %v1891
    %3134 = vmatpush1.bf16.msra.mxu0 %v1890
    %3135 = vmatprep.subr.bf16.mxu0 %v1923
    %3136 = vmatpush1.bf16.msra.mxu0 %v1922
    %3137 = vmatprep.subr.bf16.mxu0 0
    %3138 = vmatpush1.bf16.msra.mxu0 0
    %3139 = vmatprep.subr.bf16.mxu0 0
    %3140 = vmatpush1.bf16.msra.mxu0 0
    %3141 = vmatprep.subr.bf16.mxu0 0
    %3142 = vmatpush1.bf16.msra.mxu0 0
    %3143 = vmatprep.subr.bf16.mxu0 0
    %3144 = vmatpush1.bf16.msra.mxu0 0
    %3145 = vmatprep.subr.bf16.mxu0 0
    %3146 = vmatpush1.bf16.msra.mxu0 0
    %3147 = vmatprep.subr.bf16.mxu0 0
    %3148 = vmatpush1.bf16.msra.mxu0 0
    %3149 = vmatprep.subr.bf16.mxu0 0
    %3150 = vmatpush1.bf16.msra.mxu0 0
    %3151 = vmatprep.subr.bf16.mxu0 0
    %3152 = vmatpush1.bf16.msra.mxu0 0
    %3153 = vmatprep.mubr.bf16.mxu0 0
    %3154 = vmatmul.mubr.bf16.gmra.mrb[0].mxu0 %v1928
    %v3155 = vpop.f32.mrb[0].mxu0
    %v3156 = vadd.f32 %v2500, %v3155
    %v3157 = vpop.f32.mrb[0].mxu0
    %v3158 = vadd.f32 %v2502, %v3157
    %v3159 = vpop.f32.mrb[0].mxu0
    %v3160 = vpop.f32.mrb[0].mxu0
    %3161 = vdwg.mxu0
    %3162 = vmatprep.subr.bf16.mxu0 %v1701
    %3163 = vmatpush1.bf16.msra.mxu0 %v1700
    %3164 = vmatprep.subr.bf16.mxu0 %v1733
    %3165 = vmatpush1.bf16.msra.mxu0 %v1732
    %3166 = vmatprep.subr.bf16.mxu0 %v1765
    %3167 = vmatpush1.bf16.msra.mxu0 %v1764
    %3168 = vmatprep.subr.bf16.mxu0 %v1797
    %3169 = vmatpush1.bf16.msra.mxu0 %v1796
    %3170 = vmatprep.subr.bf16.mxu0 %v1829
    %3171 = vmatpush1.bf16.msra.mxu0 %v1828
    %3172 = vmatprep.subr.bf16.mxu0 %v1861
    %3173 = vmatpush1.bf16.msra.mxu0 %v1860
    %3174 = vmatprep.subr.bf16.mxu0 %v1893
    %3175 = vmatpush1.bf16.msra.mxu0 %v1892
    %3176 = vmatprep.subr.bf16.mxu0 %v1925
    %3177 = vmatpush1.bf16.msra.mxu0 %v1924
    %3178 = vmatprep.subr.bf16.mxu0 0
    %3179 = vmatpush1.bf16.msra.mxu0 0
    %3180 = vmatprep.subr.bf16.mxu0 0
    %3181 = vmatpush1.bf16.msra.mxu0 0
    %3182 = vmatprep.subr.bf16.mxu0 0
    %3183 = vmatpush1.bf16.msra.mxu0 0
    %3184 = vmatprep.subr.bf16.mxu0 0
    %3185 = vmatpush1.bf16.msra.mxu0 0
    %3186 = vmatprep.subr.bf16.mxu0 0
    %3187 = vmatpush1.bf16.msra.mxu0 0
    %3188 = vmatprep.subr.bf16.mxu0 0
    %3189 = vmatpush1.bf16.msra.mxu0 0
    %3190 = vmatprep.subr.bf16.mxu0 0
    %3191 = vmatpush1.bf16.msra.mxu0 0
    %3192 = vmatprep.subr.bf16.mxu0 0
    %3193 = vmatpush1.bf16.msra.mxu0 0
    %3194 = vmatprep.mubr.bf16.mxu0 0
    %3195 = vmatmul.mubr.bf16.gmra.mrb[0].mxu0 %v1928
    %v3196 = vpop.f32.mrb[0].mxu0
    %v3197 = vadd.f32 %v2541, %v3196
    %v3198 = vpop.f32.mrb[0].mxu0
    %v3199 = vadd.f32 %v2543, %v3198
    %v3200 = vpop.f32.mrb[0].mxu0
    %v3201 = vpop.f32.mrb[0].mxu0
    %3202 = vdwg.mxu0
    %3203 = vmatprep.subr.bf16.mxu0 %v1703
    %3204 = vmatpush1.bf16.msra.mxu0 %v1702
    %3205 = vmatprep.subr.bf16.mxu0 %v1735
    %3206 = vmatpush1.bf16.msra.mxu0 %v1734
    %3207 = vmatprep.subr.bf16.mxu0 %v1767
    %3208 = vmatpush1.bf16.msra.mxu0 %v1766
    %3209 = vmatprep.subr.bf16.mxu0 %v1799
    %3210 = vmatpush1.bf16.msra.mxu0 %v1798
    %3211 = vmatprep.subr.bf16.mxu0 %v1831
    %3212 = vmatpush1.bf16.msra.mxu0 %v1830
    %3213 = vmatprep.subr.bf16.mxu0 %v1863
    %3214 = vmatpush1.bf16.msra.mxu0 %v1862
    %3215 = vmatprep.subr.bf16.mxu0 %v1895
    %3216 = vmatpush1.bf16.msra.mxu0 %v1894
    %3217 = vmatprep.subr.bf16.mxu0 %v1927
    %3218 = vmatpush1.bf16.msra.mxu0 %v1926
    %3219 = vmatprep.subr.bf16.mxu0 0
    %3220 = vmatpush1.bf16.msra.mxu0 0
    %3221 = vmatprep.subr.bf16.mxu0 0
    %3222 = vmatpush1.bf16.msra.mxu0 0
    %3223 = vmatprep.subr.bf16.mxu0 0
    %3224 = vmatpush1.bf16.msra.mxu0 0
    %3225 = vmatprep.subr.bf16.mxu0 0
    %3226 = vmatpush1.bf16.msra.mxu0 0
    %3227 = vmatprep.subr.bf16.mxu0 0
    %3228 = vmatpush1.bf16.msra.mxu0 0
    %3229 = vmatprep.subr.bf16.mxu0 0
    %3230 = vmatpush1.bf16.msra.mxu0 0
    %3231 = vmatprep.subr.bf16.mxu0 0
    %3232 = vmatpush1.bf16.msra.mxu0 0
    %3233 = vmatprep.subr.bf16.mxu0 0
    %3234 = vmatpush1.bf16.msra.mxu0 0
    %3235 = vmatprep.mubr.bf16.mxu0 0
    %3236 = vmatmul.mubr.bf16.gmra.mrb[0].mxu0 %v1928
    %v3237 = vpop.f32.mrb[0].mxu0
    %v3238 = vadd.f32 %v2582, %v3237
    %v3239 = vpop.f32.mrb[0].mxu0
    %v3240 = vadd.f32 %v2584, %v3239
    %v3241 = vpop.f32.mrb[0].mxu0
    %v3242 = vpop.f32.mrb[0].mxu0
    %3243 = vdwg.mxu0
    %v3276 = vcombine.low %v2623, %v2625
    %v3277 = vcombine.low %v2664, %v2666
    %v3279 = vunpack.c.l.s4 1983009808
    %v3280 = vunpack.c.0.s8 %v3279
    %v3281 = vlaneseq
    %v3282 = vshrl.u32 %v3281, 7
    %v3283 = vsub.s32 %v3280, %v3282
    %v3284 = vrot.slane %v3276, %v3283
    %v3286 = vunpack.c.l.s4 1983009808
    %v3287 = vunpack.c.0.s8 %v3286
    %v3288 = vlaneseq
    %v3289 = vshrl.u32 %v3288, 7
    %v3290 = vsub.s32 %v3287, %v3289
    %v3291 = vrot.slane %v3277, %v3290
    %v3292 = vcombine.low %v3284, %v3291
    %v3293 = vcombine.low %v2705, %v2707
    %v3294 = vcombine.low %v2746, %v2748
    %v3296 = vunpack.c.l.s4 1983009808
    %v3297 = vunpack.c.0.s8 %v3296
    %v3298 = vlaneseq
    %v3299 = vshrl.u32 %v3298, 7
    %v3300 = vsub.s32 %v3297, %v3299
    %v3301 = vrot.slane %v3293, %v3300
    %v3303 = vunpack.c.l.s4 1983009808
    %v3304 = vunpack.c.0.s8 %v3303
    %v3305 = vlaneseq
    %v3306 = vshrl.u32 %v3305, 7
    %v3307 = vsub.s32 %v3304, %v3306
    %v3308 = vrot.slane %v3294, %v3307
    %v3309 = vcombine.low %v3301, %v3308
    %v3310 = vcombine.low %v2787, %v2789
    %v3311 = vcombine.low %v2828, %v2830
    %v3313 = vunpack.c.l.s4 1983009808
    %v3314 = vunpack.c.0.s8 %v3313
    %v3315 = vlaneseq
    %v3316 = vshrl.u32 %v3315, 7
    %v3317 = vsub.s32 %v3314, %v3316
    %v3318 = vrot.slane %v3310, %v3317
    %v3320 = vunpack.c.l.s4 1983009808
    %v3321 = vunpack.c.0.s8 %v3320
    %v3322 = vlaneseq
    %v3323 = vshrl.u32 %v3322, 7
    %v3324 = vsub.s32 %v3321, %v3323
    %v3325 = vrot.slane %v3311, %v3324
    %v3326 = vcombine.low %v3318, %v3325
    %v3327 = vcombine.low %v2869, %v2871
    %v3328 = vcombine.low %v2910, %v2912
    %v3330 = vunpack.c.l.s4 1983009808
    %v3331 = vunpack.c.0.s8 %v3330
    %v3332 = vlaneseq
    %v3333 = vshrl.u32 %v3332, 7
    %v3334 = vsub.s32 %v3331, %v3333
    %v3335 = vrot.slane %v3327, %v3334
    %v3337 = vunpack.c.l.s4 1983009808
    %v3338 = vunpack.c.0.s8 %v3337
    %v3339 = vlaneseq
    %v3340 = vshrl.u32 %v3339, 7
    %v3341 = vsub.s32 %v3338, %v3340
    %v3342 = vrot.slane %v3328, %v3341
    %v3343 = vcombine.low %v3335, %v3342
    %v3344 = vcombine.low %v2951, %v2953
    %v3345 = vcombine.low %v2992, %v2994
    %v3347 = vunpack.c.l.s4 1983009808
    %v3348 = vunpack.c.0.s8 %v3347
    %v3349 = vlaneseq
    %v3350 = vshrl.u32 %v3349, 7
    %v3351 = vsub.s32 %v3348, %v3350
    %v3352 = vrot.slane %v3344, %v3351
    %v3354 = vunpack.c.l.s4 1983009808
    %v3355 = vunpack.c.0.s8 %v3354
    %v3356 = vlaneseq
    %v3357 = vshrl.u32 %v3356, 7
    %v3358 = vsub.s32 %v3355, %v3357
    %v3359 = vrot.slane %v3345, %v3358
    %v3360 = vcombine.low %v3352, %v3359
    %v3361 = vcombine.low %v3033, %v3035
    %v3362 = vcombine.low %v3074, %v3076
    %v3364 = vunpack.c.l.s4 1983009808
    %v3365 = vunpack.c.0.s8 %v3364
    %v3366 = vlaneseq
    %v3367 = vshrl.u32 %v3366, 7
    %v3368 = vsub.s32 %v3365, %v3367
    %v3369 = vrot.slane %v3361, %v3368
    %v3371 = vunpack.c.l.s4 1983009808
    %v3372 = vunpack.c.0.s8 %v3371
    %v3373 = vlaneseq
    %v3374 = vshrl.u32 %v3373, 7
    %v3375 = vsub.s32 %v3372, %v3374
    %v3376 = vrot.slane %v3362, %v3375
    %v3377 = vcombine.low %v3369, %v3376
    %v3378 = vcombine.low %v3115, %v3117
    %v3379 = vcombine.low %v3156, %v3158
    %v3381 = vunpack.c.l.s4 1983009808
    %v3382 = vunpack.c.0.s8 %v3381
    %v3383 = vlaneseq
    %v3384 = vshrl.u32 %v3383, 7
    %v3385 = vsub.s32 %v3382, %v3384
    %v3386 = vrot.slane %v3378, %v3385
    %v3388 = vunpack.c.l.s4 1983009808
    %v3389 = vunpack.c.0.s8 %v3388
    %v3390 = vlaneseq
    %v3391 = vshrl.u32 %v3390, 7
    %v3392 = vsub.s32 %v3389, %v3391
    %v3393 = vrot.slane %v3379, %v3392
    %v3394 = vcombine.low %v3386, %v3393
    %v3395 = vcombine.low %v3197, %v3199
    %v3396 = vcombine.low %v3238, %v3240
    %v3398 = vunpack.c.l.s4 1983009808
    %v3399 = vunpack.c.0.s8 %v3398
    %v3400 = vlaneseq
    %v3401 = vshrl.u32 %v3400, 7
    %v3402 = vsub.s32 %v3399, %v3401
    %v3403 = vrot.slane %v3395, %v3402
    %v3405 = vunpack.c.l.s4 1983009808
    %v3406 = vunpack.c.0.s8 %v3405
    %v3407 = vlaneseq
    %v3408 = vshrl.u32 %v3407, 7
    %v3409 = vsub.s32 %v3406, %v3408
    %v3410 = vrot.slane %v3396, %v3409
    %v3411 = vcombine.low %v3403, %v3410
    %3420 = vst [vmem:[#allocation7] sm:$0xff] %v3292
    %3421 = vst [vmem:[#allocation7 + $0x8] sm:$0xff] %v3309
    %3422 = vst [vmem:[#allocation7 + $0x10] sm:$0xff] %v3326
    %3423 = vst [vmem:[#allocation7 + $0x18] sm:$0xff] %v3343
    %3424 = vst [vmem:[#allocation7 + $0x20] sm:$0xff] %v3360
    %3425 = vst [vmem:[#allocation7 + $0x28] sm:$0xff] %v3377
    %3426 = vst [vmem:[#allocation7 + $0x30] sm:$0xff] %v3394
    %3427 = vst [vmem:[#allocation7 + $0x38] sm:$0xff] %v3411
    // Predicated region
    $region18: #{tpu_custom_call.1} parent=1 // pred_check
      _
    $region19: #{tpu_custom_call.1} parent=1 // pred_check_branch
      %3429 = sbr.rel (0) target = $region21
    $region20: #{tpu_custom_call.1} parent=1 // pred_region
      %s3431 = ssub.s32 1024, 1024
      %3432 = vsyncadd [#allocation4], %s3431
      %s3434 = sshll.u32 [#allocation7], 4
      %s3435 = int_to_ptr.vmem [resolvable:$true] %s3434
      %3437 = dma.vmem_to_hbm [thread:$0]  %s3435, 1024, %s2, [#allocation4]
    $region21: #{tpu_custom_call.1} parent=1 // pred_fallthru
      _
    // Predicated region
    $region22: #{tpu_custom_call.1} parent=1 // pred_check
      _
    $region23: #{tpu_custom_call.1} parent=1 // pred_check_branch
      %3439 = sbr.rel (0) target = $region25
    $region24: #{tpu_custom_call.1} parent=1 // pred_region
      %s3441 = ssub.s32 32, 32
      %3442 = vsyncadd [#allocation9], %s3441
      %s3444 = sshll.u32 [#allocation8], 4
      %s3445 = int_to_ptr.vmem [resolvable:$true] %s3444
      %3447 = dma.vmem_to_hbm [thread:$0]  %s3445, 32, %s3, [#allocation9]
    $region25: #{tpu_custom_call.1} parent=1 // pred_fallthru
      _
    // Predicated region
    $region26: #{tpu_custom_call.1} parent=1 // pred_check
      _
    $region27: #{tpu_custom_call.1} parent=1 // pred_check_branch
      %3449 = sbr.rel (0) target = $region29
    $region28: #{tpu_custom_call.1} parent=1 // pred_region
      %3450 = dma.done [#allocation4], 1024
    $region29: #{tpu_custom_call.1} parent=1 // pred_fallthru
      _
    // Predicated region
    $region30: #{tpu_custom_call.1} parent=1 // pred_check
      _
    $region31: #{tpu_custom_call.1} parent=1 // pred_check_branch
      %3452 = sbr.rel (0) target = $region33
    $region32: #{tpu_custom_call.1} parent=1 // pred_region
      %3453 = dma.done [#allocation9], 32
    $region33: #{tpu_custom_call.1} parent=1 // pred_fallthru
      _
    %3454 = vsyncpa [#allocation3], 1
    %3455 = vsyncpa [#allocation6], 1
    %3456 = vsyncpa [#allocation4], 1
    %3457 = vsyncpa [#allocation9], 1

</llo_original>
